<compile_context>
chip_gen: v6e
topology: v6e:2x2x1
jax: 0.10.0
libtpu: 0.0.40
codegen_flags: <defaults>
</compile_context>

<pallas_src>
import functools

import jax
import jax.numpy as jnp
from jax.experimental import pallas as pl
from jax.experimental.pallas import tpu as pltpu

P = 128  # lane-padded width used for E, H, latent and vocab


# ---------------------------------------------------------------------------
# Fused kernel
# ---------------------------------------------------------------------------
def enc_network_kernel(
    lens_ref,                                   # scalar prefetch (SMEM), (B,)
    ids_ref, wfront_ref, bfront_ref,            # folded front table
    whf_ref, bhf_ref,                           # encoder GRU fwd, hidden part
    whb_ref, bhb_ref,                           # encoder GRU bwd, hidden part
    wh2lf_ref, wh2lb_ref, bh2l_ref,             # hidden2latent (fwd/bwd halves)
    wl2o_ref, bl2o_ref,                         # latent2output
    wid_ref, whd_ref, bhd_ref,                  # decoder GRU
    wo2v_ref, bo2v_ref,                         # output2vocab
    logits_ref,
    gif_scr, gib_scr, gid_scr,                  # hoisted input projections
    lastf_scr, lastb_scr,                       # selected last encoder states
    deg_scr,                                    # de @ Wid latent offset
    *, T, N,
):
    f32 = jnp.float32
    BS = T * N
    G = 3 * P
    unroll = True if T <= 8 else 4

    # ---- single wide front matmul: embedding lookup folded into the encoder
    #      fwd/bwd and decoder input projections (one MXU launch).
    onehot = (ids_ref[...] ==
              jax.lax.broadcasted_iota(jnp.int32, (BS, P), 1)).astype(f32)
    g_all = (jnp.dot(onehot, wfront_ref[...], preferred_element_type=f32)
             + bfront_ref[...])                                   # (BS, 9P)
    gif_scr[...] = g_all[:, :G].reshape(T, N, G)
    gib_scr[...] = g_all[:, G:2 * G].reshape(T, N, G)
    gid_scr[...] = g_all[:, 2 * G:].reshape(T, N, G)
    # TODO(synk): embedding dropout / GRU dropout are identity (eval mode).

    def gru_cell(gi, h, whh_ref, bhh_ref):
        # gi: (N, 3P), h: (N, P).  Gate slices are 128-lane aligned.
        gh = jnp.dot(h, whh_ref[...], preferred_element_type=f32) + bhh_ref[...]
        r = jax.nn.sigmoid(gi[:, :P] + gh[:, :P])
        z = jax.nn.sigmoid(gi[:, P:2 * P] + gh[:, P:2 * P])
        n = jnp.tanh(gi[:, 2 * P:] + r * gh[:, 2 * P:])
        return (1.0 - z) * n + z * h

    row_iota = jax.lax.broadcasted_iota(jnp.int32, (N, 1), 0)
    h0 = jnp.zeros((N, P), f32)

    # ---- encoder bidirectional recurrence (serial over T; hidden states are
    #      vreg carries; fwd & bwd cells interleave in the unrolled body).
    def enc_body(t, carry):
        h_f, h_b = carry
        tb = T - 1 - t
        h_f = gru_cell(gif_scr[t], h_f, whf_ref, bhf_ref)
        h_b = gru_cell(gib_scr[tb], h_b, whb_ref, bhb_ref)
        # encoder_outputs[b, x_len[b]-1, :] selection, done in-loop (cheap XLU
        # reduce off the serial matmul chain).
        sel_f = (row_iota == (lens_ref[t] - 1)).astype(f32)
        sel_b = (row_iota == (lens_ref[tb] - 1)).astype(f32)
        lastf_scr[pl.ds(t, 1), :] = jnp.sum(h_f * sel_f, axis=0, keepdims=True)
        lastb_scr[pl.ds(tb, 1), :] = jnp.sum(h_b * sel_b, axis=0, keepdims=True)
        return h_f, h_b

    jax.lax.fori_loop(0, T, enc_body, (h0, h0), unroll=unroll)

    # ---- latent path (tiny (T, .) matmuls)
    en_latent = (jnp.dot(lastf_scr[...], wh2lf_ref[...], preferred_element_type=f32)
                 + jnp.dot(lastb_scr[...], wh2lb_ref[...], preferred_element_type=f32)
                 + bh2l_ref[...])                                  # (T, P)
    de = (jnp.dot(jnp.tanh(en_latent), wl2o_ref[...], preferred_element_type=f32)
          + bl2o_ref[...])                                         # (T, P)
    # Decoder input projection split by linearity: emb@Wid (+bid) was folded
    # into the front matmul; only the latent-offset term de@Wid remains.
    deg_scr[...] = jnp.dot(de, wid_ref[...], preferred_element_type=f32)  # (T, 3P)

    # ---- decoder recurrence with output2vocab fused per step (MXU idle on the
    #      serial gh chain, so the vocab projection rides for free).
    def dec_body(t, h_d):
        gi = gid_scr[t] + deg_scr[pl.ds(t, 1), :]
        h_d = gru_cell(gi, h_d, whd_ref, bhd_ref)
        logit_t = (jnp.dot(h_d, wo2v_ref[...], preferred_element_type=f32)
                   + bo2v_ref[...])
        row0 = pl.multiple_of(t * N, N)
        logits_ref[pl.ds(row0, N), :] = logit_t.astype(logits_ref.dtype)
        return h_d

    jax.lax.fori_loop(0, T, dec_body, h0, unroll=unroll)


# ---------------------------------------------------------------------------
# Wrapper
# ---------------------------------------------------------------------------
def enc_network_forward(reviews, review_lens, user_ids, item_ids, pp, *, vocab):
    del user_ids, item_ids  # unused by the PyTorch forward as well
    B, S = reviews.shape
    T, N, BS = B, S, B * S
    ids = reviews.reshape(BS, 1).astype(jnp.int32)
    lens = review_lens.reshape(B).astype(jnp.int32)

    def full(shape):
        return pl.BlockSpec(shape, lambda *_: (0,) * len(shape))

    in_specs = [
        full((BS, 1)),                               # ids
        full((P, 9 * P)), full((1, 9 * P)),          # folded front table + bias
        full((P, 3 * P)), full((1, 3 * P)),          # whf, bhf
        full((P, 3 * P)), full((1, 3 * P)),          # whb, bhb
        full((P, P)), full((P, P)), full((1, P)),    # wh2lf, wh2lb, bh2l
        full((P, P)), full((1, P)),                  # wl2o, bl2o
        full((P, 3 * P)),                            # wid (for de @ Wid)
        full((P, 3 * P)), full((1, 3 * P)),          # whd, bhd
        full((P, P)), full((1, P)),                  # wo2v, bo2v
    ]
    kern = functools.partial(enc_network_kernel, T=T, N=N)
    grid_spec = pltpu.PrefetchScalarGridSpec(
        num_scalar_prefetch=1,
        grid=(1,),
        in_specs=in_specs,
        out_specs=full((BS, P)),
        scratch_shapes=[
            pltpu.VMEM((T, N, 3 * P), jnp.float32),   # gif
            pltpu.VMEM((T, N, 3 * P), jnp.float32),   # gib
            pltpu.VMEM((T, N, 3 * P), jnp.float32),   # gid (embedding part)
            pltpu.VMEM((T, P), jnp.float32),          # last_f
            pltpu.VMEM((T, P), jnp.float32),          # last_b
            pltpu.VMEM((T, 3 * P), jnp.float32),      # de @ Wid
        ],
    )
    logits_p = pl.pallas_call(
        kern,
        out_shape=jax.ShapeDtypeStruct((BS, P), jnp.float32),
        grid_spec=grid_spec,
        compiler_params=pltpu.CompilerParams(
            dimension_semantics=("arbitrary",),
            vmem_limit_bytes=32 * 1024 * 1024,
        ),
    )(lens, ids,
      pp["wfront"], pp["bfront"],
      pp["whf"], pp["bhf"], pp["whb"], pp["bhb"],
      pp["wh2lf"], pp["wh2lb"], pp["bh2l"],
      pp["wl2o"], pp["bl2o"],
      pp["wid"], pp["whd"], pp["bhd"],
      pp["wo2v"], pp["bo2v"])
    return logits_p[:, :vocab]


# ---------------------------------------------------------------------------
# Parameter padding/packing (PyTorch layouts -> lane-aligned, zero-padded)
# ---------------------------------------------------------------------------
def _pad2(a, rows, cols):
    out = jnp.zeros((rows, cols), jnp.float32)
    return out.at[: a.shape[0], : a.shape[1]].set(a)


def _pack_gru_w(w, in_dim, H):
    # w: (3H, in_dim) PyTorch layout -> (P, 3P) transposed, each gate at a
    # 128-lane boundary; padded rows/cols are zero (exact).
    out = jnp.zeros((P, 3 * P), jnp.float32)
    for g in range(3):
        out = out.at[:in_dim, g * P: g * P + H].set(w[g * H:(g + 1) * H, :].T)
    return out


def _pack_gru_b(b, H):
    out = jnp.zeros((1, 3 * P), jnp.float32)
    for g in range(3):
        out = out.at[0, g * P: g * P + H].set(b[g * H:(g + 1) * H])
    return out


def prepare_params(raw, *, H, E, latent, vocab):
    assert max(H, E, latent, vocab) <= P
    emb_p = _pad2(raw["embedding"], P, P)
    wif = _pack_gru_w(raw["enc_w_ih_f"], E, H)
    wib = _pack_gru_w(raw["enc_w_ih_b"], E, H)
    wid = _pack_gru_w(raw["dec_w_ih"], E, H)
    bif = _pack_gru_b(raw["enc_b_ih_f"], H)
    bib = _pack_gru_b(raw["enc_b_ih_b"], H)
    bid = _pack_gru_b(raw["dec_b_ih"], H)

    pp = {}
    # Folded front table: onehot(ids) @ (emb @ [Wif | Wib | Wid]) + [bif|bib|bid]
    pp["wfront"] = jnp.dot(emb_p, jnp.concatenate([wif, wib, wid], axis=1),
                           precision=jax.lax.Precision.HIGHEST)
    pp["bfront"] = jnp.concatenate([bif, bib, bid], axis=1)
    pp["whf"] = _pack_gru_w(raw["enc_w_hh_f"], H, H)
    pp["bhf"] = _pack_gru_b(raw["enc_b_hh_f"], H)
    pp["whb"] = _pack_gru_w(raw["enc_w_hh_b"], H, H)
    pp["bhb"] = _pack_gru_b(raw["enc_b_hh_b"], H)
    pp["wh2lf"] = _pad2(raw["w_h2l"][:, :H].T, P, P)
    pp["wh2lb"] = _pad2(raw["w_h2l"][:, H:].T, P, P)
    pp["bh2l"] = _pad2(raw["b_h2l"][None, :], 1, P)
    pp["wl2o"] = _pad2(raw["w_l2o"].T, P, P)
    pp["bl2o"] = _pad2(raw["b_l2o"][None, :], 1, P)
    pp["wid"] = wid                       # latent-offset term only (no bias)
    pp["whd"] = _pack_gru_w(raw["dec_w_hh"], H, H)
    pp["bhd"] = _pack_gru_b(raw["dec_b_hh"], H)
    pp["wo2v"] = _pad2(raw["w_o2v"].T, P, P)
    pp["bo2v"] = _pad2(raw["b_o2v"][None, :], 1, P)
    return pp


# ---------------------------------------------------------------------------
# Pure-JAX reference (PyTorch semantics, unpadded weights)
# ---------------------------------------------------------------------------
def _gru_scan_ref(x_seq, w_ih, w_hh, b_ih, b_hh, H):
    def step(h, x_t):
        gi = x_t @ w_ih.T + b_ih
        gh = h @ w_hh.T + b_hh
        r = jax.nn.sigmoid(gi[:, :H] + gh[:, :H])
        z = jax.nn.sigmoid(gi[:, H:2 * H] + gh[:, H:2 * H])
        n = jnp.tanh(gi[:, 2 * H:] + r * gh[:, 2 * H:])
        h_new = (1.0 - z) * n + z * h
        return h_new, h_new
    h0 = jnp.zeros((x_seq.shape[1], H), jnp.float32)
    _, ys = jax.lax.scan(step, h0, x_seq)
    return ys


def enc_network_reference(x, x_len, p, *, H):
    B, S = x.shape
    emb = p["embedding"][x]                                           # (B,S,E)
    out_f = _gru_scan_ref(emb, p["enc_w_ih_f"], p["enc_w_hh_f"],
                          p["enc_b_ih_f"], p["enc_b_hh_f"], H)
    out_b = _gru_scan_ref(emb[::-1], p["enc_w_ih_b"], p["enc_w_hh_b"],
                          p["enc_b_ih_b"], p["enc_b_hh_b"], H)[::-1]
    enc_out = jnp.concatenate([out_f, out_b], axis=-1)                # (B,S,2H)
    last = enc_out[jnp.arange(B), x_len - 1, :]                       # (B,2H)
    en_latent = last @ p["w_h2l"].T + p["b_h2l"]
    de = jnp.tanh(en_latent) @ p["w_l2o"].T + p["b_l2o"]
    out_emb = emb + de[:, None, :]
    dec_out = _gru_scan_ref(out_emb, p["dec_w_ih"], p["dec_w_hh"],
                            p["dec_b_ih"], p["dec_b_hh"], H)          # (B,S,H)
    return dec_out.reshape(-1, H) @ p["w_o2v"].T + p["b_o2v"]


if __name__ == "__main__":
    B, S = 2, 8
    latent = 16
    E = H = 32
    vocab = 50

    key = jax.random.PRNGKey(0)
    ks = iter(jax.random.split(key, 24))

    def rnd(shape):
        return jax.random.normal(next(ks), shape, jnp.float32) * 0.1

    raw = dict(
        embedding=rnd((vocab, E)),
        enc_w_ih_f=rnd((3 * H, E)), enc_w_hh_f=rnd((3 * H, H)),
        enc_b_ih_f=rnd((3 * H,)),   enc_b_hh_f=rnd((3 * H,)),
        enc_w_ih_b=rnd((3 * H, E)), enc_w_hh_b=rnd((3 * H, H)),
        enc_b_ih_b=rnd((3 * H,)),   enc_b_hh_b=rnd((3 * H,)),
        w_h2l=rnd((latent, 2 * H)), b_h2l=rnd((latent,)),
        w_l2o=rnd((E, latent)),     b_l2o=rnd((E,)),
        dec_w_ih=rnd((3 * H, E)),   dec_w_hh=rnd((3 * H, H)),
        dec_b_ih=rnd((3 * H,)),     dec_b_hh=rnd((3 * H,)),
        w_o2v=rnd((vocab, H)),      b_o2v=rnd((vocab,)),
    )

    reviews = jax.random.randint(next(ks), (B, S), 0, vocab, dtype=jnp.int32)
    review_lens = jax.random.randint(next(ks), (B,), 1, S + 1, dtype=jnp.int32)
    user_ids = jnp.zeros((B,), jnp.int32)   # unused by the forward
    item_ids = jnp.zeros((B,), jnp.int32)   # unused by the forward

    padded = prepare_params(raw, H=H, E=E, latent=latent, vocab=vocab)

    logits = enc_network_forward(reviews, review_lens, user_ids, item_ids,
                                 padded, vocab=vocab)
    logits = jax.block_until_ready(logits)

    ref = enc_network_reference(reviews, review_lens, raw, H=H)
    assert logits.shape == (B * S, vocab)
    max_err = float(jnp.max(jnp.abs(logits - ref)))
    assert jnp.allclose(logits, ref, atol=1e-4, rtol=1e-4), max_err

    print("KERNEL_OK")
</pallas_src>

<mosaic_0001>
module attributes {stable_mosaic.version = 11 : i64} {
  func.func @enc_network_kernel(%arg0: i32, %arg1: memref<2xi32, #tpu.memory_space<smem>>, %arg2: memref<16x1xi32, #tpu.memory_space<vmem>>, %arg3: memref<128x1152xf32, #tpu.memory_space<vmem>>, %arg4: memref<1x1152xf32, #tpu.memory_space<vmem>>, %arg5: memref<128x384xf32, #tpu.memory_space<vmem>>, %arg6: memref<1x384xf32, #tpu.memory_space<vmem>>, %arg7: memref<128x384xf32, #tpu.memory_space<vmem>>, %arg8: memref<1x384xf32, #tpu.memory_space<vmem>>, %arg9: memref<128x128xf32, #tpu.memory_space<vmem>>, %arg10: memref<128x128xf32, #tpu.memory_space<vmem>>, %arg11: memref<1x128xf32, #tpu.memory_space<vmem>>, %arg12: memref<128x128xf32, #tpu.memory_space<vmem>>, %arg13: memref<1x128xf32, #tpu.memory_space<vmem>>, %arg14: memref<128x384xf32, #tpu.memory_space<vmem>>, %arg15: memref<128x384xf32, #tpu.memory_space<vmem>>, %arg16: memref<1x384xf32, #tpu.memory_space<vmem>>, %arg17: memref<128x128xf32, #tpu.memory_space<vmem>>, %arg18: memref<1x128xf32, #tpu.memory_space<vmem>>, %arg19: memref<16x128xf32, #tpu.memory_space<vmem>>, %arg20: memref<2x8x384xf32, #tpu.memory_space<vmem>>, %arg21: memref<2x8x384xf32, #tpu.memory_space<vmem>>, %arg22: memref<2x8x384xf32, #tpu.memory_space<vmem>>, %arg23: memref<2x128xf32, #tpu.memory_space<vmem>>, %arg24: memref<2x128xf32, #tpu.memory_space<vmem>>, %arg25: memref<2x384xf32, #tpu.memory_space<vmem>>) attributes {dimension_semantics = [#tpu.dimension_semantics<arbitrary>], iteration_bounds = array<i64: 1>, scalar_prefetch = 1 : i64, scratch_operands = 6 : i64, tpu.core_type = #tpu.core_type<tc>, window_params = [{pipeline_mode = #tpu.pipeline_mode<synchronous>, transform_indices = @transform_0, window_bounds = array<i64: 16, 1>}, {pipeline_mode = #tpu.pipeline_mode<synchronous>, transform_indices = @transform_1, window_bounds = array<i64: 128, 1152>}, {pipeline_mode = #tpu.pipeline_mode<synchronous>, transform_indices = @transform_2, window_bounds = array<i64: 1, 1152>}, {pipeline_mode = #tpu.pipeline_mode<synchronous>, transform_indices = @transform_3, window_bounds = array<i64: 128, 384>}, {pipeline_mode = #tpu.pipeline_mode<synchronous>, transform_indices = @transform_4, window_bounds = array<i64: 1, 384>}, {pipeline_mode = #tpu.pipeline_mode<synchronous>, transform_indices = @transform_5, window_bounds = array<i64: 128, 384>}, {pipeline_mode = #tpu.pipeline_mode<synchronous>, transform_indices = @transform_6, window_bounds = array<i64: 1, 384>}, {pipeline_mode = #tpu.pipeline_mode<synchronous>, transform_indices = @transform_7, window_bounds = array<i64: 128, 128>}, {pipeline_mode = #tpu.pipeline_mode<synchronous>, transform_indices = @transform_8, window_bounds = array<i64: 128, 128>}, {pipeline_mode = #tpu.pipeline_mode<synchronous>, transform_indices = @transform_9, window_bounds = array<i64: 1, 128>}, {pipeline_mode = #tpu.pipeline_mode<synchronous>, transform_indices = @transform_10, window_bounds = array<i64: 128, 128>}, {pipeline_mode = #tpu.pipeline_mode<synchronous>, transform_indices = @transform_11, window_bounds = array<i64: 1, 128>}, {pipeline_mode = #tpu.pipeline_mode<synchronous>, transform_indices = @transform_12, window_bounds = array<i64: 128, 384>}, {pipeline_mode = #tpu.pipeline_mode<synchronous>, transform_indices = @transform_13, window_bounds = array<i64: 128, 384>}, {pipeline_mode = #tpu.pipeline_mode<synchronous>, transform_indices = @transform_14, window_bounds = array<i64: 1, 384>}, {pipeline_mode = #tpu.pipeline_mode<synchronous>, transform_indices = @transform_15, window_bounds = array<i64: 128, 128>}, {pipeline_mode = #tpu.pipeline_mode<synchronous>, transform_indices = @transform_16, window_bounds = array<i64: 1, 128>}, {pipeline_mode = #tpu.pipeline_mode<synchronous>, transform_indices = @transform_17, window_bounds = array<i64: 16, 128>}]} {
    %c0 = arith.constant 0 : index
    %c0_0 = arith.constant 0 : index
    %0 = vector.load %arg2[%c0, %c0_0] : memref<16x1xi32, #tpu.memory_space<vmem>>, vector<16x1xi32>
    %1 = tpu.iota {dimensions = array<i32: 1>} : vector<16x128xi32>
    %2 = vector.broadcast %0 : vector<16x1xi32> to vector<16x128xi32>
    %3 = arith.cmpi eq, %2, %1 : vector<16x128xi32>
    %4 = arith.extui %3 : vector<16x128xi1> to vector<16x128xi32>
    %5 = arith.sitofp %4 : vector<16x128xi32> to vector<16x128xf32>
    %c0_1 = arith.constant 0 : index
    %c0_2 = arith.constant 0 : index
    %6 = vector.load %arg3[%c0_1, %c0_2] : memref<128x1152xf32, #tpu.memory_space<vmem>>, vector<128x1152xf32>
    %cst = arith.constant dense<0.000000e+00> : vector<16x1152xf32>
    %7 = tpu.matmul %5, %6, %cst {dimension_numbers = #tpu.dot_dimension_numbers<[1], [0], [0], [1], [0, 0, 1, 1], [], []>} : vector<16x128xf32>, vector<128x1152xf32>, vector<16x1152xf32> -> vector<16x1152xf32>
    %c0_3 = arith.constant 0 : index
    %c0_4 = arith.constant 0 : index
    %8 = vector.load %arg4[%c0_3, %c0_4] : memref<1x1152xf32, #tpu.memory_space<vmem>>, vector<1x1152xf32>
    %9 = vector.broadcast %8 : vector<1x1152xf32> to vector<16x1152xf32>
    %10 = arith.addf %7, %9 : vector<16x1152xf32>
    %11 = vector.extract_strided_slice %10 {offsets = [0, 0], sizes = [16, 384], strides = [1, 1]} : vector<16x1152xf32> to vector<16x384xf32>
    %12 = vector.shape_cast %11 : vector<16x384xf32> to vector<2x8x384xf32>
    %c0_5 = arith.constant 0 : index
    %c0_6 = arith.constant 0 : index
    %c0_7 = arith.constant 0 : index
    %13 = vector.load %arg20[%c0_5, %c0_6, %c0_7] : memref<2x8x384xf32, #tpu.memory_space<vmem>>, vector<2x8x384xf32>
    tpu.vector_store %arg20[%c0_5, %c0_6, %c0_7], %12 {strides = array<i32>} : memref<2x8x384xf32, #tpu.memory_space<vmem>>, vector<2x8x384xf32>,
    %14 = vector.extract_strided_slice %10 {offsets = [0, 384], sizes = [16, 384], strides = [1, 1]} : vector<16x1152xf32> to vector<16x384xf32>
    %15 = vector.shape_cast %14 : vector<16x384xf32> to vector<2x8x384xf32>
    %c0_8 = arith.constant 0 : index
    %c0_9 = arith.constant 0 : index
    %c0_10 = arith.constant 0 : index
    %16 = vector.load %arg21[%c0_8, %c0_9, %c0_10] : memref<2x8x384xf32, #tpu.memory_space<vmem>>, vector<2x8x384xf32>
    tpu.vector_store %arg21[%c0_8, %c0_9, %c0_10], %15 {strides = array<i32>} : memref<2x8x384xf32, #tpu.memory_space<vmem>>, vector<2x8x384xf32>,
    %17 = vector.extract_strided_slice %10 {offsets = [0, 768], sizes = [16, 384], strides = [1, 1]} : vector<16x1152xf32> to vector<16x384xf32>
    %18 = vector.shape_cast %17 : vector<16x384xf32> to vector<2x8x384xf32>
    %c0_11 = arith.constant 0 : index
    %c0_12 = arith.constant 0 : index
    %c0_13 = arith.constant 0 : index
    %19 = vector.load %arg22[%c0_11, %c0_12, %c0_13] : memref<2x8x384xf32, #tpu.memory_space<vmem>>, vector<2x8x384xf32>
    tpu.vector_store %arg22[%c0_11, %c0_12, %c0_13], %18 {strides = array<i32>} : memref<2x8x384xf32, #tpu.memory_space<vmem>>, vector<2x8x384xf32>,
    %20 = tpu.iota {dimensions = array<i32: 0>} : vector<8x1xi32>
    %cst_14 = arith.constant 0.000000e+00 : f32
    %21 = vector.broadcast %cst_14 : f32 to vector<8x128xf32>
    %c0_i32 = arith.constant 0 : i32
    %c1_i32 = arith.constant 1 : i32
    %22 = arith.subi %c1_i32, %c0_i32 : i32
    %23 = arith.index_cast %c0_i32 : i32 to index
    %c0_15 = arith.constant 0 : index
    %c0_16 = arith.constant 0 : index
    %24 = vector.load %arg20[%23, %c0_15, %c0_16] : memref<2x8x384xf32, #tpu.memory_space<vmem>>, vector<1x8x384xf32>
    %25 = vector.shape_cast %24 : vector<1x8x384xf32> to vector<8x384xf32>
    %c0_17 = arith.constant 0 : index
    %c0_18 = arith.constant 0 : index
    %26 = vector.load %arg5[%c0_17, %c0_18] : memref<128x384xf32, #tpu.memory_space<vmem>>, vector<128x384xf32>
    %cst_19 = arith.constant dense<0.000000e+00> : vector<8x384xf32>
    %27 = tpu.matmul %21, %26, %cst_19 {dimension_numbers = #tpu.dot_dimension_numbers<[1], [0], [0], [1], [0, 0, 1, 1], [], []>} : vector<8x128xf32>, vector<128x384xf32>, vector<8x384xf32> -> vector<8x384xf32>
    %c0_20 = arith.constant 0 : index
    %c0_21 = arith.constant 0 : index
    %28 = vector.load %arg6[%c0_20, %c0_21] : memref<1x384xf32, #tpu.memory_space<vmem>>, vector<1x384xf32>
    %29 = vector.broadcast %28 : vector<1x384xf32> to vector<8x384xf32>
    %30 = arith.addf %27, %29 : vector<8x384xf32>
    %31 = vector.extract_strided_slice %25 {offsets = [0, 0], sizes = [8, 128], strides = [1, 1]} : vector<8x384xf32> to vector<8x128xf32>
    %32 = vector.extract_strided_slice %30 {offsets = [0, 0], sizes = [8, 128], strides = [1, 1]} : vector<8x384xf32> to vector<8x128xf32>
    %33 = arith.addf %31, %32 : vector<8x128xf32>
    %34 = arith.negf %33 : vector<8x128xf32>
    %35 = math.exp %34 : vector<8x128xf32>
    %cst_22 = arith.constant 1.000000e+00 : f32
    %36 = vector.broadcast %cst_22 : f32 to vector<8x128xf32>
    %37 = arith.addf %36, %35 : vector<8x128xf32>
    %38 = arith.divf %36, %37 : vector<8x128xf32>
    %39 = vector.extract_strided_slice %25 {offsets = [0, 128], sizes = [8, 128], strides = [1, 1]} : vector<8x384xf32> to vector<8x128xf32>
    %40 = vector.extract_strided_slice %30 {offsets = [0, 128], sizes = [8, 128], strides = [1, 1]} : vector<8x384xf32> to vector<8x128xf32>
    %41 = arith.addf %39, %40 : vector<8x128xf32>
    %42 = arith.negf %41 : vector<8x128xf32>
    %43 = math.exp %42 : vector<8x128xf32>
    %cst_23 = arith.constant 1.000000e+00 : f32
    %44 = vector.broadcast %cst_23 : f32 to vector<8x128xf32>
    %45 = arith.addf %44, %43 : vector<8x128xf32>
    %46 = arith.divf %44, %45 : vector<8x128xf32>
    %47 = vector.extract_strided_slice %25 {offsets = [0, 256], sizes = [8, 128], strides = [1, 1]} : vector<8x384xf32> to vector<8x128xf32>
    %48 = vector.extract_strided_slice %30 {offsets = [0, 256], sizes = [8, 128], strides = [1, 1]} : vector<8x384xf32> to vector<8x128xf32>
    %49 = arith.mulf %38, %48 : vector<8x128xf32>
    %50 = arith.addf %47, %49 : vector<8x128xf32>
    %51 = math.tanh %50 : vector<8x128xf32>
    %cst_24 = arith.constant 1.000000e+00 : f32
    %52 = vector.broadcast %cst_24 : f32 to vector<8x128xf32>
    %53 = arith.subf %52, %46 : vector<8x128xf32>
    %54 = arith.mulf %53, %51 : vector<8x128xf32>
    %55 = arith.mulf %46, %21 : vector<8x128xf32>
    %56 = arith.addf %54, %55 : vector<8x128xf32>
    %57 = arith.index_cast %22 : i32 to index
    %c0_25 = arith.constant 0 : index
    %c0_26 = arith.constant 0 : index
    %58 = vector.load %arg21[%57, %c0_25, %c0_26] : memref<2x8x384xf32, #tpu.memory_space<vmem>>, vector<1x8x384xf32>
    %59 = vector.shape_cast %58 : vector<1x8x384xf32> to vector<8x384xf32>
    %c0_27 = arith.constant 0 : index
    %c0_28 = arith.constant 0 : index
    %60 = vector.load %arg7[%c0_27, %c0_28] : memref<128x384xf32, #tpu.memory_space<vmem>>, vector<128x384xf32>
    %cst_29 = arith.constant dense<0.000000e+00> : vector<8x384xf32>
    %61 = tpu.matmul %21, %60, %cst_29 {dimension_numbers = #tpu.dot_dimension_numbers<[1], [0], [0], [1], [0, 0, 1, 1], [], []>} : vector<8x128xf32>, vector<128x384xf32>, vector<8x384xf32> -> vector<8x384xf32>
    %c0_30 = arith.constant 0 : index
    %c0_31 = arith.constant 0 : index
    %62 = vector.load %arg8[%c0_30, %c0_31] : memref<1x384xf32, #tpu.memory_space<vmem>>, vector<1x384xf32>
    %63 = vector.broadcast %62 : vector<1x384xf32> to vector<8x384xf32>
    %64 = arith.addf %61, %63 : vector<8x384xf32>
    %65 = vector.extract_strided_slice %59 {offsets = [0, 0], sizes = [8, 128], strides = [1, 1]} : vector<8x384xf32> to vector<8x128xf32>
    %66 = vector.extract_strided_slice %64 {offsets = [0, 0], sizes = [8, 128], strides = [1, 1]} : vector<8x384xf32> to vector<8x128xf32>
    %67 = arith.addf %65, %66 : vector<8x128xf32>
    %68 = arith.negf %67 : vector<8x128xf32>
    %69 = math.exp %68 : vector<8x128xf32>
    %cst_32 = arith.constant 1.000000e+00 : f32
    %70 = vector.broadcast %cst_32 : f32 to vector<8x128xf32>
    %71 = arith.addf %70, %69 : vector<8x128xf32>
    %72 = arith.divf %70, %71 : vector<8x128xf32>
    %73 = vector.extract_strided_slice %59 {offsets = [0, 128], sizes = [8, 128], strides = [1, 1]} : vector<8x384xf32> to vector<8x128xf32>
    %74 = vector.extract_strided_slice %64 {offsets = [0, 128], sizes = [8, 128], strides = [1, 1]} : vector<8x384xf32> to vector<8x128xf32>
    %75 = arith.addf %73, %74 : vector<8x128xf32>
    %76 = arith.negf %75 : vector<8x128xf32>
    %77 = math.exp %76 : vector<8x128xf32>
    %cst_33 = arith.constant 1.000000e+00 : f32
    %78 = vector.broadcast %cst_33 : f32 to vector<8x128xf32>
    %79 = arith.addf %78, %77 : vector<8x128xf32>
    %80 = arith.divf %78, %79 : vector<8x128xf32>
    %81 = vector.extract_strided_slice %59 {offsets = [0, 256], sizes = [8, 128], strides = [1, 1]} : vector<8x384xf32> to vector<8x128xf32>
    %82 = vector.extract_strided_slice %64 {offsets = [0, 256], sizes = [8, 128], strides = [1, 1]} : vector<8x384xf32> to vector<8x128xf32>
    %83 = arith.mulf %72, %82 : vector<8x128xf32>
    %84 = arith.addf %81, %83 : vector<8x128xf32>
    %85 = math.tanh %84 : vector<8x128xf32>
    %cst_34 = arith.constant 1.000000e+00 : f32
    %86 = vector.broadcast %cst_34 : f32 to vector<8x128xf32>
    %87 = arith.subf %86, %80 : vector<8x128xf32>
    %88 = arith.mulf %87, %85 : vector<8x128xf32>
    %89 = arith.mulf %80, %21 : vector<8x128xf32>
    %90 = arith.addf %88, %89 : vector<8x128xf32>
    %91 = arith.index_cast %c0_i32 : i32 to index
    %92 = memref.load %arg1[%91] : memref<2xi32, #tpu.memory_space<smem>>
    %c1_i32_35 = arith.constant 1 : i32
    %93 = arith.subi %92, %c1_i32_35 : i32
    %94 = vector.broadcast %93 : i32 to vector<8x1xi32>
    %95 = arith.cmpi eq, %20, %94 : vector<8x1xi32>
    %96 = arith.extui %95 : vector<8x1xi1> to vector<8x1xi32>
    %97 = arith.sitofp %96 : vector<8x1xi32> to vector<8x1xf32>
    %98 = arith.index_cast %22 : i32 to index
    %99 = memref.load %arg1[%98] : memref<2xi32, #tpu.memory_space<smem>>
    %c1_i32_36 = arith.constant 1 : i32
    %100 = arith.subi %99, %c1_i32_36 : i32
    %101 = vector.broadcast %100 : i32 to vector<8x1xi32>
    %102 = arith.cmpi eq, %20, %101 : vector<8x1xi32>
    %103 = arith.extui %102 : vector<8x1xi1> to vector<8x1xi32>
    %104 = arith.sitofp %103 : vector<8x1xi32> to vector<8x1xf32>
    %105 = vector.broadcast %97 : vector<8x1xf32> to vector<8x128xf32>
    %106 = arith.mulf %56, %105 : vector<8x128xf32>
    %cst_37 = arith.constant dense<0.000000e+00> : vector<128xf32>
    %107 = vector.multi_reduction <add>, %106, %cst_37 [0] : vector<8x128xf32> to vector<128xf32>
    %108 = vector.shape_cast %107 : vector<128xf32> to vector<1x128xf32>
    %109 = arith.index_cast %c0_i32 : i32 to index
    %c0_38 = arith.constant 0 : index
    %110 = vector.load %arg23[%109, %c0_38] : memref<2x128xf32, #tpu.memory_space<vmem>>, vector<1x128xf32>
    tpu.vector_store %arg23[%109, %c0_38], %108 {strides = array<i32>} : memref<2x128xf32, #tpu.memory_space<vmem>>, vector<1x128xf32>,
    %111 = vector.broadcast %104 : vector<8x1xf32> to vector<8x128xf32>
    %112 = arith.mulf %90, %111 : vector<8x128xf32>
    %cst_39 = arith.constant dense<0.000000e+00> : vector<128xf32>
    %113 = vector.multi_reduction <add>, %112, %cst_39 [0] : vector<8x128xf32> to vector<128xf32>
    %114 = vector.shape_cast %113 : vector<128xf32> to vector<1x128xf32>
    %115 = arith.index_cast %22 : i32 to index
    %c0_40 = arith.constant 0 : index
    %116 = vector.load %arg24[%115, %c0_40] : memref<2x128xf32, #tpu.memory_space<vmem>>, vector<1x128xf32>
    tpu.vector_store %arg24[%115, %c0_40], %114 {strides = array<i32>} : memref<2x128xf32, #tpu.memory_space<vmem>>, vector<1x128xf32>,
    %c1_i32_41 = arith.constant 1 : i32
    %c1_i32_42 = arith.constant 1 : i32
    %117 = arith.subi %c1_i32_42, %c1_i32_41 : i32
    %118 = arith.index_cast %c1_i32_41 : i32 to index
    %c0_43 = arith.constant 0 : index
    %c0_44 = arith.constant 0 : index
    %119 = vector.load %arg20[%118, %c0_43, %c0_44] : memref<2x8x384xf32, #tpu.memory_space<vmem>>, vector<1x8x384xf32>
    %120 = vector.shape_cast %119 : vector<1x8x384xf32> to vector<8x384xf32>
    %c0_45 = arith.constant 0 : index
    %c0_46 = arith.constant 0 : index
    %121 = vector.load %arg5[%c0_45, %c0_46] : memref<128x384xf32, #tpu.memory_space<vmem>>, vector<128x384xf32>
    %cst_47 = arith.constant dense<0.000000e+00> : vector<8x384xf32>
    %122 = tpu.matmul %56, %121, %cst_47 {dimension_numbers = #tpu.dot_dimension_numbers<[1], [0], [0], [1], [0, 0, 1, 1], [], []>} : vector<8x128xf32>, vector<128x384xf32>, vector<8x384xf32> -> vector<8x384xf32>
    %c0_48 = arith.constant 0 : index
    %c0_49 = arith.constant 0 : index
    %123 = vector.load %arg6[%c0_48, %c0_49] : memref<1x384xf32, #tpu.memory_space<vmem>>, vector<1x384xf32>
    %124 = vector.broadcast %123 : vector<1x384xf32> to vector<8x384xf32>
    %125 = arith.addf %122, %124 : vector<8x384xf32>
    %126 = vector.extract_strided_slice %120 {offsets = [0, 0], sizes = [8, 128], strides = [1, 1]} : vector<8x384xf32> to vector<8x128xf32>
    %127 = vector.extract_strided_slice %125 {offsets = [0, 0], sizes = [8, 128], strides = [1, 1]} : vector<8x384xf32> to vector<8x128xf32>
    %128 = arith.addf %126, %127 : vector<8x128xf32>
    %129 = arith.negf %128 : vector<8x128xf32>
    %130 = math.exp %129 : vector<8x128xf32>
    %cst_50 = arith.constant 1.000000e+00 : f32
    %131 = vector.broadcast %cst_50 : f32 to vector<8x128xf32>
    %132 = arith.addf %131, %130 : vector<8x128xf32>
    %133 = arith.divf %131, %132 : vector<8x128xf32>
    %134 = vector.extract_strided_slice %120 {offsets = [0, 128], sizes = [8, 128], strides = [1, 1]} : vector<8x384xf32> to vector<8x128xf32>
    %135 = vector.extract_strided_slice %125 {offsets = [0, 128], sizes = [8, 128], strides = [1, 1]} : vector<8x384xf32> to vector<8x128xf32>
    %136 = arith.addf %134, %135 : vector<8x128xf32>
    %137 = arith.negf %136 : vector<8x128xf32>
    %138 = math.exp %137 : vector<8x128xf32>
    %cst_51 = arith.constant 1.000000e+00 : f32
    %139 = vector.broadcast %cst_51 : f32 to vector<8x128xf32>
    %140 = arith.addf %139, %138 : vector<8x128xf32>
    %141 = arith.divf %139, %140 : vector<8x128xf32>
    %142 = vector.extract_strided_slice %120 {offsets = [0, 256], sizes = [8, 128], strides = [1, 1]} : vector<8x384xf32> to vector<8x128xf32>
    %143 = vector.extract_strided_slice %125 {offsets = [0, 256], sizes = [8, 128], strides = [1, 1]} : vector<8x384xf32> to vector<8x128xf32>
    %144 = arith.mulf %133, %143 : vector<8x128xf32>
    %145 = arith.addf %142, %144 : vector<8x128xf32>
    %146 = math.tanh %145 : vector<8x128xf32>
    %cst_52 = arith.constant 1.000000e+00 : f32
    %147 = vector.broadcast %cst_52 : f32 to vector<8x128xf32>
    %148 = arith.subf %147, %141 : vector<8x128xf32>
    %149 = arith.mulf %148, %146 : vector<8x128xf32>
    %150 = arith.mulf %141, %56 : vector<8x128xf32>
    %151 = arith.addf %149, %150 : vector<8x128xf32>
    %152 = arith.index_cast %117 : i32 to index
    %c0_53 = arith.constant 0 : index
    %c0_54 = arith.constant 0 : index
    %153 = vector.load %arg21[%152, %c0_53, %c0_54] : memref<2x8x384xf32, #tpu.memory_space<vmem>>, vector<1x8x384xf32>
    %154 = vector.shape_cast %153 : vector<1x8x384xf32> to vector<8x384xf32>
    %c0_55 = arith.constant 0 : index
    %c0_56 = arith.constant 0 : index
    %155 = vector.load %arg7[%c0_55, %c0_56] : memref<128x384xf32, #tpu.memory_space<vmem>>, vector<128x384xf32>
    %cst_57 = arith.constant dense<0.000000e+00> : vector<8x384xf32>
    %156 = tpu.matmul %90, %155, %cst_57 {dimension_numbers = #tpu.dot_dimension_numbers<[1], [0], [0], [1], [0, 0, 1, 1], [], []>} : vector<8x128xf32>, vector<128x384xf32>, vector<8x384xf32> -> vector<8x384xf32>
    %c0_58 = arith.constant 0 : index
    %c0_59 = arith.constant 0 : index
    %157 = vector.load %arg8[%c0_58, %c0_59] : memref<1x384xf32, #tpu.memory_space<vmem>>, vector<1x384xf32>
    %158 = vector.broadcast %157 : vector<1x384xf32> to vector<8x384xf32>
    %159 = arith.addf %156, %158 : vector<8x384xf32>
    %160 = vector.extract_strided_slice %154 {offsets = [0, 0], sizes = [8, 128], strides = [1, 1]} : vector<8x384xf32> to vector<8x128xf32>
    %161 = vector.extract_strided_slice %159 {offsets = [0, 0], sizes = [8, 128], strides = [1, 1]} : vector<8x384xf32> to vector<8x128xf32>
    %162 = arith.addf %160, %161 : vector<8x128xf32>
    %163 = arith.negf %162 : vector<8x128xf32>
    %164 = math.exp %163 : vector<8x128xf32>
    %cst_60 = arith.constant 1.000000e+00 : f32
    %165 = vector.broadcast %cst_60 : f32 to vector<8x128xf32>
    %166 = arith.addf %165, %164 : vector<8x128xf32>
    %167 = arith.divf %165, %166 : vector<8x128xf32>
    %168 = vector.extract_strided_slice %154 {offsets = [0, 128], sizes = [8, 128], strides = [1, 1]} : vector<8x384xf32> to vector<8x128xf32>
    %169 = vector.extract_strided_slice %159 {offsets = [0, 128], sizes = [8, 128], strides = [1, 1]} : vector<8x384xf32> to vector<8x128xf32>
    %170 = arith.addf %168, %169 : vector<8x128xf32>
    %171 = arith.negf %170 : vector<8x128xf32>
    %172 = math.exp %171 : vector<8x128xf32>
    %cst_61 = arith.constant 1.000000e+00 : f32
    %173 = vector.broadcast %cst_61 : f32 to vector<8x128xf32>
    %174 = arith.addf %173, %172 : vector<8x128xf32>
    %175 = arith.divf %173, %174 : vector<8x128xf32>
    %176 = vector.extract_strided_slice %154 {offsets = [0, 256], sizes = [8, 128], strides = [1, 1]} : vector<8x384xf32> to vector<8x128xf32>
    %177 = vector.extract_strided_slice %159 {offsets = [0, 256], sizes = [8, 128], strides = [1, 1]} : vector<8x384xf32> to vector<8x128xf32>
    %178 = arith.mulf %167, %177 : vector<8x128xf32>
    %179 = arith.addf %176, %178 : vector<8x128xf32>
    %180 = math.tanh %179 : vector<8x128xf32>
    %cst_62 = arith.constant 1.000000e+00 : f32
    %181 = vector.broadcast %cst_62 : f32 to vector<8x128xf32>
    %182 = arith.subf %181, %175 : vector<8x128xf32>
    %183 = arith.mulf %182, %180 : vector<8x128xf32>
    %184 = arith.mulf %175, %90 : vector<8x128xf32>
    %185 = arith.addf %183, %184 : vector<8x128xf32>
    %186 = arith.index_cast %c1_i32_41 : i32 to index
    %187 = memref.load %arg1[%186] : memref<2xi32, #tpu.memory_space<smem>>
    %c1_i32_63 = arith.constant 1 : i32
    %188 = arith.subi %187, %c1_i32_63 : i32
    %189 = vector.broadcast %188 : i32 to vector<8x1xi32>
    %190 = arith.cmpi eq, %20, %189 : vector<8x1xi32>
    %191 = arith.extui %190 : vector<8x1xi1> to vector<8x1xi32>
    %192 = arith.sitofp %191 : vector<8x1xi32> to vector<8x1xf32>
    %193 = arith.index_cast %117 : i32 to index
    %194 = memref.load %arg1[%193] : memref<2xi32, #tpu.memory_space<smem>>
    %c1_i32_64 = arith.constant 1 : i32
    %195 = arith.subi %194, %c1_i32_64 : i32
    %196 = vector.broadcast %195 : i32 to vector<8x1xi32>
    %197 = arith.cmpi eq, %20, %196 : vector<8x1xi32>
    %198 = arith.extui %197 : vector<8x1xi1> to vector<8x1xi32>
    %199 = arith.sitofp %198 : vector<8x1xi32> to vector<8x1xf32>
    %200 = vector.broadcast %192 : vector<8x1xf32> to vector<8x128xf32>
    %201 = arith.mulf %151, %200 : vector<8x128xf32>
    %cst_65 = arith.constant dense<0.000000e+00> : vector<128xf32>
    %202 = vector.multi_reduction <add>, %201, %cst_65 [0] : vector<8x128xf32> to vector<128xf32>
    %203 = vector.shape_cast %202 : vector<128xf32> to vector<1x128xf32>
    %204 = arith.index_cast %c1_i32_41 : i32 to index
    %c0_66 = arith.constant 0 : index
    %205 = vector.load %arg23[%204, %c0_66] : memref<2x128xf32, #tpu.memory_space<vmem>>, vector<1x128xf32>
    tpu.vector_store %arg23[%204, %c0_66], %203 {strides = array<i32>} : memref<2x128xf32, #tpu.memory_space<vmem>>, vector<1x128xf32>,
    %206 = vector.broadcast %199 : vector<8x1xf32> to vector<8x128xf32>
    %207 = arith.mulf %185, %206 : vector<8x128xf32>
    %cst_67 = arith.constant dense<0.000000e+00> : vector<128xf32>
    %208 = vector.multi_reduction <add>, %207, %cst_67 [0] : vector<8x128xf32> to vector<128xf32>
    %209 = vector.shape_cast %208 : vector<128xf32> to vector<1x128xf32>
    %210 = arith.index_cast %117 : i32 to index
    %c0_68 = arith.constant 0 : index
    %211 = vector.load %arg24[%210, %c0_68] : memref<2x128xf32, #tpu.memory_space<vmem>>, vector<1x128xf32>
    tpu.vector_store %arg24[%210, %c0_68], %209 {strides = array<i32>} : memref<2x128xf32, #tpu.memory_space<vmem>>, vector<1x128xf32>,
    %c2_i32 = arith.constant 2 : i32
    %c0_69 = arith.constant 0 : index
    %c0_70 = arith.constant 0 : index
    %212 = vector.load %arg23[%c0_69, %c0_70] : memref<2x128xf32, #tpu.memory_space<vmem>>, vector<2x128xf32>
    %c0_71 = arith.constant 0 : index
    %c0_72 = arith.constant 0 : index
    %213 = vector.load %arg9[%c0_71, %c0_72] : memref<128x128xf32, #tpu.memory_space<vmem>>, vector<128x128xf32>
    %cst_73 = arith.constant dense<0.000000e+00> : vector<2x128xf32>
    %214 = tpu.matmul %212, %213, %cst_73 {dimension_numbers = #tpu.dot_dimension_numbers<[1], [0], [0], [1], [0, 0, 1, 1], [], []>} : vector<2x128xf32>, vector<128x128xf32>, vector<2x128xf32> -> vector<2x128xf32>
    %c0_74 = arith.constant 0 : index
    %c0_75 = arith.constant 0 : index
    %215 = vector.load %arg24[%c0_74, %c0_75] : memref<2x128xf32, #tpu.memory_space<vmem>>, vector<2x128xf32>
    %c0_76 = arith.constant 0 : index
    %c0_77 = arith.constant 0 : index
    %216 = vector.load %arg10[%c0_76, %c0_77] : memref<128x128xf32, #tpu.memory_space<vmem>>, vector<128x128xf32>
    %cst_78 = arith.constant dense<0.000000e+00> : vector<2x128xf32>
    %217 = tpu.matmul %215, %216, %cst_78 {dimension_numbers = #tpu.dot_dimension_numbers<[1], [0], [0], [1], [0, 0, 1, 1], [], []>} : vector<2x128xf32>, vector<128x128xf32>, vector<2x128xf32> -> vector<2x128xf32>
    %218 = arith.addf %214, %217 : vector<2x128xf32>
    %c0_79 = arith.constant 0 : index
    %c0_80 = arith.constant 0 : index
    %219 = vector.load %arg11[%c0_79, %c0_80] : memref<1x128xf32, #tpu.memory_space<vmem>>, vector<1x128xf32>
    %220 = vector.broadcast %219 : vector<1x128xf32> to vector<2x128xf32>
    %221 = arith.addf %218, %220 : vector<2x128xf32>
    %222 = math.tanh %221 : vector<2x128xf32>
    %c0_81 = arith.constant 0 : index
    %c0_82 = arith.constant 0 : index
    %223 = vector.load %arg12[%c0_81, %c0_82] : memref<128x128xf32, #tpu.memory_space<vmem>>, vector<128x128xf32>
    %cst_83 = arith.constant dense<0.000000e+00> : vector<2x128xf32>
    %224 = tpu.matmul %222, %223, %cst_83 {dimension_numbers = #tpu.dot_dimension_numbers<[1], [0], [0], [1], [0, 0, 1, 1], [], []>} : vector<2x128xf32>, vector<128x128xf32>, vector<2x128xf32> -> vector<2x128xf32>
    %c0_84 = arith.constant 0 : index
    %c0_85 = arith.constant 0 : index
    %225 = vector.load %arg13[%c0_84, %c0_85] : memref<1x128xf32, #tpu.memory_space<vmem>>, vector<1x128xf32>
    %226 = vector.broadcast %225 : vector<1x128xf32> to vector<2x128xf32>
    %227 = arith.addf %224, %226 : vector<2x128xf32>
    %c0_86 = arith.constant 0 : index
    %c0_87 = arith.constant 0 : index
    %228 = vector.load %arg14[%c0_86, %c0_87] : memref<128x384xf32, #tpu.memory_space<vmem>>, vector<128x384xf32>
    %cst_88 = arith.constant dense<0.000000e+00> : vector<2x384xf32>
    %229 = tpu.matmul %227, %228, %cst_88 {dimension_numbers = #tpu.dot_dimension_numbers<[1], [0], [0], [1], [0, 0, 1, 1], [], []>} : vector<2x128xf32>, vector<128x384xf32>, vector<2x384xf32> -> vector<2x384xf32>
    %c0_89 = arith.constant 0 : index
    %c0_90 = arith.constant 0 : index
    %230 = vector.load %arg25[%c0_89, %c0_90] : memref<2x384xf32, #tpu.memory_space<vmem>>, vector<2x384xf32>
    tpu.vector_store %arg25[%c0_89, %c0_90], %229 {strides = array<i32>} : memref<2x384xf32, #tpu.memory_space<vmem>>, vector<2x384xf32>,
    %c0_i32_91 = arith.constant 0 : i32
    %231 = arith.index_cast %c0_i32_91 : i32 to index
    %c0_92 = arith.constant 0 : index
    %c0_93 = arith.constant 0 : index
    %232 = vector.load %arg22[%231, %c0_92, %c0_93] : memref<2x8x384xf32, #tpu.memory_space<vmem>>, vector<1x8x384xf32>
    %233 = vector.shape_cast %232 : vector<1x8x384xf32> to vector<8x384xf32>
    %234 = arith.index_cast %c0_i32_91 : i32 to index
    %c0_94 = arith.constant 0 : index
    %235 = vector.load %arg25[%234, %c0_94] : memref<2x384xf32, #tpu.memory_space<vmem>>, vector<1x384xf32>
    %236 = vector.broadcast %235 : vector<1x384xf32> to vector<8x384xf32>
    %237 = arith.addf %233, %236 : vector<8x384xf32>
    %c0_95 = arith.constant 0 : index
    %c0_96 = arith.constant 0 : index
    %238 = vector.load %arg15[%c0_95, %c0_96] : memref<128x384xf32, #tpu.memory_space<vmem>>, vector<128x384xf32>
    %cst_97 = arith.constant dense<0.000000e+00> : vector<8x384xf32>
    %239 = tpu.matmul %21, %238, %cst_97 {dimension_numbers = #tpu.dot_dimension_numbers<[1], [0], [0], [1], [0, 0, 1, 1], [], []>} : vector<8x128xf32>, vector<128x384xf32>, vector<8x384xf32> -> vector<8x384xf32>
    %c0_98 = arith.constant 0 : index
    %c0_99 = arith.constant 0 : index
    %240 = vector.load %arg16[%c0_98, %c0_99] : memref<1x384xf32, #tpu.memory_space<vmem>>, vector<1x384xf32>
    %241 = vector.broadcast %240 : vector<1x384xf32> to vector<8x384xf32>
    %242 = arith.addf %239, %241 : vector<8x384xf32>
    %243 = vector.extract_strided_slice %237 {offsets = [0, 0], sizes = [8, 128], strides = [1, 1]} : vector<8x384xf32> to vector<8x128xf32>
    %244 = vector.extract_strided_slice %242 {offsets = [0, 0], sizes = [8, 128], strides = [1, 1]} : vector<8x384xf32> to vector<8x128xf32>
    %245 = arith.addf %243, %244 : vector<8x128xf32>
    %246 = arith.negf %245 : vector<8x128xf32>
    %247 = math.exp %246 : vector<8x128xf32>
    %cst_100 = arith.constant 1.000000e+00 : f32
    %248 = vector.broadcast %cst_100 : f32 to vector<8x128xf32>
    %249 = arith.addf %248, %247 : vector<8x128xf32>
    %250 = arith.divf %248, %249 : vector<8x128xf32>
    %251 = vector.extract_strided_slice %237 {offsets = [0, 128], sizes = [8, 128], strides = [1, 1]} : vector<8x384xf32> to vector<8x128xf32>
    %252 = vector.extract_strided_slice %242 {offsets = [0, 128], sizes = [8, 128], strides = [1, 1]} : vector<8x384xf32> to vector<8x128xf32>
    %253 = arith.addf %251, %252 : vector<8x128xf32>
    %254 = arith.negf %253 : vector<8x128xf32>
    %255 = math.exp %254 : vector<8x128xf32>
    %cst_101 = arith.constant 1.000000e+00 : f32
    %256 = vector.broadcast %cst_101 : f32 to vector<8x128xf32>
    %257 = arith.addf %256, %255 : vector<8x128xf32>
    %258 = arith.divf %256, %257 : vector<8x128xf32>
    %259 = vector.extract_strided_slice %237 {offsets = [0, 256], sizes = [8, 128], strides = [1, 1]} : vector<8x384xf32> to vector<8x128xf32>
    %260 = vector.extract_strided_slice %242 {offsets = [0, 256], sizes = [8, 128], strides = [1, 1]} : vector<8x384xf32> to vector<8x128xf32>
    %261 = arith.mulf %250, %260 : vector<8x128xf32>
    %262 = arith.addf %259, %261 : vector<8x128xf32>
    %263 = math.tanh %262 : vector<8x128xf32>
    %cst_102 = arith.constant 1.000000e+00 : f32
    %264 = vector.broadcast %cst_102 : f32 to vector<8x128xf32>
    %265 = arith.subf %264, %258 : vector<8x128xf32>
    %266 = arith.mulf %265, %263 : vector<8x128xf32>
    %267 = arith.mulf %258, %21 : vector<8x128xf32>
    %268 = arith.addf %266, %267 : vector<8x128xf32>
    %c0_103 = arith.constant 0 : index
    %c0_104 = arith.constant 0 : index
    %269 = vector.load %arg17[%c0_103, %c0_104] : memref<128x128xf32, #tpu.memory_space<vmem>>, vector<128x128xf32>
    %cst_105 = arith.constant dense<0.000000e+00> : vector<8x128xf32>
    %270 = tpu.matmul %268, %269, %cst_105 {dimension_numbers = #tpu.dot_dimension_numbers<[1], [0], [0], [1], [0, 0, 1, 1], [], []>} : vector<8x128xf32>, vector<128x128xf32>, vector<8x128xf32> -> vector<8x128xf32>
    %c0_106 = arith.constant 0 : index
    %c0_107 = arith.constant 0 : index
    %271 = vector.load %arg18[%c0_106, %c0_107] : memref<1x128xf32, #tpu.memory_space<vmem>>, vector<1x128xf32>
    %272 = vector.broadcast %271 : vector<1x128xf32> to vector<8x128xf32>
    %273 = arith.addf %270, %272 : vector<8x128xf32>
    %c8_i32 = arith.constant 8 : i32
    %274 = arith.muli %c0_i32_91, %c8_i32 : i32
    %275 = tpu.assume_multiple %274, 8 : i32
    %276 = arith.index_cast %275 : i32 to index
    %c0_108 = arith.constant 0 : index
    %277 = vector.load %arg19[%276, %c0_108] : memref<16x128xf32, #tpu.memory_space<vmem>>, vector<8x128xf32>
    tpu.vector_store %arg19[%276, %c0_108], %273 {strides = array<i32>} : memref<16x128xf32, #tpu.memory_space<vmem>>, vector<8x128xf32>,
    %c1_i32_109 = arith.constant 1 : i32
    %278 = arith.index_cast %c1_i32_109 : i32 to index
    %c0_110 = arith.constant 0 : index
    %c0_111 = arith.constant 0 : index
    %279 = vector.load %arg22[%278, %c0_110, %c0_111] : memref<2x8x384xf32, #tpu.memory_space<vmem>>, vector<1x8x384xf32>
    %280 = vector.shape_cast %279 : vector<1x8x384xf32> to vector<8x384xf32>
    %281 = arith.index_cast %c1_i32_109 : i32 to index
    %c0_112 = arith.constant 0 : index
    %282 = vector.load %arg25[%281, %c0_112] : memref<2x384xf32, #tpu.memory_space<vmem>>, vector<1x384xf32>
    %283 = vector.broadcast %282 : vector<1x384xf32> to vector<8x384xf32>
    %284 = arith.addf %280, %283 : vector<8x384xf32>
    %c0_113 = arith.constant 0 : index
    %c0_114 = arith.constant 0 : index
    %285 = vector.load %arg15[%c0_113, %c0_114] : memref<128x384xf32, #tpu.memory_space<vmem>>, vector<128x384xf32>
    %cst_115 = arith.constant dense<0.000000e+00> : vector<8x384xf32>
    %286 = tpu.matmul %268, %285, %cst_115 {dimension_numbers = #tpu.dot_dimension_numbers<[1], [0], [0], [1], [0, 0, 1, 1], [], []>} : vector<8x128xf32>, vector<128x384xf32>, vector<8x384xf32> -> vector<8x384xf32>
    %c0_116 = arith.constant 0 : index
    %c0_117 = arith.constant 0 : index
    %287 = vector.load %arg16[%c0_116, %c0_117] : memref<1x384xf32, #tpu.memory_space<vmem>>, vector<1x384xf32>
    %288 = vector.broadcast %287 : vector<1x384xf32> to vector<8x384xf32>
    %289 = arith.addf %286, %288 : vector<8x384xf32>
    %290 = vector.extract_strided_slice %284 {offsets = [0, 0], sizes = [8, 128], strides = [1, 1]} : vector<8x384xf32> to vector<8x128xf32>
    %291 = vector.extract_strided_slice %289 {offsets = [0, 0], sizes = [8, 128], strides = [1, 1]} : vector<8x384xf32> to vector<8x128xf32>
    %292 = arith.addf %290, %291 : vector<8x128xf32>
    %293 = arith.negf %292 : vector<8x128xf32>
    %294 = math.exp %293 : vector<8x128xf32>
    %cst_118 = arith.constant 1.000000e+00 : f32
    %295 = vector.broadcast %cst_118 : f32 to vector<8x128xf32>
    %296 = arith.addf %295, %294 : vector<8x128xf32>
    %297 = arith.divf %295, %296 : vector<8x128xf32>
    %298 = vector.extract_strided_slice %284 {offsets = [0, 128], sizes = [8, 128], strides = [1, 1]} : vector<8x384xf32> to vector<8x128xf32>
    %299 = vector.extract_strided_slice %289 {offsets = [0, 128], sizes = [8, 128], strides = [1, 1]} : vector<8x384xf32> to vector<8x128xf32>
    %300 = arith.addf %298, %299 : vector<8x128xf32>
    %301 = arith.negf %300 : vector<8x128xf32>
    %302 = math.exp %301 : vector<8x128xf32>
    %cst_119 = arith.constant 1.000000e+00 : f32
    %303 = vector.broadcast %cst_119 : f32 to vector<8x128xf32>
    %304 = arith.addf %303, %302 : vector<8x128xf32>
    %305 = arith.divf %303, %304 : vector<8x128xf32>
    %306 = vector.extract_strided_slice %284 {offsets = [0, 256], sizes = [8, 128], strides = [1, 1]} : vector<8x384xf32> to vector<8x128xf32>
    %307 = vector.extract_strided_slice %289 {offsets = [0, 256], sizes = [8, 128], strides = [1, 1]} : vector<8x384xf32> to vector<8x128xf32>
    %308 = arith.mulf %297, %307 : vector<8x128xf32>
    %309 = arith.addf %306, %308 : vector<8x128xf32>
    %310 = math.tanh %309 : vector<8x128xf32>
    %cst_120 = arith.constant 1.000000e+00 : f32
    %311 = vector.broadcast %cst_120 : f32 to vector<8x128xf32>
    %312 = arith.subf %311, %305 : vector<8x128xf32>
    %313 = arith.mulf %312, %310 : vector<8x128xf32>
    %314 = arith.mulf %305, %268 : vector<8x128xf32>
    %315 = arith.addf %313, %314 : vector<8x128xf32>
    %c0_121 = arith.constant 0 : index
    %c0_122 = arith.constant 0 : index
    %316 = vector.load %arg17[%c0_121, %c0_122] : memref<128x128xf32, #tpu.memory_space<vmem>>, vector<128x128xf32>
    %cst_123 = arith.constant dense<0.000000e+00> : vector<8x128xf32>
    %317 = tpu.matmul %315, %316, %cst_123 {dimension_numbers = #tpu.dot_dimension_numbers<[1], [0], [0], [1], [0, 0, 1, 1], [], []>} : vector<8x128xf32>, vector<128x128xf32>, vector<8x128xf32> -> vector<8x128xf32>
    %c0_124 = arith.constant 0 : index
    %c0_125 = arith.constant 0 : index
    %318 = vector.load %arg18[%c0_124, %c0_125] : memref<1x128xf32, #tpu.memory_space<vmem>>, vector<1x128xf32>
    %319 = vector.broadcast %318 : vector<1x128xf32> to vector<8x128xf32>
    %320 = arith.addf %317, %319 : vector<8x128xf32>
    %c8_i32_126 = arith.constant 8 : i32
    %321 = arith.muli %c1_i32_109, %c8_i32_126 : i32
    %322 = tpu.assume_multiple %321, 8 : i32
    %323 = arith.index_cast %322 : i32 to index
    %c0_127 = arith.constant 0 : index
    %324 = vector.load %arg19[%323, %c0_127] : memref<16x128xf32, #tpu.memory_space<vmem>>, vector<8x128xf32>
    tpu.vector_store %arg19[%323, %c0_127], %320 {strides = array<i32>} : memref<16x128xf32, #tpu.memory_space<vmem>>, vector<8x128xf32>,
    %c2_i32_128 = arith.constant 2 : i32
    return
  }
  func.func @transform_0(%arg0: i32, %arg1: memref<2xi32, #tpu.memory_space<smem>>) -> (i32, i32) {
    %c0_i32 = arith.constant 0 : i32
    %c0_i32_0 = arith.constant 0 : i32
    %c0_i32_1 = arith.constant 0 : i32
    return %c0_i32, %c0_i32_0 : i32, i32
  }
  func.func @transform_1(%arg0: i32, %arg1: memref<2xi32, #tpu.memory_space<smem>>) -> (i32, i32) {
    %c0_i32 = arith.constant 0 : i32
    %c0_i32_0 = arith.constant 0 : i32
    %c0_i32_1 = arith.constant 0 : i32
    return %c0_i32, %c0_i32_0 : i32, i32
  }
  func.func @transform_2(%arg0: i32, %arg1: memref<2xi32, #tpu.memory_space<smem>>) -> (i32, i32) {
    %c0_i32 = arith.constant 0 : i32
    %c0_i32_0 = arith.constant 0 : i32
    %c0_i32_1 = arith.constant 0 : i32
    return %c0_i32, %c0_i32_0 : i32, i32
  }
  func.func @transform_3(%arg0: i32, %arg1: memref<2xi32, #tpu.memory_space<smem>>) -> (i32, i32) {
    %c0_i32 = arith.constant 0 : i32
    %c0_i32_0 = arith.constant 0 : i32
    %c0_i32_1 = arith.constant 0 : i32
    return %c0_i32, %c0_i32_0 : i32, i32
  }
  func.func @transform_4(%arg0: i32, %arg1: memref<2xi32, #tpu.memory_space<smem>>) -> (i32, i32) {
    %c0_i32 = arith.constant 0 : i32
    %c0_i32_0 = arith.constant 0 : i32
    %c0_i32_1 = arith.constant 0 : i32
    return %c0_i32, %c0_i32_0 : i32, i32
  }
  func.func @transform_5(%arg0: i32, %arg1: memref<2xi32, #tpu.memory_space<smem>>) -> (i32, i32) {
    %c0_i32 = arith.constant 0 : i32
    %c0_i32_0 = arith.constant 0 : i32
    %c0_i32_1 = arith.constant 0 : i32
    return %c0_i32, %c0_i32_0 : i32, i32
  }
  func.func @transform_6(%arg0: i32, %arg1: memref<2xi32, #tpu.memory_space<smem>>) -> (i32, i32) {
    %c0_i32 = arith.constant 0 : i32
    %c0_i32_0 = arith.constant 0 : i32
    %c0_i32_1 = arith.constant 0 : i32
    return %c0_i32, %c0_i32_0 : i32, i32
  }
  func.func @transform_7(%arg0: i32, %arg1: memref<2xi32, #tpu.memory_space<smem>>) -> (i32, i32) {
    %c0_i32 = arith.constant 0 : i32
    %c0_i32_0 = arith.constant 0 : i32
    %c0_i32_1 = arith.constant 0 : i32
    return %c0_i32, %c0_i32_0 : i32, i32
  }
  func.func @transform_8(%arg0: i32, %arg1: memref<2xi32, #tpu.memory_space<smem>>) -> (i32, i32) {
    %c0_i32 = arith.constant 0 : i32
    %c0_i32_0 = arith.constant 0 : i32
    %c0_i32_1 = arith.constant 0 : i32
    return %c0_i32, %c0_i32_0 : i32, i32
  }
  func.func @transform_9(%arg0: i32, %arg1: memref<2xi32, #tpu.memory_space<smem>>) -> (i32, i32) {
    %c0_i32 = arith.constant 0 : i32
    %c0_i32_0 = arith.constant 0 : i32
    %c0_i32_1 = arith.constant 0 : i32
    return %c0_i32, %c0_i32_0 : i32, i32
  }
  func.func @transform_10(%arg0: i32, %arg1: memref<2xi32, #tpu.memory_space<smem>>) -> (i32, i32) {
    %c0_i32 = arith.constant 0 : i32
    %c0_i32_0 = arith.constant 0 : i32
    %c0_i32_1 = arith.constant 0 : i32
    return %c0_i32, %c0_i32_0 : i32, i32
  }
  func.func @transform_11(%arg0: i32, %arg1: memref<2xi32, #tpu.memory_space<smem>>) -> (i32, i32) {
    %c0_i32 = arith.constant 0 : i32
    %c0_i32_0 = arith.constant 0 : i32
    %c0_i32_1 = arith.constant 0 : i32
    return %c0_i32, %c0_i32_0 : i32, i32
  }
  func.func @transform_12(%arg0: i32, %arg1: memref<2xi32, #tpu.memory_space<smem>>) -> (i32, i32) {
    %c0_i32 = arith.constant 0 : i32
    %c0_i32_0 = arith.constant 0 : i32
    %c0_i32_1 = arith.constant 0 : i32
    return %c0_i32, %c0_i32_0 : i32, i32
  }
  func.func @transform_13(%arg0: i32, %arg1: memref<2xi32, #tpu.memory_space<smem>>) -> (i32, i32) {
    %c0_i32 = arith.constant 0 : i32
    %c0_i32_0 = arith.constant 0 : i32
    %c0_i32_1 = arith.constant 0 : i32
    return %c0_i32, %c0_i32_0 : i32, i32
  }
  func.func @transform_14(%arg0: i32, %arg1: memref<2xi32, #tpu.memory_space<smem>>) -> (i32, i32) {
    %c0_i32 = arith.constant 0 : i32
    %c0_i32_0 = arith.constant 0 : i32
    %c0_i32_1 = arith.constant 0 : i32
    return %c0_i32, %c0_i32_0 : i32, i32
  }
  func.func @transform_15(%arg0: i32, %arg1: memref<2xi32, #tpu.memory_space<smem>>) -> (i32, i32) {
    %c0_i32 = arith.constant 0 : i32
    %c0_i32_0 = arith.constant 0 : i32
    %c0_i32_1 = arith.constant 0 : i32
    return %c0_i32, %c0_i32_0 : i32, i32
  }
  func.func @transform_16(%arg0: i32, %arg1: memref<2xi32, #tpu.memory_space<smem>>) -> (i32, i32) {
    %c0_i32 = arith.constant 0 : i32
    %c0_i32_0 = arith.constant 0 : i32
    %c0_i32_1 = arith.constant 0 : i32
    return %c0_i32, %c0_i32_0 : i32, i32
  }
  func.func @transform_17(%arg0: i32, %arg1: memref<2xi32, #tpu.memory_space<smem>>) -> (i32, i32) {
    %c0_i32 = arith.constant 0 : i32
    %c0_i32_0 = arith.constant 0 : i32
    %c0_i32_1 = arith.constant 0 : i32
    return %c0_i32, %c0_i32_0 : i32, i32
  }
}

</mosaic_0001>

<llo_original>
// kernel: tpu_custom_call.1
$region0: #{tpu_custom_call.1}
  #allocation0 [shape = 'u32[]', space=smem, size = 0x4, offset = 0x4, fixed_abs, tag = 'smem constant byte address 0x4 - core index']
  #allocation1 [shape = 'u32[144,128]{1,0:T(1,128)}', space=vmem, size = 0x12000, scoped, tag = 'internal scratch']
  #allocation2 [shape = 'f32[2,8,384]{2,1,0:T(8,128)}', space=vmem, size = 0x6000, scoped, tag = 'scratch operand']
  #allocation3 [shape = 'f32[2,8,384]{2,1,0:T(8,128)}', space=vmem, size = 0x6000, scoped, tag = 'scratch operand']
  #allocation4 [shape = 'f32[2,8,384]{2,1,0:T(8,128)}', space=vmem, size = 0x6000, scoped, tag = 'scratch operand']
  #allocation5 [shape = 'f32[2,128]{1,0:T(2,128)}', space=vmem, size = 0x400, scoped, tag = 'scratch operand']
  #allocation6 [shape = 'f32[2,128]{1,0:T(2,128)}', space=vmem, size = 0x400, scoped, tag = 'scratch operand']
  #allocation7 [shape = 'f32[2,384]{1,0:T(2,128)}', space=vmem, size = 0xc00, scoped, tag = 'scratch operand']
  #allocation8 [shape = 's32[1]{0}', space=sflag, size = 0x4, scoped, tag = 'scoped memory for tpu_custom_call.1']
  #allocation9 [shape = 'u8[512]{0}', space=smem, size = 0x200, scoped, tag = 'prefetched SMEM operand 0']
  %s0 = inlined_call_operand.hbm [shape: s32[2], index: 0, kind: input, shape index: {}]
  %s1 = inlined_call_operand.vmem [shape: s32[16,1], index: 1, kind: input, shape index: {}]
  %s2 = inlined_call_operand.hbm [shape: f32[128,1152], index: 2, kind: input, shape index: {}]
  %s3 = inlined_call_operand.vmem [shape: f32[1,1152], index: 3, kind: input, shape index: {}]
  %s4 = inlined_call_operand.hbm [shape: f32[128,384], index: 4, kind: input, shape index: {}]
  %s5 = inlined_call_operand.vmem [shape: f32[1,384], index: 5, kind: input, shape index: {}]
  %s6 = inlined_call_operand.hbm [shape: f32[128,384], index: 6, kind: input, shape index: {}]
  %s7 = inlined_call_operand.vmem [shape: f32[1,384], index: 7, kind: input, shape index: {}]
  %s8 = inlined_call_operand.hbm [shape: f32[128,128], index: 8, kind: input, shape index: {}]
  %s9 = inlined_call_operand.hbm [shape: f32[128,128], index: 9, kind: input, shape index: {}]
  %s10 = inlined_call_operand.vmem [shape: f32[1,128], index: 10, kind: input, shape index: {}]
  %s11 = inlined_call_operand.hbm [shape: f32[128,128], index: 11, kind: input, shape index: {}]
  %s12 = inlined_call_operand.vmem [shape: f32[1,128], index: 12, kind: input, shape index: {}]
  %s13 = inlined_call_operand.hbm [shape: f32[128,384], index: 13, kind: input, shape index: {}]
  %s14 = inlined_call_operand.hbm [shape: f32[128,384], index: 14, kind: input, shape index: {}]
  %s15 = inlined_call_operand.vmem [shape: f32[1,384], index: 15, kind: input, shape index: {}]
  %s16 = inlined_call_operand.hbm [shape: f32[128,128], index: 16, kind: input, shape index: {}]
  %s17 = inlined_call_operand.vmem [shape: f32[1,128], index: 17, kind: input, shape index: {}]
  %s18 = inlined_call_operand.hbm [shape: f32[16,128], index: 18, kind: output, shape index: {}]
  %s19 = sld [smem:[#allocation0]]
  $region114: #{tpu_custom_call.1} parent=0
    _
  %s21 = ssub.s32 1, %s19
  %s22 = scalar_select 0, %s21, %s19
  %24 = dma.hbm_to_smem %s0, 16, [#allocation9], [#allocation8]
  %25 = dma.done [#allocation8], 16
  %26 = sfence
  $region1: #{tpu_custom_call.1} parent=0
    #allocation10 [shape = 'u8[589824]{0}', space=vmem, size = 0x90000, scoped, tag = 'input window, operand 2, single buffered']
    #allocation11 [shape = 's32[1]{0}', space=sflag, size = 0x4, scoped, tag = 'scoped memory for tpu_custom_call.1']
    #allocation12 [shape = 's32[1]{0}', space=sflag, size = 0x4, scoped, tag = 'scoped memory for tpu_custom_call.1']
    #allocation13 [shape = 'u8[196608]{0}', space=vmem, size = 0x30000, scoped, tag = 'input window, operand 4, single buffered']
    #allocation14 [shape = 's32[1]{0}', space=sflag, size = 0x4, scoped, tag = 'scoped memory for tpu_custom_call.1']
    #allocation15 [shape = 'u8[196608]{0}', space=vmem, size = 0x30000, scoped, tag = 'input window, operand 6, single buffered']
    #allocation16 [shape = 'u8[65536]{0}', space=vmem, size = 0x10000, scoped, tag = 'input window, operand 8, single buffered']
    #allocation17 [shape = 's32[1]{0}', space=sflag, size = 0x4, scoped, tag = 'scoped memory for tpu_custom_call.1']
    #allocation18 [shape = 'u8[65536]{0}', space=vmem, size = 0x10000, scoped, tag = 'input window, operand 9, single buffered']
    #allocation19 [shape = 'u8[65536]{0}', space=vmem, size = 0x10000, scoped, tag = 'input window, operand 11, single buffered']
    #allocation20 [shape = 's32[1]{0}', space=sflag, size = 0x4, scoped, tag = 'scoped memory for tpu_custom_call.1']
    #allocation21 [shape = 'u8[196608]{0}', space=vmem, size = 0x30000, scoped, tag = 'input window, operand 13, single buffered']
    #allocation22 [shape = 'u8[196608]{0}', space=vmem, size = 0x30000, scoped, tag = 'input window, operand 14, single buffered']
    #allocation23 [shape = 's32[1]{0}', space=sflag, size = 0x4, scoped, tag = 'scoped memory for tpu_custom_call.1']
    #allocation24 [shape = 'u8[65536]{0}', space=vmem, size = 0x10000, scoped, tag = 'input window, operand 16, single buffered']
    #allocation25 [shape = 'u8[8192]{0}', space=vmem, size = 0x2000, scoped, tag = 'output window, operand 0, single buffered']
    %27 = vsyncpa [#allocation11], 0
    %28 = vsyncpa [#allocation14], 0
    %29 = vsyncpa [#allocation17], 0
    %30 = vsyncpa [#allocation20], 0
    %31 = vsyncpa [#allocation23], 0
    %32 = vsyncpa [#allocation12], 0
    // Predicated region
    $region2: #{tpu_custom_call.1} parent=1 // pred_check
      _
    $region3: #{tpu_custom_call.1} parent=1 // pred_check_branch
      %34 = sbr.rel (0) target = $region5
    $region4: #{tpu_custom_call.1} parent=1 // pred_region
      _
    $region5: #{tpu_custom_call.1} parent=1 // pred_fallthru
      _
    // Predicated region
    $region6: #{tpu_custom_call.1} parent=1 // pred_check
      _
    $region7: #{tpu_custom_call.1} parent=1 // pred_check_branch
      %36 = sbr.rel (0) target = $region9
    $region8: #{tpu_custom_call.1} parent=1 // pred_region
      %s38 = ssub.s32 18432, 18432
      %39 = vsyncadd [#allocation11], %s38
      %s40 = sshll.u32 [#allocation10], 4
      %s41 = int_to_ptr.vmem [resolvable:$true] %s40
      %46 = dma.hbm_to_vmem [thread:$0]  %s2, 18432, %s41, [#allocation11], 1152, 1152, 72
    $region9: #{tpu_custom_call.1} parent=1 // pred_fallthru
      _
    // Predicated region
    $region10: #{tpu_custom_call.1} parent=1 // pred_check
      _
    $region11: #{tpu_custom_call.1} parent=1 // pred_check_branch
      %48 = sbr.rel (0) target = $region13
    $region12: #{tpu_custom_call.1} parent=1 // pred_region
      _
    $region13: #{tpu_custom_call.1} parent=1 // pred_fallthru
      _
    // Predicated region
    $region14: #{tpu_custom_call.1} parent=1 // pred_check
      _
    $region15: #{tpu_custom_call.1} parent=1 // pred_check_branch
      %50 = sbr.rel (0) target = $region17
    $region16: #{tpu_custom_call.1} parent=1 // pred_region
      %s52 = ssub.s32 6144, 6144
      %53 = vsyncadd [#allocation14], %s52
      %s54 = sshll.u32 [#allocation13], 4
      %s55 = int_to_ptr.vmem [resolvable:$true] %s54
      %60 = dma.hbm_to_vmem [thread:$0]  %s4, 6144, %s55, [#allocation14], 384, 384, 24
    $region17: #{tpu_custom_call.1} parent=1 // pred_fallthru
      _
    // Predicated region
    $region18: #{tpu_custom_call.1} parent=1 // pred_check
      _
    $region19: #{tpu_custom_call.1} parent=1 // pred_check_branch
      %62 = sbr.rel (0) target = $region21
    $region20: #{tpu_custom_call.1} parent=1 // pred_region
      _
    $region21: #{tpu_custom_call.1} parent=1 // pred_fallthru
      _
    // Predicated region
    $region22: #{tpu_custom_call.1} parent=1 // pred_check
      _
    $region23: #{tpu_custom_call.1} parent=1 // pred_check_branch
      %64 = sbr.rel (0) target = $region25
    $region24: #{tpu_custom_call.1} parent=1 // pred_region
      %s66 = ssub.s32 6144, 6144
      %67 = vsyncadd [#allocation14], %s66
      %s68 = sshll.u32 [#allocation15], 4
      %s69 = int_to_ptr.vmem [resolvable:$true] %s68
      %74 = dma.hbm_to_vmem [thread:$0]  %s6, 6144, %s69, [#allocation14], 384, 384, 24
    $region25: #{tpu_custom_call.1} parent=1 // pred_fallthru
      _
    // Predicated region
    $region26: #{tpu_custom_call.1} parent=1 // pred_check
      _
    $region27: #{tpu_custom_call.1} parent=1 // pred_check_branch
      %76 = sbr.rel (0) target = $region29
    $region28: #{tpu_custom_call.1} parent=1 // pred_region
      _
    $region29: #{tpu_custom_call.1} parent=1 // pred_fallthru
      _
    // Predicated region
    $region30: #{tpu_custom_call.1} parent=1 // pred_check
      _
    $region31: #{tpu_custom_call.1} parent=1 // pred_check_branch
      %78 = sbr.rel (0) target = $region33
    $region32: #{tpu_custom_call.1} parent=1 // pred_region
      %s80 = ssub.s32 2048, 2048
      %81 = vsyncadd [#allocation17], %s80
      %s82 = sshll.u32 [#allocation16], 4
      %s83 = int_to_ptr.vmem [resolvable:$true] %s82
      %88 = dma.hbm_to_vmem [thread:$0]  %s8, 2048, %s83, [#allocation17], 128, 128, 8
    $region33: #{tpu_custom_call.1} parent=1 // pred_fallthru
      _
    // Predicated region
    $region34: #{tpu_custom_call.1} parent=1 // pred_check
      _
    $region35: #{tpu_custom_call.1} parent=1 // pred_check_branch
      %90 = sbr.rel (0) target = $region37
    $region36: #{tpu_custom_call.1} parent=1 // pred_region
      %s92 = ssub.s32 2048, 2048
      %93 = vsyncadd [#allocation17], %s92
      %s94 = sshll.u32 [#allocation18], 4
      %s95 = int_to_ptr.vmem [resolvable:$true] %s94
      %100 = dma.hbm_to_vmem [thread:$0]  %s9, 2048, %s95, [#allocation17], 128, 128, 8
    $region37: #{tpu_custom_call.1} parent=1 // pred_fallthru
      _
    // Predicated region
    $region38: #{tpu_custom_call.1} parent=1 // pred_check
      _
    $region39: #{tpu_custom_call.1} parent=1 // pred_check_branch
      %102 = sbr.rel (0) target = $region41
    $region40: #{tpu_custom_call.1} parent=1 // pred_region
      _
    $region41: #{tpu_custom_call.1} parent=1 // pred_fallthru
      _
    // Predicated region
    $region42: #{tpu_custom_call.1} parent=1 // pred_check
      _
    $region43: #{tpu_custom_call.1} parent=1 // pred_check_branch
      %104 = sbr.rel (0) target = $region45
    $region44: #{tpu_custom_call.1} parent=1 // pred_region
      %s106 = ssub.s32 2048, 2048
      %107 = vsyncadd [#allocation20], %s106
      %s108 = sshll.u32 [#allocation19], 4
      %s109 = int_to_ptr.vmem [resolvable:$true] %s108
      %114 = dma.hbm_to_vmem [thread:$0]  %s11, 2048, %s109, [#allocation20], 128, 128, 8
    $region45: #{tpu_custom_call.1} parent=1 // pred_fallthru
      _
    // Predicated region
    $region46: #{tpu_custom_call.1} parent=1 // pred_check
      _
    $region47: #{tpu_custom_call.1} parent=1 // pred_check_branch
      %116 = sbr.rel (0) target = $region49
    $region48: #{tpu_custom_call.1} parent=1 // pred_region
      _
    $region49: #{tpu_custom_call.1} parent=1 // pred_fallthru
      _
    // Predicated region
    $region50: #{tpu_custom_call.1} parent=1 // pred_check
      _
    $region51: #{tpu_custom_call.1} parent=1 // pred_check_branch
      %118 = sbr.rel (0) target = $region53
    $region52: #{tpu_custom_call.1} parent=1 // pred_region
      %s120 = ssub.s32 6144, 6144
      %121 = vsyncadd [#allocation20], %s120
      %s122 = sshll.u32 [#allocation21], 4
      %s123 = int_to_ptr.vmem [resolvable:$true] %s122
      %128 = dma.hbm_to_vmem [thread:$0]  %s13, 6144, %s123, [#allocation20], 384, 384, 24
    $region53: #{tpu_custom_call.1} parent=1 // pred_fallthru
      _
    // Predicated region
    $region54: #{tpu_custom_call.1} parent=1 // pred_check
      _
    $region55: #{tpu_custom_call.1} parent=1 // pred_check_branch
      %130 = sbr.rel (0) target = $region57
    $region56: #{tpu_custom_call.1} parent=1 // pred_region
      %s132 = ssub.s32 6144, 6144
      %133 = vsyncadd [#allocation23], %s132
      %s134 = sshll.u32 [#allocation22], 4
      %s135 = int_to_ptr.vmem [resolvable:$true] %s134
      %140 = dma.hbm_to_vmem [thread:$0]  %s14, 6144, %s135, [#allocation23], 384, 384, 24
    $region57: #{tpu_custom_call.1} parent=1 // pred_fallthru
      _
    // Predicated region
    $region58: #{tpu_custom_call.1} parent=1 // pred_check
      _
    $region59: #{tpu_custom_call.1} parent=1 // pred_check_branch
      %142 = sbr.rel (0) target = $region61
    $region60: #{tpu_custom_call.1} parent=1 // pred_region
      _
    $region61: #{tpu_custom_call.1} parent=1 // pred_fallthru
      _
    // Predicated region
    $region62: #{tpu_custom_call.1} parent=1 // pred_check
      _
    $region63: #{tpu_custom_call.1} parent=1 // pred_check_branch
      %144 = sbr.rel (0) target = $region65
    $region64: #{tpu_custom_call.1} parent=1 // pred_region
      %s146 = ssub.s32 2048, 2048
      %147 = vsyncadd [#allocation23], %s146
      %s148 = sshll.u32 [#allocation24], 4
      %s149 = int_to_ptr.vmem [resolvable:$true] %s148
      %154 = dma.hbm_to_vmem [thread:$0]  %s16, 2048, %s149, [#allocation23], 128, 128, 8
    $region65: #{tpu_custom_call.1} parent=1 // pred_fallthru
      _
    // Predicated region
    $region66: #{tpu_custom_call.1} parent=1 // pred_check
      _
    $region67: #{tpu_custom_call.1} parent=1 // pred_check_branch
      %156 = sbr.rel (0) target = $region69
    $region68: #{tpu_custom_call.1} parent=1 // pred_region
      _
    $region69: #{tpu_custom_call.1} parent=1 // pred_fallthru
      _
    // Predicated region
    $region70: #{tpu_custom_call.1} parent=1 // pred_check
      _
    $region71: #{tpu_custom_call.1} parent=1 // pred_check_branch
      %158 = sbr.rel (0) target = $region73
    $region72: #{tpu_custom_call.1} parent=1 // pred_region
      %159 = dma.done [#allocation11], 18432
    $region73: #{tpu_custom_call.1} parent=1 // pred_fallthru
      _
    // Predicated region
    $region74: #{tpu_custom_call.1} parent=1 // pred_check
      _
    $region75: #{tpu_custom_call.1} parent=1 // pred_check_branch
      %161 = sbr.rel (0) target = $region77
    $region76: #{tpu_custom_call.1} parent=1 // pred_region
      %162 = dma.done [#allocation14], 6144
    $region77: #{tpu_custom_call.1} parent=1 // pred_fallthru
      _
    // Predicated region
    $region78: #{tpu_custom_call.1} parent=1 // pred_check
      _
    $region79: #{tpu_custom_call.1} parent=1 // pred_check_branch
      %164 = sbr.rel (0) target = $region81
    $region80: #{tpu_custom_call.1} parent=1 // pred_region
      %165 = dma.done [#allocation14], 6144
    $region81: #{tpu_custom_call.1} parent=1 // pred_fallthru
      _
    // Predicated region
    $region82: #{tpu_custom_call.1} parent=1 // pred_check
      _
    $region83: #{tpu_custom_call.1} parent=1 // pred_check_branch
      %167 = sbr.rel (0) target = $region85
    $region84: #{tpu_custom_call.1} parent=1 // pred_region
      %168 = dma.done [#allocation17], 2048
    $region85: #{tpu_custom_call.1} parent=1 // pred_fallthru
      _
    // Predicated region
    $region86: #{tpu_custom_call.1} parent=1 // pred_check
      _
    $region87: #{tpu_custom_call.1} parent=1 // pred_check_branch
      %170 = sbr.rel (0) target = $region89
    $region88: #{tpu_custom_call.1} parent=1 // pred_region
      %171 = dma.done [#allocation17], 2048
    $region89: #{tpu_custom_call.1} parent=1 // pred_fallthru
      _
    // Predicated region
    $region90: #{tpu_custom_call.1} parent=1 // pred_check
      _
    $region91: #{tpu_custom_call.1} parent=1 // pred_check_branch
      %173 = sbr.rel (0) target = $region93
    $region92: #{tpu_custom_call.1} parent=1 // pred_region
      %174 = dma.done [#allocation20], 2048
    $region93: #{tpu_custom_call.1} parent=1 // pred_fallthru
      _
    // Predicated region
    $region94: #{tpu_custom_call.1} parent=1 // pred_check
      _
    $region95: #{tpu_custom_call.1} parent=1 // pred_check_branch
      %176 = sbr.rel (0) target = $region97
    $region96: #{tpu_custom_call.1} parent=1 // pred_region
      %177 = dma.done [#allocation20], 6144
    $region97: #{tpu_custom_call.1} parent=1 // pred_fallthru
      _
    // Predicated region
    $region98: #{tpu_custom_call.1} parent=1 // pred_check
      _
    $region99: #{tpu_custom_call.1} parent=1 // pred_check_branch
      %179 = sbr.rel (0) target = $region101
    $region100: #{tpu_custom_call.1} parent=1 // pred_region
      %180 = dma.done [#allocation23], 6144
    $region101: #{tpu_custom_call.1} parent=1 // pred_fallthru
      _
    // Predicated region
    $region102: #{tpu_custom_call.1} parent=1 // pred_check
      _
    $region103: #{tpu_custom_call.1} parent=1 // pred_check_branch
      %182 = sbr.rel (0) target = $region105
    $region104: #{tpu_custom_call.1} parent=1 // pred_region
      %183 = dma.done [#allocation23], 2048
    $region105: #{tpu_custom_call.1} parent=1 // pred_fallthru
      _
    %v184 = vld [vmem:[%s1] sm:$0xff]
    %v185 = vld [vmem:[%s1 + $0x8] sm:$0xff]
    %v186 = vlaneseq
    %v187 = vand.u32 %v186, 127
    %188 = vset.pattern.permute.xlu0 0
    %189 = vperm.xlu0 %188, %v184
    %v190 = vpop.permute.xlu0 %189
    %191 = vset.pattern.permute.xlu0 0
    %192 = vperm.xlu0 %191, %v185
    %v193 = vpop.permute.xlu0 %192
    %vm194 = vcmp.eq.s32.totalorder %v190, %v187
    %vm195 = vcmp.eq.s32.totalorder %v193, %v187
    %v196 = vsel %vm194, 1, 0
    %v197 = vsel %vm195, 1, 0
    %v198 = vcvt.s32.f32 %v196
    %v199 = vcvt.s32.f32 %v197
    %v200 = vld [vmem:[#allocation10] sm:$0xff]
    %v201 = vld [vmem:[#allocation10 + $0x8] sm:$0xff]
    %v202 = vld [vmem:[#allocation10 + $0x10] sm:$0xff]
    %v203 = vld [vmem:[#allocation10 + $0x18] sm:$0xff]
    %v204 = vld [vmem:[#allocation10 + $0x20] sm:$0xff]
    %v205 = vld [vmem:[#allocation10 + $0x28] sm:$0xff]
    %v206 = vld [vmem:[#allocation10 + $0x30] sm:$0xff]
    %v207 = vld [vmem:[#allocation10 + $0x38] sm:$0xff]
    %v208 = vld [vmem:[#allocation10 + $0x40] sm:$0xff]
    %v209 = vld [vmem:[#allocation10 + $0x48] sm:$0xff]
    %v210 = vld [vmem:[#allocation10 + $0x50] sm:$0xff]
    %v211 = vld [vmem:[#allocation10 + $0x58] sm:$0xff]
    %v212 = vld [vmem:[#allocation10 + $0x60] sm:$0xff]
    %v213 = vld [vmem:[#allocation10 + $0x68] sm:$0xff]
    %v214 = vld [vmem:[#allocation10 + $0x70] sm:$0xff]
    %v215 = vld [vmem:[#allocation10 + $0x78] sm:$0xff]
    %v216 = vld [vmem:[#allocation10 + $0x80] sm:$0xff]
    %v217 = vld [vmem:[#allocation10 + $0x88] sm:$0xff]
    %v218 = vld [vmem:[#allocation10 + $0x90] sm:$0xff]
    %v219 = vld [vmem:[#allocation10 + $0x98] sm:$0xff]
    %v220 = vld [vmem:[#allocation10 + $0xa0] sm:$0xff]
    %v221 = vld [vmem:[#allocation10 + $0xa8] sm:$0xff]
    %v222 = vld [vmem:[#allocation10 + $0xb0] sm:$0xff]
    %v223 = vld [vmem:[#allocation10 + $0xb8] sm:$0xff]
    %v224 = vld [vmem:[#allocation10 + $0xc0] sm:$0xff]
    %v225 = vld [vmem:[#allocation10 + $0xc8] sm:$0xff]
    %v226 = vld [vmem:[#allocation10 + $0xd0] sm:$0xff]
    %v227 = vld [vmem:[#allocation10 + $0xd8] sm:$0xff]
    %v228 = vld [vmem:[#allocation10 + $0xe0] sm:$0xff]
    %v229 = vld [vmem:[#allocation10 + $0xe8] sm:$0xff]
    %v230 = vld [vmem:[#allocation10 + $0xf0] sm:$0xff]
    %v231 = vld [vmem:[#allocation10 + $0xf8] sm:$0xff]
    %v232 = vld [vmem:[#allocation10 + $0x100] sm:$0xff]
    %v233 = vld [vmem:[#allocation10 + $0x108] sm:$0xff]
    %v234 = vld [vmem:[#allocation10 + $0x110] sm:$0xff]
    %v235 = vld [vmem:[#allocation10 + $0x118] sm:$0xff]
    %v236 = vld [vmem:[#allocation10 + $0x120] sm:$0xff]
    %v237 = vld [vmem:[#allocation10 + $0x128] sm:$0xff]
    %v238 = vld [vmem:[#allocation10 + $0x130] sm:$0xff]
    %v239 = vld [vmem:[#allocation10 + $0x138] sm:$0xff]
    %v240 = vld [vmem:[#allocation10 + $0x140] sm:$0xff]
    %v241 = vld [vmem:[#allocation10 + $0x148] sm:$0xff]
    %v242 = vld [vmem:[#allocation10 + $0x150] sm:$0xff]
    %v243 = vld [vmem:[#allocation10 + $0x158] sm:$0xff]
    %v244 = vld [vmem:[#allocation10 + $0x160] sm:$0xff]
    %v245 = vld [vmem:[#allocation10 + $0x168] sm:$0xff]
    %v246 = vld [vmem:[#allocation10 + $0x170] sm:$0xff]
    %v247 = vld [vmem:[#allocation10 + $0x178] sm:$0xff]
    %v248 = vld [vmem:[#allocation10 + $0x180] sm:$0xff]
    %v249 = vld [vmem:[#allocation10 + $0x188] sm:$0xff]
    %v250 = vld [vmem:[#allocation10 + $0x190] sm:$0xff]
    %v251 = vld [vmem:[#allocation10 + $0x198] sm:$0xff]
    %v252 = vld [vmem:[#allocation10 + $0x1a0] sm:$0xff]
    %v253 = vld [vmem:[#allocation10 + $0x1a8] sm:$0xff]
    %v254 = vld [vmem:[#allocation10 + $0x1b0] sm:$0xff]
    %v255 = vld [vmem:[#allocation10 + $0x1b8] sm:$0xff]
    %v256 = vld [vmem:[#allocation10 + $0x1c0] sm:$0xff]
    %v257 = vld [vmem:[#allocation10 + $0x1c8] sm:$0xff]
    %v258 = vld [vmem:[#allocation10 + $0x1d0] sm:$0xff]
    %v259 = vld [vmem:[#allocation10 + $0x1d8] sm:$0xff]
    %v260 = vld [vmem:[#allocation10 + $0x1e0] sm:$0xff]
    %v261 = vld [vmem:[#allocation10 + $0x1e8] sm:$0xff]
    %v262 = vld [vmem:[#allocation10 + $0x1f0] sm:$0xff]
    %v263 = vld [vmem:[#allocation10 + $0x1f8] sm:$0xff]
    %v264 = vld [vmem:[#allocation10 + $0x200] sm:$0xff]
    %v265 = vld [vmem:[#allocation10 + $0x208] sm:$0xff]
    %v266 = vld [vmem:[#allocation10 + $0x210] sm:$0xff]
    %v267 = vld [vmem:[#allocation10 + $0x218] sm:$0xff]
    %v268 = vld [vmem:[#allocation10 + $0x220] sm:$0xff]
    %v269 = vld [vmem:[#allocation10 + $0x228] sm:$0xff]
    %v270 = vld [vmem:[#allocation10 + $0x230] sm:$0xff]
    %v271 = vld [vmem:[#allocation10 + $0x238] sm:$0xff]
    %v272 = vld [vmem:[#allocation10 + $0x240] sm:$0xff]
    %v273 = vld [vmem:[#allocation10 + $0x248] sm:$0xff]
    %v274 = vld [vmem:[#allocation10 + $0x250] sm:$0xff]
    %v275 = vld [vmem:[#allocation10 + $0x258] sm:$0xff]
    %v276 = vld [vmem:[#allocation10 + $0x260] sm:$0xff]
    %v277 = vld [vmem:[#allocation10 + $0x268] sm:$0xff]
    %v278 = vld [vmem:[#allocation10 + $0x270] sm:$0xff]
    %v279 = vld [vmem:[#allocation10 + $0x278] sm:$0xff]
    %v280 = vld [vmem:[#allocation10 + $0x280] sm:$0xff]
    %v281 = vld [vmem:[#allocation10 + $0x288] sm:$0xff]
    %v282 = vld [vmem:[#allocation10 + $0x290] sm:$0xff]
    %v283 = vld [vmem:[#allocation10 + $0x298] sm:$0xff]
    %v284 = vld [vmem:[#allocation10 + $0x2a0] sm:$0xff]
    %v285 = vld [vmem:[#allocation10 + $0x2a8] sm:$0xff]
    %v286 = vld [vmem:[#allocation10 + $0x2b0] sm:$0xff]
    %v287 = vld [vmem:[#allocation10 + $0x2b8] sm:$0xff]
    %v288 = vld [vmem:[#allocation10 + $0x2c0] sm:$0xff]
    %v289 = vld [vmem:[#allocation10 + $0x2c8] sm:$0xff]
    %v290 = vld [vmem:[#allocation10 + $0x2d0] sm:$0xff]
    %v291 = vld [vmem:[#allocation10 + $0x2d8] sm:$0xff]
    %v292 = vld [vmem:[#allocation10 + $0x2e0] sm:$0xff]
    %v293 = vld [vmem:[#allocation10 + $0x2e8] sm:$0xff]
    %v294 = vld [vmem:[#allocation10 + $0x2f0] sm:$0xff]
    %v295 = vld [vmem:[#allocation10 + $0x2f8] sm:$0xff]
    %v296 = vld [vmem:[#allocation10 + $0x300] sm:$0xff]
    %v297 = vld [vmem:[#allocation10 + $0x308] sm:$0xff]
    %v298 = vld [vmem:[#allocation10 + $0x310] sm:$0xff]
    %v299 = vld [vmem:[#allocation10 + $0x318] sm:$0xff]
    %v300 = vld [vmem:[#allocation10 + $0x320] sm:$0xff]
    %v301 = vld [vmem:[#allocation10 + $0x328] sm:$0xff]
    %v302 = vld [vmem:[#allocation10 + $0x330] sm:$0xff]
    %v303 = vld [vmem:[#allocation10 + $0x338] sm:$0xff]
    %v304 = vld [vmem:[#allocation10 + $0x340] sm:$0xff]
    %v305 = vld [vmem:[#allocation10 + $0x348] sm:$0xff]
    %v306 = vld [vmem:[#allocation10 + $0x350] sm:$0xff]
    %v307 = vld [vmem:[#allocation10 + $0x358] sm:$0xff]
    %v308 = vld [vmem:[#allocation10 + $0x360] sm:$0xff]
    %v309 = vld [vmem:[#allocation10 + $0x368] sm:$0xff]
    %v310 = vld [vmem:[#allocation10 + $0x370] sm:$0xff]
    %v311 = vld [vmem:[#allocation10 + $0x378] sm:$0xff]
    %v312 = vld [vmem:[#allocation10 + $0x380] sm:$0xff]
    %v313 = vld [vmem:[#allocation10 + $0x388] sm:$0xff]
    %v314 = vld [vmem:[#allocation10 + $0x390] sm:$0xff]
    %v315 = vld [vmem:[#allocation10 + $0x398] sm:$0xff]
    %v316 = vld [vmem:[#allocation10 + $0x3a0] sm:$0xff]
    %v317 = vld [vmem:[#allocation10 + $0x3a8] sm:$0xff]
    %v318 = vld [vmem:[#allocation10 + $0x3b0] sm:$0xff]
    %v319 = vld [vmem:[#allocation10 + $0x3b8] sm:$0xff]
    %v320 = vld [vmem:[#allocation10 + $0x3c0] sm:$0xff]
    %v321 = vld [vmem:[#allocation10 + $0x3c8] sm:$0xff]
    %v322 = vld [vmem:[#allocation10 + $0x3d0] sm:$0xff]
    %v323 = vld [vmem:[#allocation10 + $0x3d8] sm:$0xff]
    %v324 = vld [vmem:[#allocation10 + $0x3e0] sm:$0xff]
    %v325 = vld [vmem:[#allocation10 + $0x3e8] sm:$0xff]
    %v326 = vld [vmem:[#allocation10 + $0x3f0] sm:$0xff]
    %v327 = vld [vmem:[#allocation10 + $0x3f8] sm:$0xff]
    %v328 = vld [vmem:[#allocation10 + $0x400] sm:$0xff]
    %v329 = vld [vmem:[#allocation10 + $0x408] sm:$0xff]
    %v330 = vld [vmem:[#allocation10 + $0x410] sm:$0xff]
    %v331 = vld [vmem:[#allocation10 + $0x418] sm:$0xff]
    %v332 = vld [vmem:[#allocation10 + $0x420] sm:$0xff]
    %v333 = vld [vmem:[#allocation10 + $0x428] sm:$0xff]
    %v334 = vld [vmem:[#allocation10 + $0x430] sm:$0xff]
    %v335 = vld [vmem:[#allocation10 + $0x438] sm:$0xff]
    %v336 = vld [vmem:[#allocation10 + $0x440] sm:$0xff]
    %v337 = vld [vmem:[#allocation10 + $0x448] sm:$0xff]
    %v338 = vld [vmem:[#allocation10 + $0x450] sm:$0xff]
    %v339 = vld [vmem:[#allocation10 + $0x458] sm:$0xff]
    %v340 = vld [vmem:[#allocation10 + $0x460] sm:$0xff]
    %v341 = vld [vmem:[#allocation10 + $0x468] sm:$0xff]
    %v342 = vld [vmem:[#allocation10 + $0x470] sm:$0xff]
    %v343 = vld [vmem:[#allocation10 + $0x478] sm:$0xff]
    %v344 = vld [vmem:[%s3] sm:$0xff]
    %v345 = vld [vmem:[%s3 + $0x8] sm:$0x1]
    %v348 = vlaneseq
    %v349 = vshrl.u32 %v348, 7
    %v350 = vsub.s32 0, %v349
    %v351 = vrot.slane %v344, %v350
    %v352 = vlaneseq
    %v353 = vshrl.u32 %v352, 7
    %v354 = vsub.s32 1, %v353
    %v355 = vrot.slane %v344, %v354
    %v356 = vlaneseq
    %v357 = vshrl.u32 %v356, 7
    %v358 = vsub.s32 2, %v357
    %v359 = vrot.slane %v344, %v358
    %v360 = vlaneseq
    %v361 = vshrl.u32 %v360, 7
    %v362 = vsub.s32 3, %v361
    %v363 = vrot.slane %v344, %v362
    %v364 = vlaneseq
    %v365 = vshrl.u32 %v364, 7
    %v366 = vsub.s32 4, %v365
    %v367 = vrot.slane %v344, %v366
    %v368 = vlaneseq
    %v369 = vshrl.u32 %v368, 7
    %v370 = vsub.s32 5, %v369
    %v371 = vrot.slane %v344, %v370
    %v372 = vlaneseq
    %v373 = vshrl.u32 %v372, 7
    %v374 = vsub.s32 6, %v373
    %v375 = vrot.slane %v344, %v374
    %v376 = vlaneseq
    %v377 = vshrl.u32 %v376, 7
    %v378 = vsub.s32 7, %v377
    %v379 = vrot.slane %v344, %v378
    %v380 = vlaneseq
    %v381 = vshrl.u32 %v380, 7
    %v382 = vsub.s32 0, %v381
    %v383 = vrot.slane %v345, %v382
    %393 = vmatprep.subr.mxu0 %v336
    %394 = vmatpush1.msra.mxu0 %v335
    %395 = vmatprep.subr.mxu0 %v327
    %396 = vmatpush1.msra.mxu0 %v326
    %397 = vmatprep.subr.mxu0 %v318
    %398 = vmatpush1.msra.mxu0 %v317
    %399 = vmatprep.subr.mxu0 %v309
    %400 = vmatpush1.msra.mxu0 %v308
    %401 = vmatprep.subr.mxu0 %v300
    %402 = vmatpush1.msra.mxu0 %v299
    %403 = vmatprep.subr.mxu0 %v291
    %404 = vmatpush1.msra.mxu0 %v290
    %405 = vmatprep.subr.mxu0 %v282
    %406 = vmatpush1.msra.mxu0 %v281
    %407 = vmatprep.subr.mxu0 %v273
    %408 = vmatpush1.msra.mxu0 %v272
    %409 = vmatprep.subr.mxu0 %v264
    %410 = vmatpush1.msra.mxu0 %v263
    %411 = vmatprep.subr.mxu0 %v255
    %412 = vmatpush1.msra.mxu0 %v254
    %413 = vmatprep.subr.mxu0 %v246
    %414 = vmatpush1.msra.mxu0 %v245
    %415 = vmatprep.subr.mxu0 %v237
    %416 = vmatpush1.msra.mxu0 %v236
    %417 = vmatprep.subr.mxu0 %v228
    %418 = vmatpush1.msra.mxu0 %v227
    %419 = vmatprep.subr.mxu0 %v219
    %420 = vmatpush1.msra.mxu0 %v218
    %421 = vmatprep.subr.mxu0 %v210
    %422 = vmatpush1.msra.mxu0 %v209
    %423 = vmatprep.subr.mxu0 %v201
    %424 = vmatpush1.msra.mxu0 %v200
    %425 = vmatprep.subr.mxu0 0.0
    %426 = vmatpush2.msra.mxu0 0.0
    %427 = vmatprep.subr.mxu0 0.0
    %428 = vmatpush2.msra.mxu0 0.0
    %429 = vmatprep.subr.mxu0 0.0
    %430 = vmatpush2.msra.mxu0 0.0
    %431 = vmatprep.subr.mxu0 0.0
    %432 = vmatpush2.msra.mxu0 0.0
    %433 = vmatprep.subr.mxu0 0.0
    %434 = vmatpush2.msra.mxu0 0.0
    %435 = vmatprep.subr.mxu0 0.0
    %436 = vmatpush2.msra.mxu0 0.0
    %437 = vmatprep.subr.mxu0 0.0
    %438 = vmatpush2.msra.mxu0 0.0
    %439 = vmatprep.subr.mxu0 0.0
    %440 = vmatpush2.msra.mxu0 0.0
    %441 = vmatprep.subr.mxu0 0.0
    %442 = vmatpush2.msra.mxu0 0.0
    %443 = vmatprep.subr.mxu0 0.0
    %444 = vmatpush2.msra.mxu0 0.0
    %445 = vmatprep.subr.mxu0 0.0
    %446 = vmatpush2.msra.mxu0 0.0
    %447 = vmatprep.subr.mxu0 0.0
    %448 = vmatpush2.msra.mxu0 0.0
    %449 = vmatprep.subr.mxu0 0.0
    %450 = vmatpush2.msra.mxu0 0.0
    %451 = vmatprep.subr.mxu0 0.0
    %452 = vmatpush2.msra.mxu0 0.0
    %453 = vmatprep.subr.mxu0 0.0
    %454 = vmatpush2.msra.mxu0 0.0
    %455 = vmatprep.subr.mxu0 0.0
    %456 = vmatpush2.msra.mxu0 0.0
    %457 = vmatprep.mubr.f32.mxu0 0.0
    %458 = vmatmul.mubr.f32.gmra.mxu0 %v198
    %v459 = vpop.f32.mrf.mxu0
    %v460 = vadd.f32 %v351, %v459
    %v461 = vpop.f32.mrf.mxu0
    %v462 = vadd.f32 %v355, %v461
    %463 = vmatprep.mubr.f32.mxu0 0.0
    %464 = vmatmul.mubr.f32.gmra.mxu0 %v199
    %v465 = vpop.f32.mrf.mxu0
    %v466 = vadd.f32 %v351, %v465
    %v467 = vpop.f32.mrf.mxu0
    %v468 = vadd.f32 %v355, %v467
    %469 = vdwg.mxu0
    %470 = vmatprep.subr.mxu0 %v338
    %471 = vmatpush1.msra.mxu0 %v337
    %472 = vmatprep.subr.mxu0 %v329
    %473 = vmatpush1.msra.mxu0 %v328
    %474 = vmatprep.subr.mxu0 %v320
    %475 = vmatpush1.msra.mxu0 %v319
    %476 = vmatprep.subr.mxu0 %v311
    %477 = vmatpush1.msra.mxu0 %v310
    %478 = vmatprep.subr.mxu0 %v302
    %479 = vmatpush1.msra.mxu0 %v301
    %480 = vmatprep.subr.mxu0 %v293
    %481 = vmatpush1.msra.mxu0 %v292
    %482 = vmatprep.subr.mxu0 %v284
    %483 = vmatpush1.msra.mxu0 %v283
    %484 = vmatprep.subr.mxu0 %v275
    %485 = vmatpush1.msra.mxu0 %v274
    %486 = vmatprep.subr.mxu0 %v266
    %487 = vmatpush1.msra.mxu0 %v265
    %488 = vmatprep.subr.mxu0 %v257
    %489 = vmatpush1.msra.mxu0 %v256
    %490 = vmatprep.subr.mxu0 %v248
    %491 = vmatpush1.msra.mxu0 %v247
    %492 = vmatprep.subr.mxu0 %v239
    %493 = vmatpush1.msra.mxu0 %v238
    %494 = vmatprep.subr.mxu0 %v230
    %495 = vmatpush1.msra.mxu0 %v229
    %496 = vmatprep.subr.mxu0 %v221
    %497 = vmatpush1.msra.mxu0 %v220
    %498 = vmatprep.subr.mxu0 %v212
    %499 = vmatpush1.msra.mxu0 %v211
    %500 = vmatprep.subr.mxu0 %v203
    %501 = vmatpush1.msra.mxu0 %v202
    %502 = vmatprep.subr.mxu0 0.0
    %503 = vmatpush2.msra.mxu0 0.0
    %504 = vmatprep.subr.mxu0 0.0
    %505 = vmatpush2.msra.mxu0 0.0
    %506 = vmatprep.subr.mxu0 0.0
    %507 = vmatpush2.msra.mxu0 0.0
    %508 = vmatprep.subr.mxu0 0.0
    %509 = vmatpush2.msra.mxu0 0.0
    %510 = vmatprep.subr.mxu0 0.0
    %511 = vmatpush2.msra.mxu0 0.0
    %512 = vmatprep.subr.mxu0 0.0
    %513 = vmatpush2.msra.mxu0 0.0
    %514 = vmatprep.subr.mxu0 0.0
    %515 = vmatpush2.msra.mxu0 0.0
    %516 = vmatprep.subr.mxu0 0.0
    %517 = vmatpush2.msra.mxu0 0.0
    %518 = vmatprep.subr.mxu0 0.0
    %519 = vmatpush2.msra.mxu0 0.0
    %520 = vmatprep.subr.mxu0 0.0
    %521 = vmatpush2.msra.mxu0 0.0
    %522 = vmatprep.subr.mxu0 0.0
    %523 = vmatpush2.msra.mxu0 0.0
    %524 = vmatprep.subr.mxu0 0.0
    %525 = vmatpush2.msra.mxu0 0.0
    %526 = vmatprep.subr.mxu0 0.0
    %527 = vmatpush2.msra.mxu0 0.0
    %528 = vmatprep.subr.mxu0 0.0
    %529 = vmatpush2.msra.mxu0 0.0
    %530 = vmatprep.subr.mxu0 0.0
    %531 = vmatpush2.msra.mxu0 0.0
    %532 = vmatprep.subr.mxu0 0.0
    %533 = vmatpush2.msra.mxu0 0.0
    %534 = vmatprep.mubr.f32.mxu0 0.0
    %535 = vmatmul.mubr.f32.gmra.mxu0 %v198
    %v536 = vpop.f32.mrf.mxu0
    %v537 = vadd.f32 %v359, %v536
    %v538 = vpop.f32.mrf.mxu0
    %v539 = vadd.f32 %v363, %v538
    %540 = vmatprep.mubr.f32.mxu0 0.0
    %541 = vmatmul.mubr.f32.gmra.mxu0 %v199
    %v542 = vpop.f32.mrf.mxu0
    %v543 = vadd.f32 %v359, %v542
    %v544 = vpop.f32.mrf.mxu0
    %v545 = vadd.f32 %v363, %v544
    %546 = vdwg.mxu0
    %547 = vmatprep.subr.mxu0 %v340
    %548 = vmatpush1.msra.mxu0 %v339
    %549 = vmatprep.subr.mxu0 %v331
    %550 = vmatpush1.msra.mxu0 %v330
    %551 = vmatprep.subr.mxu0 %v322
    %552 = vmatpush1.msra.mxu0 %v321
    %553 = vmatprep.subr.mxu0 %v313
    %554 = vmatpush1.msra.mxu0 %v312
    %555 = vmatprep.subr.mxu0 %v304
    %556 = vmatpush1.msra.mxu0 %v303
    %557 = vmatprep.subr.mxu0 %v295
    %558 = vmatpush1.msra.mxu0 %v294
    %559 = vmatprep.subr.mxu0 %v286
    %560 = vmatpush1.msra.mxu0 %v285
    %561 = vmatprep.subr.mxu0 %v277
    %562 = vmatpush1.msra.mxu0 %v276
    %563 = vmatprep.subr.mxu0 %v268
    %564 = vmatpush1.msra.mxu0 %v267
    %565 = vmatprep.subr.mxu0 %v259
    %566 = vmatpush1.msra.mxu0 %v258
    %567 = vmatprep.subr.mxu0 %v250
    %568 = vmatpush1.msra.mxu0 %v249
    %569 = vmatprep.subr.mxu0 %v241
    %570 = vmatpush1.msra.mxu0 %v240
    %571 = vmatprep.subr.mxu0 %v232
    %572 = vmatpush1.msra.mxu0 %v231
    %573 = vmatprep.subr.mxu0 %v223
    %574 = vmatpush1.msra.mxu0 %v222
    %575 = vmatprep.subr.mxu0 %v214
    %576 = vmatpush1.msra.mxu0 %v213
    %577 = vmatprep.subr.mxu0 %v205
    %578 = vmatpush1.msra.mxu0 %v204
    %579 = vmatprep.subr.mxu0 0.0
    %580 = vmatpush2.msra.mxu0 0.0
    %581 = vmatprep.subr.mxu0 0.0
    %582 = vmatpush2.msra.mxu0 0.0
    %583 = vmatprep.subr.mxu0 0.0
    %584 = vmatpush2.msra.mxu0 0.0
    %585 = vmatprep.subr.mxu0 0.0
    %586 = vmatpush2.msra.mxu0 0.0
    %587 = vmatprep.subr.mxu0 0.0
    %588 = vmatpush2.msra.mxu0 0.0
    %589 = vmatprep.subr.mxu0 0.0
    %590 = vmatpush2.msra.mxu0 0.0
    %591 = vmatprep.subr.mxu0 0.0
    %592 = vmatpush2.msra.mxu0 0.0
    %593 = vmatprep.subr.mxu0 0.0
    %594 = vmatpush2.msra.mxu0 0.0
    %595 = vmatprep.subr.mxu0 0.0
    %596 = vmatpush2.msra.mxu0 0.0
    %597 = vmatprep.subr.mxu0 0.0
    %598 = vmatpush2.msra.mxu0 0.0
    %599 = vmatprep.subr.mxu0 0.0
    %600 = vmatpush2.msra.mxu0 0.0
    %601 = vmatprep.subr.mxu0 0.0
    %602 = vmatpush2.msra.mxu0 0.0
    %603 = vmatprep.subr.mxu0 0.0
    %604 = vmatpush2.msra.mxu0 0.0
    %605 = vmatprep.subr.mxu0 0.0
    %606 = vmatpush2.msra.mxu0 0.0
    %607 = vmatprep.subr.mxu0 0.0
    %608 = vmatpush2.msra.mxu0 0.0
    %609 = vmatprep.subr.mxu0 0.0
    %610 = vmatpush2.msra.mxu0 0.0
    %611 = vmatprep.mubr.f32.mxu0 0.0
    %612 = vmatmul.mubr.f32.gmra.mxu0 %v198
    %v613 = vpop.f32.mrf.mxu0
    %v614 = vadd.f32 %v367, %v613
    %v615 = vpop.f32.mrf.mxu0
    %v616 = vadd.f32 %v371, %v615
    %617 = vmatprep.mubr.f32.mxu0 0.0
    %618 = vmatmul.mubr.f32.gmra.mxu0 %v199
    %v619 = vpop.f32.mrf.mxu0
    %v620 = vadd.f32 %v367, %v619
    %v621 = vpop.f32.mrf.mxu0
    %v622 = vadd.f32 %v371, %v621
    %623 = vdwg.mxu0
    %624 = vmatprep.subr.mxu0 %v342
    %625 = vmatpush1.msra.mxu0 %v341
    %626 = vmatprep.subr.mxu0 %v333
    %627 = vmatpush1.msra.mxu0 %v332
    %628 = vmatprep.subr.mxu0 %v324
    %629 = vmatpush1.msra.mxu0 %v323
    %630 = vmatprep.subr.mxu0 %v315
    %631 = vmatpush1.msra.mxu0 %v314
    %632 = vmatprep.subr.mxu0 %v306
    %633 = vmatpush1.msra.mxu0 %v305
    %634 = vmatprep.subr.mxu0 %v297
    %635 = vmatpush1.msra.mxu0 %v296
    %636 = vmatprep.subr.mxu0 %v288
    %637 = vmatpush1.msra.mxu0 %v287
    %638 = vmatprep.subr.mxu0 %v279
    %639 = vmatpush1.msra.mxu0 %v278
    %640 = vmatprep.subr.mxu0 %v270
    %641 = vmatpush1.msra.mxu0 %v269
    %642 = vmatprep.subr.mxu0 %v261
    %643 = vmatpush1.msra.mxu0 %v260
    %644 = vmatprep.subr.mxu0 %v252
    %645 = vmatpush1.msra.mxu0 %v251
    %646 = vmatprep.subr.mxu0 %v243
    %647 = vmatpush1.msra.mxu0 %v242
    %648 = vmatprep.subr.mxu0 %v234
    %649 = vmatpush1.msra.mxu0 %v233
    %650 = vmatprep.subr.mxu0 %v225
    %651 = vmatpush1.msra.mxu0 %v224
    %652 = vmatprep.subr.mxu0 %v216
    %653 = vmatpush1.msra.mxu0 %v215
    %654 = vmatprep.subr.mxu0 %v207
    %655 = vmatpush1.msra.mxu0 %v206
    %656 = vmatprep.subr.mxu0 0.0
    %657 = vmatpush2.msra.mxu0 0.0
    %658 = vmatprep.subr.mxu0 0.0
    %659 = vmatpush2.msra.mxu0 0.0
    %660 = vmatprep.subr.mxu0 0.0
    %661 = vmatpush2.msra.mxu0 0.0
    %662 = vmatprep.subr.mxu0 0.0
    %663 = vmatpush2.msra.mxu0 0.0
    %664 = vmatprep.subr.mxu0 0.0
    %665 = vmatpush2.msra.mxu0 0.0
    %666 = vmatprep.subr.mxu0 0.0
    %667 = vmatpush2.msra.mxu0 0.0
    %668 = vmatprep.subr.mxu0 0.0
    %669 = vmatpush2.msra.mxu0 0.0
    %670 = vmatprep.subr.mxu0 0.0
    %671 = vmatpush2.msra.mxu0 0.0
    %672 = vmatprep.subr.mxu0 0.0
    %673 = vmatpush2.msra.mxu0 0.0
    %674 = vmatprep.subr.mxu0 0.0
    %675 = vmatpush2.msra.mxu0 0.0
    %676 = vmatprep.subr.mxu0 0.0
    %677 = vmatpush2.msra.mxu0 0.0
    %678 = vmatprep.subr.mxu0 0.0
    %679 = vmatpush2.msra.mxu0 0.0
    %680 = vmatprep.subr.mxu0 0.0
    %681 = vmatpush2.msra.mxu0 0.0
    %682 = vmatprep.subr.mxu0 0.0
    %683 = vmatpush2.msra.mxu0 0.0
    %684 = vmatprep.subr.mxu0 0.0
    %685 = vmatpush2.msra.mxu0 0.0
    %686 = vmatprep.subr.mxu0 0.0
    %687 = vmatpush2.msra.mxu0 0.0
    %688 = vmatprep.mubr.f32.mxu0 0.0
    %689 = vmatmul.mubr.f32.gmra.mxu0 %v198
    %v690 = vpop.f32.mrf.mxu0
    %v691 = vadd.f32 %v375, %v690
    %v692 = vpop.f32.mrf.mxu0
    %v693 = vadd.f32 %v379, %v692
    %694 = vmatprep.mubr.f32.mxu0 0.0
    %695 = vmatmul.mubr.f32.gmra.mxu0 %v199
    %v696 = vpop.f32.mrf.mxu0
    %v697 = vadd.f32 %v375, %v696
    %v698 = vpop.f32.mrf.mxu0
    %v699 = vadd.f32 %v379, %v698
    %700 = vdwg.mxu0
    %701 = vmatprep.subr.mxu0 0.0
    %702 = vmatpush1.msra.mxu0 %v343
    %703 = vmatprep.subr.mxu0 0.0
    %704 = vmatpush1.msra.mxu0 %v334
    %705 = vmatprep.subr.mxu0 0.0
    %706 = vmatpush1.msra.mxu0 %v325
    %707 = vmatprep.subr.mxu0 0.0
    %708 = vmatpush1.msra.mxu0 %v316
    %709 = vmatprep.subr.mxu0 0.0
    %710 = vmatpush1.msra.mxu0 %v307
    %711 = vmatprep.subr.mxu0 0.0
    %712 = vmatpush1.msra.mxu0 %v298
    %713 = vmatprep.subr.mxu0 0.0
    %714 = vmatpush1.msra.mxu0 %v289
    %715 = vmatprep.subr.mxu0 0.0
    %716 = vmatpush1.msra.mxu0 %v280
    %717 = vmatprep.subr.mxu0 0.0
    %718 = vmatpush1.msra.mxu0 %v271
    %719 = vmatprep.subr.mxu0 0.0
    %720 = vmatpush1.msra.mxu0 %v262
    %721 = vmatprep.subr.mxu0 0.0
    %722 = vmatpush1.msra.mxu0 %v253
    %723 = vmatprep.subr.mxu0 0.0
    %724 = vmatpush1.msra.mxu0 %v244
    %725 = vmatprep.subr.mxu0 0.0
    %726 = vmatpush1.msra.mxu0 %v235
    %727 = vmatprep.subr.mxu0 0.0
    %728 = vmatpush1.msra.mxu0 %v226
    %729 = vmatprep.subr.mxu0 0.0
    %730 = vmatpush1.msra.mxu0 %v217
    %731 = vmatprep.subr.mxu0 0.0
    %732 = vmatpush1.msra.mxu0 %v208
    %733 = vmatprep.subr.mxu0 0.0
    %734 = vmatpush2.msra.mxu0 0.0
    %735 = vmatprep.subr.mxu0 0.0
    %736 = vmatpush2.msra.mxu0 0.0
    %737 = vmatprep.subr.mxu0 0.0
    %738 = vmatpush2.msra.mxu0 0.0
    %739 = vmatprep.subr.mxu0 0.0
    %740 = vmatpush2.msra.mxu0 0.0
    %741 = vmatprep.subr.mxu0 0.0
    %742 = vmatpush2.msra.mxu0 0.0
    %743 = vmatprep.subr.mxu0 0.0
    %744 = vmatpush2.msra.mxu0 0.0
    %745 = vmatprep.subr.mxu0 0.0
    %746 = vmatpush2.msra.mxu0 0.0
    %747 = vmatprep.subr.mxu0 0.0
    %748 = vmatpush2.msra.mxu0 0.0
    %749 = vmatprep.subr.mxu0 0.0
    %750 = vmatpush2.msra.mxu0 0.0
    %751 = vmatprep.subr.mxu0 0.0
    %752 = vmatpush2.msra.mxu0 0.0
    %753 = vmatprep.subr.mxu0 0.0
    %754 = vmatpush2.msra.mxu0 0.0
    %755 = vmatprep.subr.mxu0 0.0
    %756 = vmatpush2.msra.mxu0 0.0
    %757 = vmatprep.subr.mxu0 0.0
    %758 = vmatpush2.msra.mxu0 0.0
    %759 = vmatprep.subr.mxu0 0.0
    %760 = vmatpush2.msra.mxu0 0.0
    %761 = vmatprep.subr.mxu0 0.0
    %762 = vmatpush2.msra.mxu0 0.0
    %763 = vmatprep.subr.mxu0 0.0
    %764 = vmatpush2.msra.mxu0 0.0
    %765 = vmatprep.mubr.f32.mxu0 0.0
    %766 = vmatmul.mubr.f32.gmra.mxu0 %v198
    %v767 = vpop.f32.mrf.mxu0
    %v768 = vadd.f32 %v383, %v767
    %v769 = vpop.f32.mrf.mxu0
    %770 = vmatprep.mubr.f32.mxu0 0.0
    %771 = vmatmul.mubr.f32.gmra.mxu0 %v199
    %v772 = vpop.f32.mrf.mxu0
    %v773 = vadd.f32 %v383, %v772
    %v774 = vpop.f32.mrf.mxu0
    %775 = vdwg.mxu0
    %776 = vst [vmem:[#allocation2] sm:$0xff] %v460
    %777 = vst [vmem:[#allocation2 + $0x8] sm:$0xff] %v462
    %778 = vst [vmem:[#allocation2 + $0x10] sm:$0xff] %v537
    %779 = vst [vmem:[#allocation2 + $0x18] sm:$0xff] %v466
    %780 = vst [vmem:[#allocation2 + $0x20] sm:$0xff] %v468
    %781 = vst [vmem:[#allocation2 + $0x28] sm:$0xff] %v543
    %782 = vst [vmem:[#allocation3] sm:$0xff] %v539
    %783 = vst [vmem:[#allocation3 + $0x8] sm:$0xff] %v614
    %784 = vst [vmem:[#allocation3 + $0x10] sm:$0xff] %v616
    %785 = vst [vmem:[#allocation3 + $0x18] sm:$0xff] %v545
    %786 = vst [vmem:[#allocation3 + $0x20] sm:$0xff] %v620
    %787 = vst [vmem:[#allocation3 + $0x28] sm:$0xff] %v622
    %788 = vst [vmem:[#allocation4] sm:$0xff] %v691
    %789 = vst [vmem:[#allocation4 + $0x8] sm:$0xff] %v693
    %790 = vst [vmem:[#allocation4 + $0x10] sm:$0xff] %v768
    %791 = vst [vmem:[#allocation4 + $0x18] sm:$0xff] %v697
    %792 = vst [vmem:[#allocation4 + $0x20] sm:$0xff] %v699
    %793 = vst [vmem:[#allocation4 + $0x28] sm:$0xff] %v773
    %v794 = vlaneseq
    %v795 = vshrl.u32 %v794, 7
    %v796 = vld [vmem:[#allocation2] sm:$0xff]
    %v797 = vld [vmem:[#allocation2 + $0x8] sm:$0xff]
    %v798 = vld [vmem:[#allocation2 + $0x10] sm:$0xff]
    %v799 = vld [vmem:[#allocation13] sm:$0xff]
    %v800 = vld [vmem:[#allocation13 + $0x8] sm:$0xff]
    %v801 = vld [vmem:[#allocation13 + $0x10] sm:$0xff]
    %v802 = vld [vmem:[#allocation13 + $0x18] sm:$0xff]
    %v803 = vld [vmem:[#allocation13 + $0x20] sm:$0xff]
    %v804 = vld [vmem:[#allocation13 + $0x28] sm:$0xff]
    %v805 = vld [vmem:[#allocation13 + $0x30] sm:$0xff]
    %v806 = vld [vmem:[#allocation13 + $0x38] sm:$0xff]
    %v807 = vld [vmem:[#allocation13 + $0x40] sm:$0xff]
    %v808 = vld [vmem:[#allocation13 + $0x48] sm:$0xff]
    %v809 = vld [vmem:[#allocation13 + $0x50] sm:$0xff]
    %v810 = vld [vmem:[#allocation13 + $0x58] sm:$0xff]
    %v811 = vld [vmem:[#allocation13 + $0x60] sm:$0xff]
    %v812 = vld [vmem:[#allocation13 + $0x68] sm:$0xff]
    %v813 = vld [vmem:[#allocation13 + $0x70] sm:$0xff]
    %v814 = vld [vmem:[#allocation13 + $0x78] sm:$0xff]
    %v815 = vld [vmem:[#allocation13 + $0x80] sm:$0xff]
    %v816 = vld [vmem:[#allocation13 + $0x88] sm:$0xff]
    %v817 = vld [vmem:[#allocation13 + $0x90] sm:$0xff]
    %v818 = vld [vmem:[#allocation13 + $0x98] sm:$0xff]
    %v819 = vld [vmem:[#allocation13 + $0xa0] sm:$0xff]
    %v820 = vld [vmem:[#allocation13 + $0xa8] sm:$0xff]
    %v821 = vld [vmem:[#allocation13 + $0xb0] sm:$0xff]
    %v822 = vld [vmem:[#allocation13 + $0xb8] sm:$0xff]
    %v823 = vld [vmem:[#allocation13 + $0xc0] sm:$0xff]
    %v824 = vld [vmem:[#allocation13 + $0xc8] sm:$0xff]
    %v825 = vld [vmem:[#allocation13 + $0xd0] sm:$0xff]
    %v826 = vld [vmem:[#allocation13 + $0xd8] sm:$0xff]
    %v827 = vld [vmem:[#allocation13 + $0xe0] sm:$0xff]
    %v828 = vld [vmem:[#allocation13 + $0xe8] sm:$0xff]
    %v829 = vld [vmem:[#allocation13 + $0xf0] sm:$0xff]
    %v830 = vld [vmem:[#allocation13 + $0xf8] sm:$0xff]
    %v831 = vld [vmem:[#allocation13 + $0x100] sm:$0xff]
    %v832 = vld [vmem:[#allocation13 + $0x108] sm:$0xff]
    %v833 = vld [vmem:[#allocation13 + $0x110] sm:$0xff]
    %v834 = vld [vmem:[#allocation13 + $0x118] sm:$0xff]
    %v835 = vld [vmem:[#allocation13 + $0x120] sm:$0xff]
    %v836 = vld [vmem:[#allocation13 + $0x128] sm:$0xff]
    %v837 = vld [vmem:[#allocation13 + $0x130] sm:$0xff]
    %v838 = vld [vmem:[#allocation13 + $0x138] sm:$0xff]
    %v839 = vld [vmem:[#allocation13 + $0x140] sm:$0xff]
    %v840 = vld [vmem:[#allocation13 + $0x148] sm:$0xff]
    %v841 = vld [vmem:[#allocation13 + $0x150] sm:$0xff]
    %v842 = vld [vmem:[#allocation13 + $0x158] sm:$0xff]
    %v843 = vld [vmem:[#allocation13 + $0x160] sm:$0xff]
    %v844 = vld [vmem:[#allocation13 + $0x168] sm:$0xff]
    %v845 = vld [vmem:[#allocation13 + $0x170] sm:$0xff]
    %v846 = vld [vmem:[#allocation13 + $0x178] sm:$0xff]
    %v847 = vld [vmem:[%s5] sm:$0x7]
    %v849 = vlaneseq
    %v850 = vshrl.u32 %v849, 7
    %v851 = vsub.s32 0, %v850
    %v852 = vrot.slane %v847, %v851
    %v853 = vlaneseq
    %v854 = vshrl.u32 %v853, 7
    %v855 = vsub.s32 1, %v854
    %v856 = vrot.slane %v847, %v855
    %v857 = vlaneseq
    %v858 = vshrl.u32 %v857, 7
    %v859 = vsub.s32 2, %v858
    %v860 = vrot.slane %v847, %v859
    %864 = vmatprep.subr.mxu0 %v845
    %865 = vmatpush1.msra.mxu0 %v844
    %866 = vmatprep.subr.mxu0 %v842
    %867 = vmatpush1.msra.mxu0 %v841
    %868 = vmatprep.subr.mxu0 %v839
    %869 = vmatpush1.msra.mxu0 %v838
    %870 = vmatprep.subr.mxu0 %v836
    %871 = vmatpush1.msra.mxu0 %v835
    %872 = vmatprep.subr.mxu0 %v833
    %873 = vmatpush1.msra.mxu0 %v832
    %874 = vmatprep.subr.mxu0 %v830
    %875 = vmatpush1.msra.mxu0 %v829
    %876 = vmatprep.subr.mxu0 %v827
    %877 = vmatpush1.msra.mxu0 %v826
    %878 = vmatprep.subr.mxu0 %v824
    %879 = vmatpush1.msra.mxu0 %v823
    %880 = vmatprep.subr.mxu0 %v821
    %881 = vmatpush1.msra.mxu0 %v820
    %882 = vmatprep.subr.mxu0 %v818
    %883 = vmatpush1.msra.mxu0 %v817
    %884 = vmatprep.subr.mxu0 %v815
    %885 = vmatpush1.msra.mxu0 %v814
    %886 = vmatprep.subr.mxu0 %v812
    %887 = vmatpush1.msra.mxu0 %v811
    %888 = vmatprep.subr.mxu0 %v809
    %889 = vmatpush1.msra.mxu0 %v808
    %890 = vmatprep.subr.mxu0 %v806
    %891 = vmatpush1.msra.mxu0 %v805
    %892 = vmatprep.subr.mxu0 %v803
    %893 = vmatpush1.msra.mxu0 %v802
    %894 = vmatprep.subr.mxu0 %v800
    %895 = vmatpush1.msra.mxu0 %v799
    %896 = vmatprep.subr.mxu0 0.0
    %897 = vmatpush2.msra.mxu0 0.0
    %898 = vmatprep.subr.mxu0 0.0
    %899 = vmatpush2.msra.mxu0 0.0
    %900 = vmatprep.subr.mxu0 0.0
    %901 = vmatpush2.msra.mxu0 0.0
    %902 = vmatprep.subr.mxu0 0.0
    %903 = vmatpush2.msra.mxu0 0.0
    %904 = vmatprep.subr.mxu0 0.0
    %905 = vmatpush2.msra.mxu0 0.0
    %906 = vmatprep.subr.mxu0 0.0
    %907 = vmatpush2.msra.mxu0 0.0
    %908 = vmatprep.subr.mxu0 0.0
    %909 = vmatpush2.msra.mxu0 0.0
    %910 = vmatprep.subr.mxu0 0.0
    %911 = vmatpush2.msra.mxu0 0.0
    %912 = vmatprep.subr.mxu0 0.0
    %913 = vmatpush2.msra.mxu0 0.0
    %914 = vmatprep.subr.mxu0 0.0
    %915 = vmatpush2.msra.mxu0 0.0
    %916 = vmatprep.subr.mxu0 0.0
    %917 = vmatpush2.msra.mxu0 0.0
    %918 = vmatprep.subr.mxu0 0.0
    %919 = vmatpush2.msra.mxu0 0.0
    %920 = vmatprep.subr.mxu0 0.0
    %921 = vmatpush2.msra.mxu0 0.0
    %922 = vmatprep.subr.mxu0 0.0
    %923 = vmatpush2.msra.mxu0 0.0
    %924 = vmatprep.subr.mxu0 0.0
    %925 = vmatpush2.msra.mxu0 0.0
    %926 = vmatprep.subr.mxu0 0.0
    %927 = vmatpush2.msra.mxu0 0.0
    %928 = vmatprep.mubr.f32.mxu0 0.0
    %929 = vmatmul.mubr.f32.gmra.mxu0 0.0
    %v930 = vpop.f32.mrf.mxu0
    %v931 = vadd.f32 %v852, %v930
    %v932 = vpop.f32.mrf.mxu0
    %v933 = vadd.f32 %v856, %v932
    %934 = vdwg.mxu0
    %935 = vmatprep.subr.mxu0 0.0
    %936 = vmatpush1.msra.mxu0 %v846
    %937 = vmatprep.subr.mxu0 0.0
    %938 = vmatpush1.msra.mxu0 %v843
    %939 = vmatprep.subr.mxu0 0.0
    %940 = vmatpush1.msra.mxu0 %v840
    %941 = vmatprep.subr.mxu0 0.0
    %942 = vmatpush1.msra.mxu0 %v837
    %943 = vmatprep.subr.mxu0 0.0
    %944 = vmatpush1.msra.mxu0 %v834
    %945 = vmatprep.subr.mxu0 0.0
    %946 = vmatpush1.msra.mxu0 %v831
    %947 = vmatprep.subr.mxu0 0.0
    %948 = vmatpush1.msra.mxu0 %v828
    %949 = vmatprep.subr.mxu0 0.0
    %950 = vmatpush1.msra.mxu0 %v825
    %951 = vmatprep.subr.mxu0 0.0
    %952 = vmatpush1.msra.mxu0 %v822
    %953 = vmatprep.subr.mxu0 0.0
    %954 = vmatpush1.msra.mxu0 %v819
    %955 = vmatprep.subr.mxu0 0.0
    %956 = vmatpush1.msra.mxu0 %v816
    %957 = vmatprep.subr.mxu0 0.0
    %958 = vmatpush1.msra.mxu0 %v813
    %959 = vmatprep.subr.mxu0 0.0
    %960 = vmatpush1.msra.mxu0 %v810
    %961 = vmatprep.subr.mxu0 0.0
    %962 = vmatpush1.msra.mxu0 %v807
    %963 = vmatprep.subr.mxu0 0.0
    %964 = vmatpush1.msra.mxu0 %v804
    %965 = vmatprep.subr.mxu0 0.0
    %966 = vmatpush1.msra.mxu0 %v801
    %967 = vmatprep.subr.mxu0 0.0
    %968 = vmatpush2.msra.mxu0 0.0
    %969 = vmatprep.subr.mxu0 0.0
    %970 = vmatpush2.msra.mxu0 0.0
    %971 = vmatprep.subr.mxu0 0.0
    %972 = vmatpush2.msra.mxu0 0.0
    %973 = vmatprep.subr.mxu0 0.0
    %974 = vmatpush2.msra.mxu0 0.0
    %975 = vmatprep.subr.mxu0 0.0
    %976 = vmatpush2.msra.mxu0 0.0
    %977 = vmatprep.subr.mxu0 0.0
    %978 = vmatpush2.msra.mxu0 0.0
    %979 = vmatprep.subr.mxu0 0.0
    %980 = vmatpush2.msra.mxu0 0.0
    %981 = vmatprep.subr.mxu0 0.0
    %982 = vmatpush2.msra.mxu0 0.0
    %983 = vmatprep.subr.mxu0 0.0
    %984 = vmatpush2.msra.mxu0 0.0
    %985 = vmatprep.subr.mxu0 0.0
    %986 = vmatpush2.msra.mxu0 0.0
    %987 = vmatprep.subr.mxu0 0.0
    %988 = vmatpush2.msra.mxu0 0.0
    %989 = vmatprep.subr.mxu0 0.0
    %990 = vmatpush2.msra.mxu0 0.0
    %991 = vmatprep.subr.mxu0 0.0
    %992 = vmatpush2.msra.mxu0 0.0
    %993 = vmatprep.subr.mxu0 0.0
    %994 = vmatpush2.msra.mxu0 0.0
    %995 = vmatprep.subr.mxu0 0.0
    %996 = vmatpush2.msra.mxu0 0.0
    %997 = vmatprep.subr.mxu0 0.0
    %998 = vmatpush2.msra.mxu0 0.0
    %999 = vmatprep.mubr.f32.mxu0 0.0
    %1000 = vmatmul.mubr.f32.gmra.mxu0 0.0
    %v1001 = vpop.f32.mrf.mxu0
    %v1002 = vadd.f32 %v860, %v1001
    %v1003 = vpop.f32.mrf.mxu0
    %1004 = vdwg.mxu0
    %v1005 = vadd.f32 %v796, %v931
    %v1006 = vxor.u32 %v1005, 2147483648
    %v1007 = vmul.f32 %v1006, 1.442695
    %v1008 = vpow.pop %v1007
    %v1009 = vadd.f32 %v1008, 1.0
    %v1010 = vrcp.pop %v1009
    %v1011 = vmul.f32 1.0, %v1010
    %v1012 = vadd.f32 %v797, %v933
    %v1013 = vxor.u32 %v1012, 2147483648
    %v1014 = vmul.f32 %v1013, 1.442695
    %v1015 = vpow.pop %v1014
    %v1016 = vadd.f32 %v1015, 1.0
    %v1017 = vrcp.pop %v1016
    %v1018 = vmul.f32 1.0, %v1017
    %v1019 = vmul.f32 %v1011, %v1002
    %v1020 = vadd.f32 %v798, %v1019
    %v1021 = vtanh.pop %v1020
    %v1022 = vsub.f32 1.0, %v1018
    %v1023 = vmul.f32 %v1022, %v1021
    %v1024 = vmul.f32 %v1018, 0.0
    %v1025 = vadd.f32 %v1023, %v1024
    %s1026 = scalar_lea.vmem [#allocation3], 24
    %v1027 = vld [vmem:[%s1026] sm:$0xff]
    %v1028 = vld [vmem:[%s1026 + $0x8] sm:$0xff]
    %v1029 = vld [vmem:[%s1026 + $0x10] sm:$0xff]
    %v1030 = vld [vmem:[#allocation15] sm:$0xff]
    %v1031 = vld [vmem:[#allocation15 + $0x8] sm:$0xff]
    %v1032 = vld [vmem:[#allocation15 + $0x10] sm:$0xff]
    %v1033 = vld [vmem:[#allocation15 + $0x18] sm:$0xff]
    %v1034 = vld [vmem:[#allocation15 + $0x20] sm:$0xff]
    %v1035 = vld [vmem:[#allocation15 + $0x28] sm:$0xff]
    %v1036 = vld [vmem:[#allocation15 + $0x30] sm:$0xff]
    %v1037 = vld [vmem:[#allocation15 + $0x38] sm:$0xff]
    %v1038 = vld [vmem:[#allocation15 + $0x40] sm:$0xff]
    %v1039 = vld [vmem:[#allocation15 + $0x48] sm:$0xff]
    %v1040 = vld [vmem:[#allocation15 + $0x50] sm:$0xff]
    %v1041 = vld [vmem:[#allocation15 + $0x58] sm:$0xff]
    %v1042 = vld [vmem:[#allocation15 + $0x60] sm:$0xff]
    %v1043 = vld [vmem:[#allocation15 + $0x68] sm:$0xff]
    %v1044 = vld [vmem:[#allocation15 + $0x70] sm:$0xff]
    %v1045 = vld [vmem:[#allocation15 + $0x78] sm:$0xff]
    %v1046 = vld [vmem:[#allocation15 + $0x80] sm:$0xff]
    %v1047 = vld [vmem:[#allocation15 + $0x88] sm:$0xff]
    %v1048 = vld [vmem:[#allocation15 + $0x90] sm:$0xff]
    %v1049 = vld [vmem:[#allocation15 + $0x98] sm:$0xff]
    %v1050 = vld [vmem:[#allocation15 + $0xa0] sm:$0xff]
    %v1051 = vld [vmem:[#allocation15 + $0xa8] sm:$0xff]
    %v1052 = vld [vmem:[#allocation15 + $0xb0] sm:$0xff]
    %v1053 = vld [vmem:[#allocation15 + $0xb8] sm:$0xff]
    %v1054 = vld [vmem:[#allocation15 + $0xc0] sm:$0xff]
    %v1055 = vld [vmem:[#allocation15 + $0xc8] sm:$0xff]
    %v1056 = vld [vmem:[#allocation15 + $0xd0] sm:$0xff]
    %v1057 = vld [vmem:[#allocation15 + $0xd8] sm:$0xff]
    %v1058 = vld [vmem:[#allocation15 + $0xe0] sm:$0xff]
    %v1059 = vld [vmem:[#allocation15 + $0xe8] sm:$0xff]
    %v1060 = vld [vmem:[#allocation15 + $0xf0] sm:$0xff]
    %v1061 = vld [vmem:[#allocation15 + $0xf8] sm:$0xff]
    %v1062 = vld [vmem:[#allocation15 + $0x100] sm:$0xff]
    %v1063 = vld [vmem:[#allocation15 + $0x108] sm:$0xff]
    %v1064 = vld [vmem:[#allocation15 + $0x110] sm:$0xff]
    %v1065 = vld [vmem:[#allocation15 + $0x118] sm:$0xff]
    %v1066 = vld [vmem:[#allocation15 + $0x120] sm:$0xff]
    %v1067 = vld [vmem:[#allocation15 + $0x128] sm:$0xff]
    %v1068 = vld [vmem:[#allocation15 + $0x130] sm:$0xff]
    %v1069 = vld [vmem:[#allocation15 + $0x138] sm:$0xff]
    %v1070 = vld [vmem:[#allocation15 + $0x140] sm:$0xff]
    %v1071 = vld [vmem:[#allocation15 + $0x148] sm:$0xff]
    %v1072 = vld [vmem:[#allocation15 + $0x150] sm:$0xff]
    %v1073 = vld [vmem:[#allocation15 + $0x158] sm:$0xff]
    %v1074 = vld [vmem:[#allocation15 + $0x160] sm:$0xff]
    %v1075 = vld [vmem:[#allocation15 + $0x168] sm:$0xff]
    %v1076 = vld [vmem:[#allocation15 + $0x170] sm:$0xff]
    %v1077 = vld [vmem:[#allocation15 + $0x178] sm:$0xff]
    %v1078 = vld [vmem:[%s7] sm:$0x7]
    %v1080 = vlaneseq
    %v1081 = vshrl.u32 %v1080, 7
    %v1082 = vsub.s32 0, %v1081
    %v1083 = vrot.slane %v1078, %v1082
    %v1084 = vlaneseq
    %v1085 = vshrl.u32 %v1084, 7
    %v1086 = vsub.s32 1, %v1085
    %v1087 = vrot.slane %v1078, %v1086
    %v1088 = vlaneseq
    %v1089 = vshrl.u32 %v1088, 7
    %v1090 = vsub.s32 2, %v1089
    %v1091 = vrot.slane %v1078, %v1090
    %1095 = vmatprep.subr.mxu0 %v1076
    %1096 = vmatpush1.msra.mxu0 %v1075
    %1097 = vmatprep.subr.mxu0 %v1073
    %1098 = vmatpush1.msra.mxu0 %v1072
    %1099 = vmatprep.subr.mxu0 %v1070
    %1100 = vmatpush1.msra.mxu0 %v1069
    %1101 = vmatprep.subr.mxu0 %v1067
    %1102 = vmatpush1.msra.mxu0 %v1066
    %1103 = vmatprep.subr.mxu0 %v1064
    %1104 = vmatpush1.msra.mxu0 %v1063
    %1105 = vmatprep.subr.mxu0 %v1061
    %1106 = vmatpush1.msra.mxu0 %v1060
    %1107 = vmatprep.subr.mxu0 %v1058
    %1108 = vmatpush1.msra.mxu0 %v1057
    %1109 = vmatprep.subr.mxu0 %v1055
    %1110 = vmatpush1.msra.mxu0 %v1054
    %1111 = vmatprep.subr.mxu0 %v1052
    %1112 = vmatpush1.msra.mxu0 %v1051
    %1113 = vmatprep.subr.mxu0 %v1049
    %1114 = vmatpush1.msra.mxu0 %v1048
    %1115 = vmatprep.subr.mxu0 %v1046
    %1116 = vmatpush1.msra.mxu0 %v1045
    %1117 = vmatprep.subr.mxu0 %v1043
    %1118 = vmatpush1.msra.mxu0 %v1042
    %1119 = vmatprep.subr.mxu0 %v1040
    %1120 = vmatpush1.msra.mxu0 %v1039
    %1121 = vmatprep.subr.mxu0 %v1037
    %1122 = vmatpush1.msra.mxu0 %v1036
    %1123 = vmatprep.subr.mxu0 %v1034
    %1124 = vmatpush1.msra.mxu0 %v1033
    %1125 = vmatprep.subr.mxu0 %v1031
    %1126 = vmatpush1.msra.mxu0 %v1030
    %1127 = vmatprep.subr.mxu0 0.0
    %1128 = vmatpush2.msra.mxu0 0.0
    %1129 = vmatprep.subr.mxu0 0.0
    %1130 = vmatpush2.msra.mxu0 0.0
    %1131 = vmatprep.subr.mxu0 0.0
    %1132 = vmatpush2.msra.mxu0 0.0
    %1133 = vmatprep.subr.mxu0 0.0
    %1134 = vmatpush2.msra.mxu0 0.0
    %1135 = vmatprep.subr.mxu0 0.0
    %1136 = vmatpush2.msra.mxu0 0.0
    %1137 = vmatprep.subr.mxu0 0.0
    %1138 = vmatpush2.msra.mxu0 0.0
    %1139 = vmatprep.subr.mxu0 0.0
    %1140 = vmatpush2.msra.mxu0 0.0
    %1141 = vmatprep.subr.mxu0 0.0
    %1142 = vmatpush2.msra.mxu0 0.0
    %1143 = vmatprep.subr.mxu0 0.0
    %1144 = vmatpush2.msra.mxu0 0.0
    %1145 = vmatprep.subr.mxu0 0.0
    %1146 = vmatpush2.msra.mxu0 0.0
    %1147 = vmatprep.subr.mxu0 0.0
    %1148 = vmatpush2.msra.mxu0 0.0
    %1149 = vmatprep.subr.mxu0 0.0
    %1150 = vmatpush2.msra.mxu0 0.0
    %1151 = vmatprep.subr.mxu0 0.0
    %1152 = vmatpush2.msra.mxu0 0.0
    %1153 = vmatprep.subr.mxu0 0.0
    %1154 = vmatpush2.msra.mxu0 0.0
    %1155 = vmatprep.subr.mxu0 0.0
    %1156 = vmatpush2.msra.mxu0 0.0
    %1157 = vmatprep.subr.mxu0 0.0
    %1158 = vmatpush2.msra.mxu0 0.0
    %1159 = vmatprep.mubr.f32.mxu0 0.0
    %1160 = vmatmul.mubr.f32.gmra.mxu0 0.0
    %v1161 = vpop.f32.mrf.mxu0
    %v1162 = vadd.f32 %v1083, %v1161
    %v1163 = vpop.f32.mrf.mxu0
    %v1164 = vadd.f32 %v1087, %v1163
    %1165 = vdwg.mxu0
    %1166 = vmatprep.subr.mxu0 0.0
    %1167 = vmatpush1.msra.mxu0 %v1077
    %1168 = vmatprep.subr.mxu0 0.0
    %1169 = vmatpush1.msra.mxu0 %v1074
    %1170 = vmatprep.subr.mxu0 0.0
    %1171 = vmatpush1.msra.mxu0 %v1071
    %1172 = vmatprep.subr.mxu0 0.0
    %1173 = vmatpush1.msra.mxu0 %v1068
    %1174 = vmatprep.subr.mxu0 0.0
    %1175 = vmatpush1.msra.mxu0 %v1065
    %1176 = vmatprep.subr.mxu0 0.0
    %1177 = vmatpush1.msra.mxu0 %v1062
    %1178 = vmatprep.subr.mxu0 0.0
    %1179 = vmatpush1.msra.mxu0 %v1059
    %1180 = vmatprep.subr.mxu0 0.0
    %1181 = vmatpush1.msra.mxu0 %v1056
    %1182 = vmatprep.subr.mxu0 0.0
    %1183 = vmatpush1.msra.mxu0 %v1053
    %1184 = vmatprep.subr.mxu0 0.0
    %1185 = vmatpush1.msra.mxu0 %v1050
    %1186 = vmatprep.subr.mxu0 0.0
    %1187 = vmatpush1.msra.mxu0 %v1047
    %1188 = vmatprep.subr.mxu0 0.0
    %1189 = vmatpush1.msra.mxu0 %v1044
    %1190 = vmatprep.subr.mxu0 0.0
    %1191 = vmatpush1.msra.mxu0 %v1041
    %1192 = vmatprep.subr.mxu0 0.0
    %1193 = vmatpush1.msra.mxu0 %v1038
    %1194 = vmatprep.subr.mxu0 0.0
    %1195 = vmatpush1.msra.mxu0 %v1035
    %1196 = vmatprep.subr.mxu0 0.0
    %1197 = vmatpush1.msra.mxu0 %v1032
    %1198 = vmatprep.subr.mxu0 0.0
    %1199 = vmatpush2.msra.mxu0 0.0
    %1200 = vmatprep.subr.mxu0 0.0
    %1201 = vmatpush2.msra.mxu0 0.0
    %1202 = vmatprep.subr.mxu0 0.0
    %1203 = vmatpush2.msra.mxu0 0.0
    %1204 = vmatprep.subr.mxu0 0.0
    %1205 = vmatpush2.msra.mxu0 0.0
    %1206 = vmatprep.subr.mxu0 0.0
    %1207 = vmatpush2.msra.mxu0 0.0
    %1208 = vmatprep.subr.mxu0 0.0
    %1209 = vmatpush2.msra.mxu0 0.0
    %1210 = vmatprep.subr.mxu0 0.0
    %1211 = vmatpush2.msra.mxu0 0.0
    %1212 = vmatprep.subr.mxu0 0.0
    %1213 = vmatpush2.msra.mxu0 0.0
    %1214 = vmatprep.subr.mxu0 0.0
    %1215 = vmatpush2.msra.mxu0 0.0
    %1216 = vmatprep.subr.mxu0 0.0
    %1217 = vmatpush2.msra.mxu0 0.0
    %1218 = vmatprep.subr.mxu0 0.0
    %1219 = vmatpush2.msra.mxu0 0.0
    %1220 = vmatprep.subr.mxu0 0.0
    %1221 = vmatpush2.msra.mxu0 0.0
    %1222 = vmatprep.subr.mxu0 0.0
    %1223 = vmatpush2.msra.mxu0 0.0
    %1224 = vmatprep.subr.mxu0 0.0
    %1225 = vmatpush2.msra.mxu0 0.0
    %1226 = vmatprep.subr.mxu0 0.0
    %1227 = vmatpush2.msra.mxu0 0.0
    %1228 = vmatprep.subr.mxu0 0.0
    %1229 = vmatpush2.msra.mxu0 0.0
    %1230 = vmatprep.mubr.f32.mxu0 0.0
    %1231 = vmatmul.mubr.f32.gmra.mxu0 0.0
    %v1232 = vpop.f32.mrf.mxu0
    %v1233 = vadd.f32 %v1091, %v1232
    %v1234 = vpop.f32.mrf.mxu0
    %1235 = vdwg.mxu0
    %v1236 = vadd.f32 %v1027, %v1162
    %v1237 = vxor.u32 %v1236, 2147483648
    %v1238 = vmul.f32 %v1237, 1.442695
    %v1239 = vpow.pop %v1238
    %v1240 = vadd.f32 %v1239, 1.0
    %v1241 = vrcp.pop %v1240
    %v1242 = vmul.f32 1.0, %v1241
    %v1243 = vadd.f32 %v1028, %v1164
    %v1244 = vxor.u32 %v1243, 2147483648
    %v1245 = vmul.f32 %v1244, 1.442695
    %v1246 = vpow.pop %v1245
    %v1247 = vadd.f32 %v1246, 1.0
    %v1248 = vrcp.pop %v1247
    %v1249 = vmul.f32 1.0, %v1248
    %v1250 = vmul.f32 %v1242, %v1233
    %v1251 = vadd.f32 %v1029, %v1250
    %v1252 = vtanh.pop %v1251
    %v1253 = vsub.f32 1.0, %v1249
    %v1254 = vmul.f32 %v1253, %v1252
    %v1255 = vmul.f32 %v1249, 0.0
    %v1256 = vadd.f32 %v1254, %v1255
    %s1257 = sld [smem:[#allocation9]]
    %s1258 = ssub.s32 %s1257, 1
    %v1259 = vstv %s1258
    %vm1260 = vcmp.eq.s32.totalorder %v795, %v1259
    %v1261 = vsel %vm1260, 1, 0
    %v1262 = vcvt.s32.f32 %v1261
    %s1263 = sld [smem:[#allocation9 + $0x1]]
    %s1264 = ssub.s32 %s1263, 1
    %v1265 = vstv %s1264
    %vm1266 = vcmp.eq.s32.totalorder %v795, %v1265
    %v1267 = vsel %vm1266, 1, 0
    %v1268 = vcvt.s32.f32 %v1267
    %v1269 = vmul.f32 %v1025, %v1262
    %v1270 = vrot.slane %v1269, 4
    %v1271 = vadd.f32 %v1269, %v1270
    %v1272 = vrot.slane %v1271, 2
    %v1273 = vadd.f32 %v1271, %v1272
    %v1274 = vrot.slane %v1273, 1
    %v1275 = vadd.f32 %v1273, %v1274
    %1276 = vst [vmem:[#allocation5] sm:$0x1] %v1275
    %v1277 = vmul.f32 %v1256, %v1268
    %v1278 = vrot.slane %v1277, 4
    %v1279 = vadd.f32 %v1277, %v1278
    %v1280 = vrot.slane %v1279, 2
    %v1281 = vadd.f32 %v1279, %v1280
    %v1282 = vrot.slane %v1281, 1
    %v1283 = vadd.f32 %v1281, %v1282
    %1284 = vst [vmem:[#allocation6 + $0x1] sm:$0x1] %v1283
    %s1285 = scalar_lea.vmem [#allocation2], 24
    %v1286 = vld [vmem:[%s1285] sm:$0xff]
    %v1287 = vld [vmem:[%s1285 + $0x8] sm:$0xff]
    %v1288 = vld [vmem:[%s1285 + $0x10] sm:$0xff]
    %v1289 = vld [vmem:[#allocation13] sm:$0xff]
    %v1290 = vld [vmem:[#allocation13 + $0x8] sm:$0xff]
    %v1291 = vld [vmem:[#allocation13 + $0x10] sm:$0xff]
    %v1292 = vld [vmem:[#allocation13 + $0x18] sm:$0xff]
    %v1293 = vld [vmem:[#allocation13 + $0x20] sm:$0xff]
    %v1294 = vld [vmem:[#allocation13 + $0x28] sm:$0xff]
    %v1295 = vld [vmem:[#allocation13 + $0x30] sm:$0xff]
    %v1296 = vld [vmem:[#allocation13 + $0x38] sm:$0xff]
    %v1297 = vld [vmem:[#allocation13 + $0x40] sm:$0xff]
    %v1298 = vld [vmem:[#allocation13 + $0x48] sm:$0xff]
    %v1299 = vld [vmem:[#allocation13 + $0x50] sm:$0xff]
    %v1300 = vld [vmem:[#allocation13 + $0x58] sm:$0xff]
    %v1301 = vld [vmem:[#allocation13 + $0x60] sm:$0xff]
    %v1302 = vld [vmem:[#allocation13 + $0x68] sm:$0xff]
    %v1303 = vld [vmem:[#allocation13 + $0x70] sm:$0xff]
    %v1304 = vld [vmem:[#allocation13 + $0x78] sm:$0xff]
    %v1305 = vld [vmem:[#allocation13 + $0x80] sm:$0xff]
    %v1306 = vld [vmem:[#allocation13 + $0x88] sm:$0xff]
    %v1307 = vld [vmem:[#allocation13 + $0x90] sm:$0xff]
    %v1308 = vld [vmem:[#allocation13 + $0x98] sm:$0xff]
    %v1309 = vld [vmem:[#allocation13 + $0xa0] sm:$0xff]
    %v1310 = vld [vmem:[#allocation13 + $0xa8] sm:$0xff]
    %v1311 = vld [vmem:[#allocation13 + $0xb0] sm:$0xff]
    %v1312 = vld [vmem:[#allocation13 + $0xb8] sm:$0xff]
    %v1313 = vld [vmem:[#allocation13 + $0xc0] sm:$0xff]
    %v1314 = vld [vmem:[#allocation13 + $0xc8] sm:$0xff]
    %v1315 = vld [vmem:[#allocation13 + $0xd0] sm:$0xff]
    %v1316 = vld [vmem:[#allocation13 + $0xd8] sm:$0xff]
    %v1317 = vld [vmem:[#allocation13 + $0xe0] sm:$0xff]
    %v1318 = vld [vmem:[#allocation13 + $0xe8] sm:$0xff]
    %v1319 = vld [vmem:[#allocation13 + $0xf0] sm:$0xff]
    %v1320 = vld [vmem:[#allocation13 + $0xf8] sm:$0xff]
    %v1321 = vld [vmem:[#allocation13 + $0x100] sm:$0xff]
    %v1322 = vld [vmem:[#allocation13 + $0x108] sm:$0xff]
    %v1323 = vld [vmem:[#allocation13 + $0x110] sm:$0xff]
    %v1324 = vld [vmem:[#allocation13 + $0x118] sm:$0xff]
    %v1325 = vld [vmem:[#allocation13 + $0x120] sm:$0xff]
    %v1326 = vld [vmem:[#allocation13 + $0x128] sm:$0xff]
    %v1327 = vld [vmem:[#allocation13 + $0x130] sm:$0xff]
    %v1328 = vld [vmem:[#allocation13 + $0x138] sm:$0xff]
    %v1329 = vld [vmem:[#allocation13 + $0x140] sm:$0xff]
    %v1330 = vld [vmem:[#allocation13 + $0x148] sm:$0xff]
    %v1331 = vld [vmem:[#allocation13 + $0x150] sm:$0xff]
    %v1332 = vld [vmem:[#allocation13 + $0x158] sm:$0xff]
    %v1333 = vld [vmem:[#allocation13 + $0x160] sm:$0xff]
    %v1334 = vld [vmem:[#allocation13 + $0x168] sm:$0xff]
    %v1335 = vld [vmem:[#allocation13 + $0x170] sm:$0xff]
    %v1336 = vld [vmem:[#allocation13 + $0x178] sm:$0xff]
    %v1337 = vld [vmem:[%s5] sm:$0x7]
    %v1339 = vlaneseq
    %v1340 = vshrl.u32 %v1339, 7
    %v1341 = vsub.s32 0, %v1340
    %v1342 = vrot.slane %v1337, %v1341
    %v1343 = vlaneseq
    %v1344 = vshrl.u32 %v1343, 7
    %v1345 = vsub.s32 1, %v1344
    %v1346 = vrot.slane %v1337, %v1345
    %v1347 = vlaneseq
    %v1348 = vshrl.u32 %v1347, 7
    %v1349 = vsub.s32 2, %v1348
    %v1350 = vrot.slane %v1337, %v1349
    %1354 = vmatprep.subr.mxu0 %v1335
    %1355 = vmatpush1.msra.mxu0 %v1334
    %1356 = vmatprep.subr.mxu0 %v1332
    %1357 = vmatpush1.msra.mxu0 %v1331
    %1358 = vmatprep.subr.mxu0 %v1329
    %1359 = vmatpush1.msra.mxu0 %v1328
    %1360 = vmatprep.subr.mxu0 %v1326
    %1361 = vmatpush1.msra.mxu0 %v1325
    %1362 = vmatprep.subr.mxu0 %v1323
    %1363 = vmatpush1.msra.mxu0 %v1322
    %1364 = vmatprep.subr.mxu0 %v1320
    %1365 = vmatpush1.msra.mxu0 %v1319
    %1366 = vmatprep.subr.mxu0 %v1317
    %1367 = vmatpush1.msra.mxu0 %v1316
    %1368 = vmatprep.subr.mxu0 %v1314
    %1369 = vmatpush1.msra.mxu0 %v1313
    %1370 = vmatprep.subr.mxu0 %v1311
    %1371 = vmatpush1.msra.mxu0 %v1310
    %1372 = vmatprep.subr.mxu0 %v1308
    %1373 = vmatpush1.msra.mxu0 %v1307
    %1374 = vmatprep.subr.mxu0 %v1305
    %1375 = vmatpush1.msra.mxu0 %v1304
    %1376 = vmatprep.subr.mxu0 %v1302
    %1377 = vmatpush1.msra.mxu0 %v1301
    %1378 = vmatprep.subr.mxu0 %v1299
    %1379 = vmatpush1.msra.mxu0 %v1298
    %1380 = vmatprep.subr.mxu0 %v1296
    %1381 = vmatpush1.msra.mxu0 %v1295
    %1382 = vmatprep.subr.mxu0 %v1293
    %1383 = vmatpush1.msra.mxu0 %v1292
    %1384 = vmatprep.subr.mxu0 %v1290
    %1385 = vmatpush1.msra.mxu0 %v1289
    %1386 = vmatprep.subr.mxu0 0.0
    %1387 = vmatpush2.msra.mxu0 0.0
    %1388 = vmatprep.subr.mxu0 0.0
    %1389 = vmatpush2.msra.mxu0 0.0
    %1390 = vmatprep.subr.mxu0 0.0
    %1391 = vmatpush2.msra.mxu0 0.0
    %1392 = vmatprep.subr.mxu0 0.0
    %1393 = vmatpush2.msra.mxu0 0.0
    %1394 = vmatprep.subr.mxu0 0.0
    %1395 = vmatpush2.msra.mxu0 0.0
    %1396 = vmatprep.subr.mxu0 0.0
    %1397 = vmatpush2.msra.mxu0 0.0
    %1398 = vmatprep.subr.mxu0 0.0
    %1399 = vmatpush2.msra.mxu0 0.0
    %1400 = vmatprep.subr.mxu0 0.0
    %1401 = vmatpush2.msra.mxu0 0.0
    %1402 = vmatprep.subr.mxu0 0.0
    %1403 = vmatpush2.msra.mxu0 0.0
    %1404 = vmatprep.subr.mxu0 0.0
    %1405 = vmatpush2.msra.mxu0 0.0
    %1406 = vmatprep.subr.mxu0 0.0
    %1407 = vmatpush2.msra.mxu0 0.0
    %1408 = vmatprep.subr.mxu0 0.0
    %1409 = vmatpush2.msra.mxu0 0.0
    %1410 = vmatprep.subr.mxu0 0.0
    %1411 = vmatpush2.msra.mxu0 0.0
    %1412 = vmatprep.subr.mxu0 0.0
    %1413 = vmatpush2.msra.mxu0 0.0
    %1414 = vmatprep.subr.mxu0 0.0
    %1415 = vmatpush2.msra.mxu0 0.0
    %1416 = vmatprep.subr.mxu0 0.0
    %1417 = vmatpush2.msra.mxu0 0.0
    %1418 = vmatprep.mubr.f32.mxu0 0.0
    %1419 = vmatmul.mubr.f32.gmra.mxu0 %v1025
    %v1420 = vpop.f32.mrf.mxu0
    %v1421 = vadd.f32 %v1342, %v1420
    %v1422 = vpop.f32.mrf.mxu0
    %v1423 = vadd.f32 %v1346, %v1422
    %1424 = vdwg.mxu0
    %1425 = vmatprep.subr.mxu0 0.0
    %1426 = vmatpush1.msra.mxu0 %v1336
    %1427 = vmatprep.subr.mxu0 0.0
    %1428 = vmatpush1.msra.mxu0 %v1333
    %1429 = vmatprep.subr.mxu0 0.0
    %1430 = vmatpush1.msra.mxu0 %v1330
    %1431 = vmatprep.subr.mxu0 0.0
    %1432 = vmatpush1.msra.mxu0 %v1327
    %1433 = vmatprep.subr.mxu0 0.0
    %1434 = vmatpush1.msra.mxu0 %v1324
    %1435 = vmatprep.subr.mxu0 0.0
    %1436 = vmatpush1.msra.mxu0 %v1321
    %1437 = vmatprep.subr.mxu0 0.0
    %1438 = vmatpush1.msra.mxu0 %v1318
    %1439 = vmatprep.subr.mxu0 0.0
    %1440 = vmatpush1.msra.mxu0 %v1315
    %1441 = vmatprep.subr.mxu0 0.0
    %1442 = vmatpush1.msra.mxu0 %v1312
    %1443 = vmatprep.subr.mxu0 0.0
    %1444 = vmatpush1.msra.mxu0 %v1309
    %1445 = vmatprep.subr.mxu0 0.0
    %1446 = vmatpush1.msra.mxu0 %v1306
    %1447 = vmatprep.subr.mxu0 0.0
    %1448 = vmatpush1.msra.mxu0 %v1303
    %1449 = vmatprep.subr.mxu0 0.0
    %1450 = vmatpush1.msra.mxu0 %v1300
    %1451 = vmatprep.subr.mxu0 0.0
    %1452 = vmatpush1.msra.mxu0 %v1297
    %1453 = vmatprep.subr.mxu0 0.0
    %1454 = vmatpush1.msra.mxu0 %v1294
    %1455 = vmatprep.subr.mxu0 0.0
    %1456 = vmatpush1.msra.mxu0 %v1291
    %1457 = vmatprep.subr.mxu0 0.0
    %1458 = vmatpush2.msra.mxu0 0.0
    %1459 = vmatprep.subr.mxu0 0.0
    %1460 = vmatpush2.msra.mxu0 0.0
    %1461 = vmatprep.subr.mxu0 0.0
    %1462 = vmatpush2.msra.mxu0 0.0
    %1463 = vmatprep.subr.mxu0 0.0
    %1464 = vmatpush2.msra.mxu0 0.0
    %1465 = vmatprep.subr.mxu0 0.0
    %1466 = vmatpush2.msra.mxu0 0.0
    %1467 = vmatprep.subr.mxu0 0.0
    %1468 = vmatpush2.msra.mxu0 0.0
    %1469 = vmatprep.subr.mxu0 0.0
    %1470 = vmatpush2.msra.mxu0 0.0
    %1471 = vmatprep.subr.mxu0 0.0
    %1472 = vmatpush2.msra.mxu0 0.0
    %1473 = vmatprep.subr.mxu0 0.0
    %1474 = vmatpush2.msra.mxu0 0.0
    %1475 = vmatprep.subr.mxu0 0.0
    %1476 = vmatpush2.msra.mxu0 0.0
    %1477 = vmatprep.subr.mxu0 0.0
    %1478 = vmatpush2.msra.mxu0 0.0
    %1479 = vmatprep.subr.mxu0 0.0
    %1480 = vmatpush2.msra.mxu0 0.0
    %1481 = vmatprep.subr.mxu0 0.0
    %1482 = vmatpush2.msra.mxu0 0.0
    %1483 = vmatprep.subr.mxu0 0.0
    %1484 = vmatpush2.msra.mxu0 0.0
    %1485 = vmatprep.subr.mxu0 0.0
    %1486 = vmatpush2.msra.mxu0 0.0
    %1487 = vmatprep.subr.mxu0 0.0
    %1488 = vmatpush2.msra.mxu0 0.0
    %1489 = vmatprep.mubr.f32.mxu0 0.0
    %1490 = vmatmul.mubr.f32.gmra.mxu0 %v1025
    %v1491 = vpop.f32.mrf.mxu0
    %v1492 = vadd.f32 %v1350, %v1491
    %v1493 = vpop.f32.mrf.mxu0
    %1494 = vdwg.mxu0
    %v1495 = vadd.f32 %v1286, %v1421
    %v1496 = vxor.u32 %v1495, 2147483648
    %v1497 = vmul.f32 %v1496, 1.442695
    %v1498 = vpow.pop %v1497
    %v1499 = vadd.f32 %v1498, 1.0
    %v1500 = vrcp.pop %v1499
    %v1501 = vmul.f32 1.0, %v1500
    %v1502 = vadd.f32 %v1287, %v1423
    %v1503 = vxor.u32 %v1502, 2147483648
    %v1504 = vmul.f32 %v1503, 1.442695
    %v1505 = vpow.pop %v1504
    %v1506 = vadd.f32 %v1505, 1.0
    %v1507 = vrcp.pop %v1506
    %v1508 = vmul.f32 1.0, %v1507
    %v1509 = vmul.f32 %v1501, %v1492
    %v1510 = vadd.f32 %v1288, %v1509
    %v1511 = vtanh.pop %v1510
    %v1512 = vsub.f32 1.0, %v1508
    %v1513 = vmul.f32 %v1512, %v1511
    %v1514 = vmul.f32 %v1508, %v1025
    %v1515 = vadd.f32 %v1513, %v1514
    %v1516 = vld [vmem:[#allocation3] sm:$0xff]
    %v1517 = vld [vmem:[#allocation3 + $0x8] sm:$0xff]
    %v1518 = vld [vmem:[#allocation3 + $0x10] sm:$0xff]
    %v1519 = vld [vmem:[#allocation15] sm:$0xff]
    %v1520 = vld [vmem:[#allocation15 + $0x8] sm:$0xff]
    %v1521 = vld [vmem:[#allocation15 + $0x10] sm:$0xff]
    %v1522 = vld [vmem:[#allocation15 + $0x18] sm:$0xff]
    %v1523 = vld [vmem:[#allocation15 + $0x20] sm:$0xff]
    %v1524 = vld [vmem:[#allocation15 + $0x28] sm:$0xff]
    %v1525 = vld [vmem:[#allocation15 + $0x30] sm:$0xff]
    %v1526 = vld [vmem:[#allocation15 + $0x38] sm:$0xff]
    %v1527 = vld [vmem:[#allocation15 + $0x40] sm:$0xff]
    %v1528 = vld [vmem:[#allocation15 + $0x48] sm:$0xff]
    %v1529 = vld [vmem:[#allocation15 + $0x50] sm:$0xff]
    %v1530 = vld [vmem:[#allocation15 + $0x58] sm:$0xff]
    %v1531 = vld [vmem:[#allocation15 + $0x60] sm:$0xff]
    %v1532 = vld [vmem:[#allocation15 + $0x68] sm:$0xff]
    %v1533 = vld [vmem:[#allocation15 + $0x70] sm:$0xff]
    %v1534 = vld [vmem:[#allocation15 + $0x78] sm:$0xff]
    %v1535 = vld [vmem:[#allocation15 + $0x80] sm:$0xff]
    %v1536 = vld [vmem:[#allocation15 + $0x88] sm:$0xff]
    %v1537 = vld [vmem:[#allocation15 + $0x90] sm:$0xff]
    %v1538 = vld [vmem:[#allocation15 + $0x98] sm:$0xff]
    %v1539 = vld [vmem:[#allocation15 + $0xa0] sm:$0xff]
    %v1540 = vld [vmem:[#allocation15 + $0xa8] sm:$0xff]
    %v1541 = vld [vmem:[#allocation15 + $0xb0] sm:$0xff]
    %v1542 = vld [vmem:[#allocation15 + $0xb8] sm:$0xff]
    %v1543 = vld [vmem:[#allocation15 + $0xc0] sm:$0xff]
    %v1544 = vld [vmem:[#allocation15 + $0xc8] sm:$0xff]
    %v1545 = vld [vmem:[#allocation15 + $0xd0] sm:$0xff]
    %v1546 = vld [vmem:[#allocation15 + $0xd8] sm:$0xff]
    %v1547 = vld [vmem:[#allocation15 + $0xe0] sm:$0xff]
    %v1548 = vld [vmem:[#allocation15 + $0xe8] sm:$0xff]
    %v1549 = vld [vmem:[#allocation15 + $0xf0] sm:$0xff]
    %v1550 = vld [vmem:[#allocation15 + $0xf8] sm:$0xff]
    %v1551 = vld [vmem:[#allocation15 + $0x100] sm:$0xff]
    %v1552 = vld [vmem:[#allocation15 + $0x108] sm:$0xff]
    %v1553 = vld [vmem:[#allocation15 + $0x110] sm:$0xff]
    %v1554 = vld [vmem:[#allocation15 + $0x118] sm:$0xff]
    %v1555 = vld [vmem:[#allocation15 + $0x120] sm:$0xff]
    %v1556 = vld [vmem:[#allocation15 + $0x128] sm:$0xff]
    %v1557 = vld [vmem:[#allocation15 + $0x130] sm:$0xff]
    %v1558 = vld [vmem:[#allocation15 + $0x138] sm:$0xff]
    %v1559 = vld [vmem:[#allocation15 + $0x140] sm:$0xff]
    %v1560 = vld [vmem:[#allocation15 + $0x148] sm:$0xff]
    %v1561 = vld [vmem:[#allocation15 + $0x150] sm:$0xff]
    %v1562 = vld [vmem:[#allocation15 + $0x158] sm:$0xff]
    %v1563 = vld [vmem:[#allocation15 + $0x160] sm:$0xff]
    %v1564 = vld [vmem:[#allocation15 + $0x168] sm:$0xff]
    %v1565 = vld [vmem:[#allocation15 + $0x170] sm:$0xff]
    %v1566 = vld [vmem:[#allocation15 + $0x178] sm:$0xff]
    %v1567 = vld [vmem:[%s7] sm:$0x7]
    %v1569 = vlaneseq
    %v1570 = vshrl.u32 %v1569, 7
    %v1571 = vsub.s32 0, %v1570
    %v1572 = vrot.slane %v1567, %v1571
    %v1573 = vlaneseq
    %v1574 = vshrl.u32 %v1573, 7
    %v1575 = vsub.s32 1, %v1574
    %v1576 = vrot.slane %v1567, %v1575
    %v1577 = vlaneseq
    %v1578 = vshrl.u32 %v1577, 7
    %v1579 = vsub.s32 2, %v1578
    %v1580 = vrot.slane %v1567, %v1579
    %1584 = vmatprep.subr.mxu0 %v1565
    %1585 = vmatpush1.msra.mxu0 %v1564
    %1586 = vmatprep.subr.mxu0 %v1562
    %1587 = vmatpush1.msra.mxu0 %v1561
    %1588 = vmatprep.subr.mxu0 %v1559
    %1589 = vmatpush1.msra.mxu0 %v1558
    %1590 = vmatprep.subr.mxu0 %v1556
    %1591 = vmatpush1.msra.mxu0 %v1555
    %1592 = vmatprep.subr.mxu0 %v1553
    %1593 = vmatpush1.msra.mxu0 %v1552
    %1594 = vmatprep.subr.mxu0 %v1550
    %1595 = vmatpush1.msra.mxu0 %v1549
    %1596 = vmatprep.subr.mxu0 %v1547
    %1597 = vmatpush1.msra.mxu0 %v1546
    %1598 = vmatprep.subr.mxu0 %v1544
    %1599 = vmatpush1.msra.mxu0 %v1543
    %1600 = vmatprep.subr.mxu0 %v1541
    %1601 = vmatpush1.msra.mxu0 %v1540
    %1602 = vmatprep.subr.mxu0 %v1538
    %1603 = vmatpush1.msra.mxu0 %v1537
    %1604 = vmatprep.subr.mxu0 %v1535
    %1605 = vmatpush1.msra.mxu0 %v1534
    %1606 = vmatprep.subr.mxu0 %v1532
    %1607 = vmatpush1.msra.mxu0 %v1531
    %1608 = vmatprep.subr.mxu0 %v1529
    %1609 = vmatpush1.msra.mxu0 %v1528
    %1610 = vmatprep.subr.mxu0 %v1526
    %1611 = vmatpush1.msra.mxu0 %v1525
    %1612 = vmatprep.subr.mxu0 %v1523
    %1613 = vmatpush1.msra.mxu0 %v1522
    %1614 = vmatprep.subr.mxu0 %v1520
    %1615 = vmatpush1.msra.mxu0 %v1519
    %1616 = vmatprep.subr.mxu0 0.0
    %1617 = vmatpush2.msra.mxu0 0.0
    %1618 = vmatprep.subr.mxu0 0.0
    %1619 = vmatpush2.msra.mxu0 0.0
    %1620 = vmatprep.subr.mxu0 0.0
    %1621 = vmatpush2.msra.mxu0 0.0
    %1622 = vmatprep.subr.mxu0 0.0
    %1623 = vmatpush2.msra.mxu0 0.0
    %1624 = vmatprep.subr.mxu0 0.0
    %1625 = vmatpush2.msra.mxu0 0.0
    %1626 = vmatprep.subr.mxu0 0.0
    %1627 = vmatpush2.msra.mxu0 0.0
    %1628 = vmatprep.subr.mxu0 0.0
    %1629 = vmatpush2.msra.mxu0 0.0
    %1630 = vmatprep.subr.mxu0 0.0
    %1631 = vmatpush2.msra.mxu0 0.0
    %1632 = vmatprep.subr.mxu0 0.0
    %1633 = vmatpush2.msra.mxu0 0.0
    %1634 = vmatprep.subr.mxu0 0.0
    %1635 = vmatpush2.msra.mxu0 0.0
    %1636 = vmatprep.subr.mxu0 0.0
    %1637 = vmatpush2.msra.mxu0 0.0
    %1638 = vmatprep.subr.mxu0 0.0
    %1639 = vmatpush2.msra.mxu0 0.0
    %1640 = vmatprep.subr.mxu0 0.0
    %1641 = vmatpush2.msra.mxu0 0.0
    %1642 = vmatprep.subr.mxu0 0.0
    %1643 = vmatpush2.msra.mxu0 0.0
    %1644 = vmatprep.subr.mxu0 0.0
    %1645 = vmatpush2.msra.mxu0 0.0
    %1646 = vmatprep.subr.mxu0 0.0
    %1647 = vmatpush2.msra.mxu0 0.0
    %1648 = vmatprep.mubr.f32.mxu0 0.0
    %1649 = vmatmul.mubr.f32.gmra.mxu0 %v1256
    %v1650 = vpop.f32.mrf.mxu0
    %v1651 = vadd.f32 %v1572, %v1650
    %v1652 = vpop.f32.mrf.mxu0
    %v1653 = vadd.f32 %v1576, %v1652
    %1654 = vdwg.mxu0
    %1655 = vmatprep.subr.mxu0 0.0
    %1656 = vmatpush1.msra.mxu0 %v1566
    %1657 = vmatprep.subr.mxu0 0.0
    %1658 = vmatpush1.msra.mxu0 %v1563
    %1659 = vmatprep.subr.mxu0 0.0
    %1660 = vmatpush1.msra.mxu0 %v1560
    %1661 = vmatprep.subr.mxu0 0.0
    %1662 = vmatpush1.msra.mxu0 %v1557
    %1663 = vmatprep.subr.mxu0 0.0
    %1664 = vmatpush1.msra.mxu0 %v1554
    %1665 = vmatprep.subr.mxu0 0.0
    %1666 = vmatpush1.msra.mxu0 %v1551
    %1667 = vmatprep.subr.mxu0 0.0
    %1668 = vmatpush1.msra.mxu0 %v1548
    %1669 = vmatprep.subr.mxu0 0.0
    %1670 = vmatpush1.msra.mxu0 %v1545
    %1671 = vmatprep.subr.mxu0 0.0
    %1672 = vmatpush1.msra.mxu0 %v1542
    %1673 = vmatprep.subr.mxu0 0.0
    %1674 = vmatpush1.msra.mxu0 %v1539
    %1675 = vmatprep.subr.mxu0 0.0
    %1676 = vmatpush1.msra.mxu0 %v1536
    %1677 = vmatprep.subr.mxu0 0.0
    %1678 = vmatpush1.msra.mxu0 %v1533
    %1679 = vmatprep.subr.mxu0 0.0
    %1680 = vmatpush1.msra.mxu0 %v1530
    %1681 = vmatprep.subr.mxu0 0.0
    %1682 = vmatpush1.msra.mxu0 %v1527
    %1683 = vmatprep.subr.mxu0 0.0
    %1684 = vmatpush1.msra.mxu0 %v1524
    %1685 = vmatprep.subr.mxu0 0.0
    %1686 = vmatpush1.msra.mxu0 %v1521
    %1687 = vmatprep.subr.mxu0 0.0
    %1688 = vmatpush2.msra.mxu0 0.0
    %1689 = vmatprep.subr.mxu0 0.0
    %1690 = vmatpush2.msra.mxu0 0.0
    %1691 = vmatprep.subr.mxu0 0.0
    %1692 = vmatpush2.msra.mxu0 0.0
    %1693 = vmatprep.subr.mxu0 0.0
    %1694 = vmatpush2.msra.mxu0 0.0
    %1695 = vmatprep.subr.mxu0 0.0
    %1696 = vmatpush2.msra.mxu0 0.0
    %1697 = vmatprep.subr.mxu0 0.0
    %1698 = vmatpush2.msra.mxu0 0.0
    %1699 = vmatprep.subr.mxu0 0.0
    %1700 = vmatpush2.msra.mxu0 0.0
    %1701 = vmatprep.subr.mxu0 0.0
    %1702 = vmatpush2.msra.mxu0 0.0
    %1703 = vmatprep.subr.mxu0 0.0
    %1704 = vmatpush2.msra.mxu0 0.0
    %1705 = vmatprep.subr.mxu0 0.0
    %1706 = vmatpush2.msra.mxu0 0.0
    %1707 = vmatprep.subr.mxu0 0.0
    %1708 = vmatpush2.msra.mxu0 0.0
    %1709 = vmatprep.subr.mxu0 0.0
    %1710 = vmatpush2.msra.mxu0 0.0
    %1711 = vmatprep.subr.mxu0 0.0
    %1712 = vmatpush2.msra.mxu0 0.0
    %1713 = vmatprep.subr.mxu0 0.0
    %1714 = vmatpush2.msra.mxu0 0.0
    %1715 = vmatprep.subr.mxu0 0.0
    %1716 = vmatpush2.msra.mxu0 0.0
    %1717 = vmatprep.subr.mxu0 0.0
    %1718 = vmatpush2.msra.mxu0 0.0
    %1719 = vmatprep.mubr.f32.mxu0 0.0
    %1720 = vmatmul.mubr.f32.gmra.mxu0 %v1256
    %v1721 = vpop.f32.mrf.mxu0
    %v1722 = vadd.f32 %v1580, %v1721
    %v1723 = vpop.f32.mrf.mxu0
    %1724 = vdwg.mxu0
    %v1725 = vadd.f32 %v1516, %v1651
    %v1726 = vxor.u32 %v1725, 2147483648
    %v1727 = vmul.f32 %v1726, 1.442695
    %v1728 = vpow.pop %v1727
    %v1729 = vadd.f32 %v1728, 1.0
    %v1730 = vrcp.pop %v1729
    %v1731 = vmul.f32 1.0, %v1730
    %v1732 = vadd.f32 %v1517, %v1653
    %v1733 = vxor.u32 %v1732, 2147483648
    %v1734 = vmul.f32 %v1733, 1.442695
    %v1735 = vpow.pop %v1734
    %v1736 = vadd.f32 %v1735, 1.0
    %v1737 = vrcp.pop %v1736
    %v1738 = vmul.f32 1.0, %v1737
    %v1739 = vmul.f32 %v1731, %v1722
    %v1740 = vadd.f32 %v1518, %v1739
    %v1741 = vtanh.pop %v1740
    %v1742 = vsub.f32 1.0, %v1738
    %v1743 = vmul.f32 %v1742, %v1741
    %v1744 = vmul.f32 %v1738, %v1256
    %v1745 = vadd.f32 %v1743, %v1744
    %s1746 = sld [smem:[#allocation9 + $0x1]]
    %s1747 = ssub.s32 %s1746, 1
    %v1748 = vstv %s1747
    %vm1749 = vcmp.eq.s32.totalorder %v795, %v1748
    %v1750 = vsel %vm1749, 1, 0
    %v1751 = vcvt.s32.f32 %v1750
    %s1752 = sld [smem:[#allocation9]]
    %s1753 = ssub.s32 %s1752, 1
    %v1754 = vstv %s1753
    %vm1755 = vcmp.eq.s32.totalorder %v795, %v1754
    %v1756 = vsel %vm1755, 1, 0
    %v1757 = vcvt.s32.f32 %v1756
    %v1758 = vmul.f32 %v1515, %v1751
    %v1759 = vrot.slane %v1758, 4
    %v1760 = vadd.f32 %v1758, %v1759
    %v1761 = vrot.slane %v1760, 2
    %v1762 = vadd.f32 %v1760, %v1761
    %v1763 = vrot.slane %v1762, 1
    %v1764 = vadd.f32 %v1762, %v1763
    %1765 = vst [vmem:[#allocation5 + $0x1] sm:$0x1] %v1764
    %v1766 = vmul.f32 %v1745, %v1757
    %v1767 = vrot.slane %v1766, 4
    %v1768 = vadd.f32 %v1766, %v1767
    %v1769 = vrot.slane %v1768, 2
    %v1770 = vadd.f32 %v1768, %v1769
    %v1771 = vrot.slane %v1770, 1
    %v1772 = vadd.f32 %v1770, %v1771
    %1773 = vst [vmem:[#allocation6] sm:$0x1] %v1772
    %v1774 = vld [vmem:[#allocation5] sm:$0x3]
    %v1775 = vld [vmem:[#allocation16] sm:$0xff]
    %v1776 = vld [vmem:[#allocation16 + $0x8] sm:$0xff]
    %v1777 = vld [vmem:[#allocation16 + $0x10] sm:$0xff]
    %v1778 = vld [vmem:[#allocation16 + $0x18] sm:$0xff]
    %v1779 = vld [vmem:[#allocation16 + $0x20] sm:$0xff]
    %v1780 = vld [vmem:[#allocation16 + $0x28] sm:$0xff]
    %v1781 = vld [vmem:[#allocation16 + $0x30] sm:$0xff]
    %v1782 = vld [vmem:[#allocation16 + $0x38] sm:$0xff]
    %v1783 = vld [vmem:[#allocation16 + $0x40] sm:$0xff]
    %v1784 = vld [vmem:[#allocation16 + $0x48] sm:$0xff]
    %v1785 = vld [vmem:[#allocation16 + $0x50] sm:$0xff]
    %v1786 = vld [vmem:[#allocation16 + $0x58] sm:$0xff]
    %v1787 = vld [vmem:[#allocation16 + $0x60] sm:$0xff]
    %v1788 = vld [vmem:[#allocation16 + $0x68] sm:$0xff]
    %v1789 = vld [vmem:[#allocation16 + $0x70] sm:$0xff]
    %v1790 = vld [vmem:[#allocation16 + $0x78] sm:$0xff]
    %v1791 = vld [vmem:[#allocation6] sm:$0x3]
    %v1792 = vld [vmem:[#allocation18] sm:$0xff]
    %v1793 = vld [vmem:[#allocation18 + $0x8] sm:$0xff]
    %v1794 = vld [vmem:[#allocation18 + $0x10] sm:$0xff]
    %v1795 = vld [vmem:[#allocation18 + $0x18] sm:$0xff]
    %v1796 = vld [vmem:[#allocation18 + $0x20] sm:$0xff]
    %v1797 = vld [vmem:[#allocation18 + $0x28] sm:$0xff]
    %v1798 = vld [vmem:[#allocation18 + $0x30] sm:$0xff]
    %v1799 = vld [vmem:[#allocation18 + $0x38] sm:$0xff]
    %v1800 = vld [vmem:[#allocation18 + $0x40] sm:$0xff]
    %v1801 = vld [vmem:[#allocation18 + $0x48] sm:$0xff]
    %v1802 = vld [vmem:[#allocation18 + $0x50] sm:$0xff]
    %v1803 = vld [vmem:[#allocation18 + $0x58] sm:$0xff]
    %v1804 = vld [vmem:[#allocation18 + $0x60] sm:$0xff]
    %v1805 = vld [vmem:[#allocation18 + $0x68] sm:$0xff]
    %v1806 = vld [vmem:[#allocation18 + $0x70] sm:$0xff]
    %v1807 = vld [vmem:[#allocation18 + $0x78] sm:$0xff]
    %1808 = vmatprep.subr.mxu0 0.0
    %1809 = vmatpush1.msra.mxu0 %v1807
    %1810 = vmatprep.subr.mxu0 0.0
    %1811 = vmatpush1.msra.mxu0 %v1806
    %1812 = vmatprep.subr.mxu0 0.0
    %1813 = vmatpush1.msra.mxu0 %v1805
    %1814 = vmatprep.subr.mxu0 0.0
    %1815 = vmatpush1.msra.mxu0 %v1804
    %1816 = vmatprep.subr.mxu0 0.0
    %1817 = vmatpush1.msra.mxu0 %v1803
    %1818 = vmatprep.subr.mxu0 0.0
    %1819 = vmatpush1.msra.mxu0 %v1802
    %1820 = vmatprep.subr.mxu0 0.0
    %1821 = vmatpush1.msra.mxu0 %v1801
    %1822 = vmatprep.subr.mxu0 0.0
    %1823 = vmatpush1.msra.mxu0 %v1800
    %1824 = vmatprep.subr.mxu0 0.0
    %1825 = vmatpush1.msra.mxu0 %v1799
    %1826 = vmatprep.subr.mxu0 0.0
    %1827 = vmatpush1.msra.mxu0 %v1798
    %1828 = vmatprep.subr.mxu0 0.0
    %1829 = vmatpush1.msra.mxu0 %v1797
    %1830 = vmatprep.subr.mxu0 0.0
    %1831 = vmatpush1.msra.mxu0 %v1796
    %1832 = vmatprep.subr.mxu0 0.0
    %1833 = vmatpush1.msra.mxu0 %v1795
    %1834 = vmatprep.subr.mxu0 0.0
    %1835 = vmatpush1.msra.mxu0 %v1794
    %1836 = vmatprep.subr.mxu0 0.0
    %1837 = vmatpush1.msra.mxu0 %v1793
    %1838 = vmatprep.subr.mxu0 0.0
    %1839 = vmatpush1.msra.mxu0 %v1792
    %1840 = vmatprep.subr.mxu0 0.0
    %1841 = vmatpush2.msra.mxu0 0.0
    %1842 = vmatprep.subr.mxu0 0.0
    %1843 = vmatpush2.msra.mxu0 0.0
    %1844 = vmatprep.subr.mxu0 0.0
    %1845 = vmatpush2.msra.mxu0 0.0
    %1846 = vmatprep.subr.mxu0 0.0
    %1847 = vmatpush2.msra.mxu0 0.0
    %1848 = vmatprep.subr.mxu0 0.0
    %1849 = vmatpush2.msra.mxu0 0.0
    %1850 = vmatprep.subr.mxu0 0.0
    %1851 = vmatpush2.msra.mxu0 0.0
    %1852 = vmatprep.subr.mxu0 0.0
    %1853 = vmatpush2.msra.mxu0 0.0
    %1854 = vmatprep.subr.mxu0 0.0
    %1855 = vmatpush2.msra.mxu0 0.0
    %1856 = vmatprep.subr.mxu0 0.0
    %1857 = vmatpush2.msra.mxu0 0.0
    %1858 = vmatprep.subr.mxu0 0.0
    %1859 = vmatpush2.msra.mxu0 0.0
    %1860 = vmatprep.subr.mxu0 0.0
    %1861 = vmatpush2.msra.mxu0 0.0
    %1862 = vmatprep.subr.mxu0 0.0
    %1863 = vmatpush2.msra.mxu0 0.0
    %1864 = vmatprep.subr.mxu0 0.0
    %1865 = vmatpush2.msra.mxu0 0.0
    %1866 = vmatprep.subr.mxu0 0.0
    %1867 = vmatpush2.msra.mxu0 0.0
    %1868 = vmatprep.subr.mxu0 0.0
    %1869 = vmatpush2.msra.mxu0 0.0
    %1870 = vmatprep.subr.mxu0 0.0
    %1871 = vmatpush2.msra.mxu0 0.0
    %1872 = vmatprep.mubr.f32.mxu0 0.0
    %1873 = vmatmul.mubr.f32.gmra.mxu0 %v1791
    %v1874 = vpop.f32.mrf.mxu0
    %v1875 = vadd.f32 0.0, %v1874
    %v1876 = vpop.f32.mrf.mxu0
    %1877 = vdwg.mxu0
    %1878 = vmatprep.subr.mxu0 0.0
    %1879 = vmatpush1.msra.mxu0 %v1790
    %1880 = vmatprep.subr.mxu0 0.0
    %1881 = vmatpush1.msra.mxu0 %v1789
    %1882 = vmatprep.subr.mxu0 0.0
    %1883 = vmatpush1.msra.mxu0 %v1788
    %1884 = vmatprep.subr.mxu0 0.0
    %1885 = vmatpush1.msra.mxu0 %v1787
    %1886 = vmatprep.subr.mxu0 0.0
    %1887 = vmatpush1.msra.mxu0 %v1786
    %1888 = vmatprep.subr.mxu0 0.0
    %1889 = vmatpush1.msra.mxu0 %v1785
    %1890 = vmatprep.subr.mxu0 0.0
    %1891 = vmatpush1.msra.mxu0 %v1784
    %1892 = vmatprep.subr.mxu0 0.0
    %1893 = vmatpush1.msra.mxu0 %v1783
    %1894 = vmatprep.subr.mxu0 0.0
    %1895 = vmatpush1.msra.mxu0 %v1782
    %1896 = vmatprep.subr.mxu0 0.0
    %1897 = vmatpush1.msra.mxu0 %v1781
    %1898 = vmatprep.subr.mxu0 0.0
    %1899 = vmatpush1.msra.mxu0 %v1780
    %1900 = vmatprep.subr.mxu0 0.0
    %1901 = vmatpush1.msra.mxu0 %v1779
    %1902 = vmatprep.subr.mxu0 0.0
    %1903 = vmatpush1.msra.mxu0 %v1778
    %1904 = vmatprep.subr.mxu0 0.0
    %1905 = vmatpush1.msra.mxu0 %v1777
    %1906 = vmatprep.subr.mxu0 0.0
    %1907 = vmatpush1.msra.mxu0 %v1776
    %1908 = vmatprep.subr.mxu0 0.0
    %1909 = vmatpush1.msra.mxu0 %v1775
    %1910 = vmatprep.subr.mxu0 0.0
    %1911 = vmatpush2.msra.mxu0 0.0
    %1912 = vmatprep.subr.mxu0 0.0
    %1913 = vmatpush2.msra.mxu0 0.0
    %1914 = vmatprep.subr.mxu0 0.0
    %1915 = vmatpush2.msra.mxu0 0.0
    %1916 = vmatprep.subr.mxu0 0.0
    %1917 = vmatpush2.msra.mxu0 0.0
    %1918 = vmatprep.subr.mxu0 0.0
    %1919 = vmatpush2.msra.mxu0 0.0
    %1920 = vmatprep.subr.mxu0 0.0
    %1921 = vmatpush2.msra.mxu0 0.0
    %1922 = vmatprep.subr.mxu0 0.0
    %1923 = vmatpush2.msra.mxu0 0.0
    %1924 = vmatprep.subr.mxu0 0.0
    %1925 = vmatpush2.msra.mxu0 0.0
    %1926 = vmatprep.subr.mxu0 0.0
    %1927 = vmatpush2.msra.mxu0 0.0
    %1928 = vmatprep.subr.mxu0 0.0
    %1929 = vmatpush2.msra.mxu0 0.0
    %1930 = vmatprep.subr.mxu0 0.0
    %1931 = vmatpush2.msra.mxu0 0.0
    %1932 = vmatprep.subr.mxu0 0.0
    %1933 = vmatpush2.msra.mxu0 0.0
    %1934 = vmatprep.subr.mxu0 0.0
    %1935 = vmatpush2.msra.mxu0 0.0
    %1936 = vmatprep.subr.mxu0 0.0
    %1937 = vmatpush2.msra.mxu0 0.0
    %1938 = vmatprep.subr.mxu0 0.0
    %1939 = vmatpush2.msra.mxu0 0.0
    %1940 = vmatprep.subr.mxu0 0.0
    %1941 = vmatpush2.msra.mxu0 0.0
    %1942 = vmatprep.mubr.f32.mxu0 0.0
    %1943 = vmatmul.mubr.f32.gmra.mxu0 %v1774
    %v1944 = vpop.f32.mrf.mxu0
    %v1945 = vadd.f32 %v1875, %v1944
    %v1946 = vpop.f32.mrf.mxu0
    %1947 = vdwg.mxu0
    %v1948 = vld [vmem:[%s10] sm:$0x1]
    %v1950 = vlaneseq
    %v1951 = vshrl.u32 %v1950, 7
    %v1952 = vsub.s32 0, %v1951
    %v1953 = vrot.slane %v1948, %v1952
    %v1955 = vadd.f32 %v1945, %v1953
    %v1956 = vtanh.pop %v1955
    %v1957 = vld [vmem:[#allocation19] sm:$0xff]
    %v1958 = vld [vmem:[#allocation19 + $0x8] sm:$0xff]
    %v1959 = vld [vmem:[#allocation19 + $0x10] sm:$0xff]
    %v1960 = vld [vmem:[#allocation19 + $0x18] sm:$0xff]
    %v1961 = vld [vmem:[#allocation19 + $0x20] sm:$0xff]
    %v1962 = vld [vmem:[#allocation19 + $0x28] sm:$0xff]
    %v1963 = vld [vmem:[#allocation19 + $0x30] sm:$0xff]
    %v1964 = vld [vmem:[#allocation19 + $0x38] sm:$0xff]
    %v1965 = vld [vmem:[#allocation19 + $0x40] sm:$0xff]
    %v1966 = vld [vmem:[#allocation19 + $0x48] sm:$0xff]
    %v1967 = vld [vmem:[#allocation19 + $0x50] sm:$0xff]
    %v1968 = vld [vmem:[#allocation19 + $0x58] sm:$0xff]
    %v1969 = vld [vmem:[#allocation19 + $0x60] sm:$0xff]
    %v1970 = vld [vmem:[#allocation19 + $0x68] sm:$0xff]
    %v1971 = vld [vmem:[#allocation19 + $0x70] sm:$0xff]
    %v1972 = vld [vmem:[#allocation19 + $0x78] sm:$0xff]
    %v1973 = vld [vmem:[%s12] sm:$0x1]
    %v1975 = vlaneseq
    %v1976 = vshrl.u32 %v1975, 7
    %v1977 = vsub.s32 0, %v1976
    %v1978 = vrot.slane %v1973, %v1977
    %1980 = vmatprep.subr.mxu0 0.0
    %1981 = vmatpush1.msra.mxu0 %v1972
    %1982 = vmatprep.subr.mxu0 0.0
    %1983 = vmatpush1.msra.mxu0 %v1971
    %1984 = vmatprep.subr.mxu0 0.0
    %1985 = vmatpush1.msra.mxu0 %v1970
    %1986 = vmatprep.subr.mxu0 0.0
    %1987 = vmatpush1.msra.mxu0 %v1969
    %1988 = vmatprep.subr.mxu0 0.0
    %1989 = vmatpush1.msra.mxu0 %v1968
    %1990 = vmatprep.subr.mxu0 0.0
    %1991 = vmatpush1.msra.mxu0 %v1967
    %1992 = vmatprep.subr.mxu0 0.0
    %1993 = vmatpush1.msra.mxu0 %v1966
    %1994 = vmatprep.subr.mxu0 0.0
    %1995 = vmatpush1.msra.mxu0 %v1965
    %1996 = vmatprep.subr.mxu0 0.0
    %1997 = vmatpush1.msra.mxu0 %v1964
    %1998 = vmatprep.subr.mxu0 0.0
    %1999 = vmatpush1.msra.mxu0 %v1963
    %2000 = vmatprep.subr.mxu0 0.0
    %2001 = vmatpush1.msra.mxu0 %v1962
    %2002 = vmatprep.subr.mxu0 0.0
    %2003 = vmatpush1.msra.mxu0 %v1961
    %2004 = vmatprep.subr.mxu0 0.0
    %2005 = vmatpush1.msra.mxu0 %v1960
    %2006 = vmatprep.subr.mxu0 0.0
    %2007 = vmatpush1.msra.mxu0 %v1959
    %2008 = vmatprep.subr.mxu0 0.0
    %2009 = vmatpush1.msra.mxu0 %v1958
    %2010 = vmatprep.subr.mxu0 0.0
    %2011 = vmatpush1.msra.mxu0 %v1957
    %2012 = vmatprep.subr.mxu0 0.0
    %2013 = vmatpush2.msra.mxu0 0.0
    %2014 = vmatprep.subr.mxu0 0.0
    %2015 = vmatpush2.msra.mxu0 0.0
    %2016 = vmatprep.subr.mxu0 0.0
    %2017 = vmatpush2.msra.mxu0 0.0
    %2018 = vmatprep.subr.mxu0 0.0
    %2019 = vmatpush2.msra.mxu0 0.0
    %2020 = vmatprep.subr.mxu0 0.0
    %2021 = vmatpush2.msra.mxu0 0.0
    %2022 = vmatprep.subr.mxu0 0.0
    %2023 = vmatpush2.msra.mxu0 0.0
    %2024 = vmatprep.subr.mxu0 0.0
    %2025 = vmatpush2.msra.mxu0 0.0
    %2026 = vmatprep.subr.mxu0 0.0
    %2027 = vmatpush2.msra.mxu0 0.0
    %2028 = vmatprep.subr.mxu0 0.0
    %2029 = vmatpush2.msra.mxu0 0.0
    %2030 = vmatprep.subr.mxu0 0.0
    %2031 = vmatpush2.msra.mxu0 0.0
    %2032 = vmatprep.subr.mxu0 0.0
    %2033 = vmatpush2.msra.mxu0 0.0
    %2034 = vmatprep.subr.mxu0 0.0
    %2035 = vmatpush2.msra.mxu0 0.0
    %2036 = vmatprep.subr.mxu0 0.0
    %2037 = vmatpush2.msra.mxu0 0.0
    %2038 = vmatprep.subr.mxu0 0.0
    %2039 = vmatpush2.msra.mxu0 0.0
    %2040 = vmatprep.subr.mxu0 0.0
    %2041 = vmatpush2.msra.mxu0 0.0
    %2042 = vmatprep.subr.mxu0 0.0
    %2043 = vmatpush2.msra.mxu0 0.0
    %2044 = vmatprep.mubr.f32.mxu0 0.0
    %2045 = vmatmul.mubr.f32.gmra.mxu0 %v1956
    %v2046 = vpop.f32.mrf.mxu0
    %v2047 = vadd.f32 %v1978, %v2046
    %v2048 = vpop.f32.mrf.mxu0
    %2049 = vdwg.mxu0
    %v2050 = vld [vmem:[#allocation21] sm:$0xff]
    %v2051 = vld [vmem:[#allocation21 + $0x8] sm:$0xff]
    %v2052 = vld [vmem:[#allocation21 + $0x10] sm:$0xff]
    %v2053 = vld [vmem:[#allocation21 + $0x18] sm:$0xff]
    %v2054 = vld [vmem:[#allocation21 + $0x20] sm:$0xff]
    %v2055 = vld [vmem:[#allocation21 + $0x28] sm:$0xff]
    %v2056 = vld [vmem:[#allocation21 + $0x30] sm:$0xff]
    %v2057 = vld [vmem:[#allocation21 + $0x38] sm:$0xff]
    %v2058 = vld [vmem:[#allocation21 + $0x40] sm:$0xff]
    %v2059 = vld [vmem:[#allocation21 + $0x48] sm:$0xff]
    %v2060 = vld [vmem:[#allocation21 + $0x50] sm:$0xff]
    %v2061 = vld [vmem:[#allocation21 + $0x58] sm:$0xff]
    %v2062 = vld [vmem:[#allocation21 + $0x60] sm:$0xff]
    %v2063 = vld [vmem:[#allocation21 + $0x68] sm:$0xff]
    %v2064 = vld [vmem:[#allocation21 + $0x70] sm:$0xff]
    %v2065 = vld [vmem:[#allocation21 + $0x78] sm:$0xff]
    %v2066 = vld [vmem:[#allocation21 + $0x80] sm:$0xff]
    %v2067 = vld [vmem:[#allocation21 + $0x88] sm:$0xff]
    %v2068 = vld [vmem:[#allocation21 + $0x90] sm:$0xff]
    %v2069 = vld [vmem:[#allocation21 + $0x98] sm:$0xff]
    %v2070 = vld [vmem:[#allocation21 + $0xa0] sm:$0xff]
    %v2071 = vld [vmem:[#allocation21 + $0xa8] sm:$0xff]
    %v2072 = vld [vmem:[#allocation21 + $0xb0] sm:$0xff]
    %v2073 = vld [vmem:[#allocation21 + $0xb8] sm:$0xff]
    %v2074 = vld [vmem:[#allocation21 + $0xc0] sm:$0xff]
    %v2075 = vld [vmem:[#allocation21 + $0xc8] sm:$0xff]
    %v2076 = vld [vmem:[#allocation21 + $0xd0] sm:$0xff]
    %v2077 = vld [vmem:[#allocation21 + $0xd8] sm:$0xff]
    %v2078 = vld [vmem:[#allocation21 + $0xe0] sm:$0xff]
    %v2079 = vld [vmem:[#allocation21 + $0xe8] sm:$0xff]
    %v2080 = vld [vmem:[#allocation21 + $0xf0] sm:$0xff]
    %v2081 = vld [vmem:[#allocation21 + $0xf8] sm:$0xff]
    %v2082 = vld [vmem:[#allocation21 + $0x100] sm:$0xff]
    %v2083 = vld [vmem:[#allocation21 + $0x108] sm:$0xff]
    %v2084 = vld [vmem:[#allocation21 + $0x110] sm:$0xff]
    %v2085 = vld [vmem:[#allocation21 + $0x118] sm:$0xff]
    %v2086 = vld [vmem:[#allocation21 + $0x120] sm:$0xff]
    %v2087 = vld [vmem:[#allocation21 + $0x128] sm:$0xff]
    %v2088 = vld [vmem:[#allocation21 + $0x130] sm:$0xff]
    %v2089 = vld [vmem:[#allocation21 + $0x138] sm:$0xff]
    %v2090 = vld [vmem:[#allocation21 + $0x140] sm:$0xff]
    %v2091 = vld [vmem:[#allocation21 + $0x148] sm:$0xff]
    %v2092 = vld [vmem:[#allocation21 + $0x150] sm:$0xff]
    %v2093 = vld [vmem:[#allocation21 + $0x158] sm:$0xff]
    %v2094 = vld [vmem:[#allocation21 + $0x160] sm:$0xff]
    %v2095 = vld [vmem:[#allocation21 + $0x168] sm:$0xff]
    %v2096 = vld [vmem:[#allocation21 + $0x170] sm:$0xff]
    %v2097 = vld [vmem:[#allocation21 + $0x178] sm:$0xff]
    %2098 = vmatprep.subr.mxu0 %v2096
    %2099 = vmatpush1.msra.mxu0 %v2095
    %2100 = vmatprep.subr.mxu0 %v2093
    %2101 = vmatpush1.msra.mxu0 %v2092
    %2102 = vmatprep.subr.mxu0 %v2090
    %2103 = vmatpush1.msra.mxu0 %v2089
    %2104 = vmatprep.subr.mxu0 %v2087
    %2105 = vmatpush1.msra.mxu0 %v2086
    %2106 = vmatprep.subr.mxu0 %v2084
    %2107 = vmatpush1.msra.mxu0 %v2083
    %2108 = vmatprep.subr.mxu0 %v2081
    %2109 = vmatpush1.msra.mxu0 %v2080
    %2110 = vmatprep.subr.mxu0 %v2078
    %2111 = vmatpush1.msra.mxu0 %v2077
    %2112 = vmatprep.subr.mxu0 %v2075
    %2113 = vmatpush1.msra.mxu0 %v2074
    %2114 = vmatprep.subr.mxu0 %v2072
    %2115 = vmatpush1.msra.mxu0 %v2071
    %2116 = vmatprep.subr.mxu0 %v2069
    %2117 = vmatpush1.msra.mxu0 %v2068
    %2118 = vmatprep.subr.mxu0 %v2066
    %2119 = vmatpush1.msra.mxu0 %v2065
    %2120 = vmatprep.subr.mxu0 %v2063
    %2121 = vmatpush1.msra.mxu0 %v2062
    %2122 = vmatprep.subr.mxu0 %v2060
    %2123 = vmatpush1.msra.mxu0 %v2059
    %2124 = vmatprep.subr.mxu0 %v2057
    %2125 = vmatpush1.msra.mxu0 %v2056
    %2126 = vmatprep.subr.mxu0 %v2054
    %2127 = vmatpush1.msra.mxu0 %v2053
    %2128 = vmatprep.subr.mxu0 %v2051
    %2129 = vmatpush1.msra.mxu0 %v2050
    %2130 = vmatprep.subr.mxu0 0.0
    %2131 = vmatpush2.msra.mxu0 0.0
    %2132 = vmatprep.subr.mxu0 0.0
    %2133 = vmatpush2.msra.mxu0 0.0
    %2134 = vmatprep.subr.mxu0 0.0
    %2135 = vmatpush2.msra.mxu0 0.0
    %2136 = vmatprep.subr.mxu0 0.0
    %2137 = vmatpush2.msra.mxu0 0.0
    %2138 = vmatprep.subr.mxu0 0.0
    %2139 = vmatpush2.msra.mxu0 0.0
    %2140 = vmatprep.subr.mxu0 0.0
    %2141 = vmatpush2.msra.mxu0 0.0
    %2142 = vmatprep.subr.mxu0 0.0
    %2143 = vmatpush2.msra.mxu0 0.0
    %2144 = vmatprep.subr.mxu0 0.0
    %2145 = vmatpush2.msra.mxu0 0.0
    %2146 = vmatprep.subr.mxu0 0.0
    %2147 = vmatpush2.msra.mxu0 0.0
    %2148 = vmatprep.subr.mxu0 0.0
    %2149 = vmatpush2.msra.mxu0 0.0
    %2150 = vmatprep.subr.mxu0 0.0
    %2151 = vmatpush2.msra.mxu0 0.0
    %2152 = vmatprep.subr.mxu0 0.0
    %2153 = vmatpush2.msra.mxu0 0.0
    %2154 = vmatprep.subr.mxu0 0.0
    %2155 = vmatpush2.msra.mxu0 0.0
    %2156 = vmatprep.subr.mxu0 0.0
    %2157 = vmatpush2.msra.mxu0 0.0
    %2158 = vmatprep.subr.mxu0 0.0
    %2159 = vmatpush2.msra.mxu0 0.0
    %2160 = vmatprep.subr.mxu0 0.0
    %2161 = vmatpush2.msra.mxu0 0.0
    %2162 = vmatprep.mubr.f32.mxu0 0.0
    %2163 = vmatmul.mubr.f32.gmra.mxu0 %v2047
    %v2164 = vpop.f32.mrf.mxu0
    %v2165 = vadd.f32 0.0, %v2164
    %v2166 = vpop.f32.mrf.mxu0
    %v2167 = vadd.f32 0.0, %v2166
    %2168 = vdwg.mxu0
    %2169 = vmatprep.subr.mxu0 0.0
    %2170 = vmatpush1.msra.mxu0 %v2097
    %2171 = vmatprep.subr.mxu0 0.0
    %2172 = vmatpush1.msra.mxu0 %v2094
    %2173 = vmatprep.subr.mxu0 0.0
    %2174 = vmatpush1.msra.mxu0 %v2091
    %2175 = vmatprep.subr.mxu0 0.0
    %2176 = vmatpush1.msra.mxu0 %v2088
    %2177 = vmatprep.subr.mxu0 0.0
    %2178 = vmatpush1.msra.mxu0 %v2085
    %2179 = vmatprep.subr.mxu0 0.0
    %2180 = vmatpush1.msra.mxu0 %v2082
    %2181 = vmatprep.subr.mxu0 0.0
    %2182 = vmatpush1.msra.mxu0 %v2079
    %2183 = vmatprep.subr.mxu0 0.0
    %2184 = vmatpush1.msra.mxu0 %v2076
    %2185 = vmatprep.subr.mxu0 0.0
    %2186 = vmatpush1.msra.mxu0 %v2073
    %2187 = vmatprep.subr.mxu0 0.0
    %2188 = vmatpush1.msra.mxu0 %v2070
    %2189 = vmatprep.subr.mxu0 0.0
    %2190 = vmatpush1.msra.mxu0 %v2067
    %2191 = vmatprep.subr.mxu0 0.0
    %2192 = vmatpush1.msra.mxu0 %v2064
    %2193 = vmatprep.subr.mxu0 0.0
    %2194 = vmatpush1.msra.mxu0 %v2061
    %2195 = vmatprep.subr.mxu0 0.0
    %2196 = vmatpush1.msra.mxu0 %v2058
    %2197 = vmatprep.subr.mxu0 0.0
    %2198 = vmatpush1.msra.mxu0 %v2055
    %2199 = vmatprep.subr.mxu0 0.0
    %2200 = vmatpush1.msra.mxu0 %v2052
    %2201 = vmatprep.subr.mxu0 0.0
    %2202 = vmatpush2.msra.mxu0 0.0
    %2203 = vmatprep.subr.mxu0 0.0
    %2204 = vmatpush2.msra.mxu0 0.0
    %2205 = vmatprep.subr.mxu0 0.0
    %2206 = vmatpush2.msra.mxu0 0.0
    %2207 = vmatprep.subr.mxu0 0.0
    %2208 = vmatpush2.msra.mxu0 0.0
    %2209 = vmatprep.subr.mxu0 0.0
    %2210 = vmatpush2.msra.mxu0 0.0
    %2211 = vmatprep.subr.mxu0 0.0
    %2212 = vmatpush2.msra.mxu0 0.0
    %2213 = vmatprep.subr.mxu0 0.0
    %2214 = vmatpush2.msra.mxu0 0.0
    %2215 = vmatprep.subr.mxu0 0.0
    %2216 = vmatpush2.msra.mxu0 0.0
    %2217 = vmatprep.subr.mxu0 0.0
    %2218 = vmatpush2.msra.mxu0 0.0
    %2219 = vmatprep.subr.mxu0 0.0
    %2220 = vmatpush2.msra.mxu0 0.0
    %2221 = vmatprep.subr.mxu0 0.0
    %2222 = vmatpush2.msra.mxu0 0.0
    %2223 = vmatprep.subr.mxu0 0.0
    %2224 = vmatpush2.msra.mxu0 0.0
    %2225 = vmatprep.subr.mxu0 0.0
    %2226 = vmatpush2.msra.mxu0 0.0
    %2227 = vmatprep.subr.mxu0 0.0
    %2228 = vmatpush2.msra.mxu0 0.0
    %2229 = vmatprep.subr.mxu0 0.0
    %2230 = vmatpush2.msra.mxu0 0.0
    %2231 = vmatprep.subr.mxu0 0.0
    %2232 = vmatpush2.msra.mxu0 0.0
    %2233 = vmatprep.mubr.f32.mxu0 0.0
    %2234 = vmatmul.mubr.f32.gmra.mxu0 %v2047
    %v2235 = vpop.f32.mrf.mxu0
    %v2236 = vadd.f32 0.0, %v2235
    %v2237 = vpop.f32.mrf.mxu0
    %2238 = vdwg.mxu0
    %v2242 = vcombine.low %v2165, %v2167
    %v2244 = vunpack.c.l.s4 1983009808
    %v2245 = vunpack.c.0.s8 %v2244
    %v2246 = vlaneseq
    %v2247 = vshrl.u32 %v2246, 7
    %v2248 = vsub.s32 %v2245, %v2247
    %v2249 = vrot.slane %v2242, %v2248
    %v2251 = vunpack.c.l.s4 1983009808
    %v2252 = vunpack.c.0.s8 %v2251
    %v2253 = vlaneseq
    %v2254 = vshrl.u32 %v2253, 7
    %v2255 = vsub.s32 %v2252, %v2254
    %v2256 = vrot.slane %v2236, %v2255
    %v2257 = vcombine.low %v2249, %v2256
    %2259 = vst [vmem:[#allocation7] sm:$0x3f] %v2257
    %v2260 = vld [vmem:[#allocation4] sm:$0xff]
    %v2261 = vld [vmem:[#allocation4 + $0x8] sm:$0xff]
    %v2262 = vld [vmem:[#allocation4 + $0x10] sm:$0xff]
    %v2263 = vld [vmem:[#allocation7] ss:$2 sm:$0x7]
    %v2265 = vlaneseq
    %v2266 = vshrl.u32 %v2265, 7
    %v2267 = vsub.s32 0, %v2266
    %v2268 = vrot.slane %v2263, %v2267
    %v2269 = vlaneseq
    %v2270 = vshrl.u32 %v2269, 7
    %v2271 = vsub.s32 1, %v2270
    %v2272 = vrot.slane %v2263, %v2271
    %v2273 = vlaneseq
    %v2274 = vshrl.u32 %v2273, 7
    %v2275 = vsub.s32 2, %v2274
    %v2276 = vrot.slane %v2263, %v2275
    %v2280 = vadd.f32 %v2260, %v2268
    %v2281 = vadd.f32 %v2261, %v2272
    %v2282 = vadd.f32 %v2262, %v2276
    %v2283 = vld [vmem:[#allocation22] sm:$0xff]
    %v2284 = vld [vmem:[#allocation22 + $0x8] sm:$0xff]
    %v2285 = vld [vmem:[#allocation22 + $0x10] sm:$0xff]
    %v2286 = vld [vmem:[#allocation22 + $0x18] sm:$0xff]
    %v2287 = vld [vmem:[#allocation22 + $0x20] sm:$0xff]
    %v2288 = vld [vmem:[#allocation22 + $0x28] sm:$0xff]
    %v2289 = vld [vmem:[#allocation22 + $0x30] sm:$0xff]
    %v2290 = vld [vmem:[#allocation22 + $0x38] sm:$0xff]
    %v2291 = vld [vmem:[#allocation22 + $0x40] sm:$0xff]
    %v2292 = vld [vmem:[#allocation22 + $0x48] sm:$0xff]
    %v2293 = vld [vmem:[#allocation22 + $0x50] sm:$0xff]
    %v2294 = vld [vmem:[#allocation22 + $0x58] sm:$0xff]
    %v2295 = vld [vmem:[#allocation22 + $0x60] sm:$0xff]
    %v2296 = vld [vmem:[#allocation22 + $0x68] sm:$0xff]
    %v2297 = vld [vmem:[#allocation22 + $0x70] sm:$0xff]
    %v2298 = vld [vmem:[#allocation22 + $0x78] sm:$0xff]
    %v2299 = vld [vmem:[#allocation22 + $0x80] sm:$0xff]
    %v2300 = vld [vmem:[#allocation22 + $0x88] sm:$0xff]
    %v2301 = vld [vmem:[#allocation22 + $0x90] sm:$0xff]
    %v2302 = vld [vmem:[#allocation22 + $0x98] sm:$0xff]
    %v2303 = vld [vmem:[#allocation22 + $0xa0] sm:$0xff]
    %v2304 = vld [vmem:[#allocation22 + $0xa8] sm:$0xff]
    %v2305 = vld [vmem:[#allocation22 + $0xb0] sm:$0xff]
    %v2306 = vld [vmem:[#allocation22 + $0xb8] sm:$0xff]
    %v2307 = vld [vmem:[#allocation22 + $0xc0] sm:$0xff]
    %v2308 = vld [vmem:[#allocation22 + $0xc8] sm:$0xff]
    %v2309 = vld [vmem:[#allocation22 + $0xd0] sm:$0xff]
    %v2310 = vld [vmem:[#allocation22 + $0xd8] sm:$0xff]
    %v2311 = vld [vmem:[#allocation22 + $0xe0] sm:$0xff]
    %v2312 = vld [vmem:[#allocation22 + $0xe8] sm:$0xff]
    %v2313 = vld [vmem:[#allocation22 + $0xf0] sm:$0xff]
    %v2314 = vld [vmem:[#allocation22 + $0xf8] sm:$0xff]
    %v2315 = vld [vmem:[#allocation22 + $0x100] sm:$0xff]
    %v2316 = vld [vmem:[#allocation22 + $0x108] sm:$0xff]
    %v2317 = vld [vmem:[#allocation22 + $0x110] sm:$0xff]
    %v2318 = vld [vmem:[#allocation22 + $0x118] sm:$0xff]
    %v2319 = vld [vmem:[#allocation22 + $0x120] sm:$0xff]
    %v2320 = vld [vmem:[#allocation22 + $0x128] sm:$0xff]
    %v2321 = vld [vmem:[#allocation22 + $0x130] sm:$0xff]
    %v2322 = vld [vmem:[#allocation22 + $0x138] sm:$0xff]
    %v2323 = vld [vmem:[#allocation22 + $0x140] sm:$0xff]
    %v2324 = vld [vmem:[#allocation22 + $0x148] sm:$0xff]
    %v2325 = vld [vmem:[#allocation22 + $0x150] sm:$0xff]
    %v2326 = vld [vmem:[#allocation22 + $0x158] sm:$0xff]
    %v2327 = vld [vmem:[#allocation22 + $0x160] sm:$0xff]
    %v2328 = vld [vmem:[#allocation22 + $0x168] sm:$0xff]
    %v2329 = vld [vmem:[#allocation22 + $0x170] sm:$0xff]
    %v2330 = vld [vmem:[#allocation22 + $0x178] sm:$0xff]
    %v2331 = vld [vmem:[%s15] sm:$0x7]
    %v2333 = vlaneseq
    %v2334 = vshrl.u32 %v2333, 7
    %v2335 = vsub.s32 0, %v2334
    %v2336 = vrot.slane %v2331, %v2335
    %v2337 = vlaneseq
    %v2338 = vshrl.u32 %v2337, 7
    %v2339 = vsub.s32 1, %v2338
    %v2340 = vrot.slane %v2331, %v2339
    %v2341 = vlaneseq
    %v2342 = vshrl.u32 %v2341, 7
    %v2343 = vsub.s32 2, %v2342
    %v2344 = vrot.slane %v2331, %v2343
    %2348 = vmatprep.subr.mxu0 %v2329
    %2349 = vmatpush1.msra.mxu0 %v2328
    %2350 = vmatprep.subr.mxu0 %v2326
    %2351 = vmatpush1.msra.mxu0 %v2325
    %2352 = vmatprep.subr.mxu0 %v2323
    %2353 = vmatpush1.msra.mxu0 %v2322
    %2354 = vmatprep.subr.mxu0 %v2320
    %2355 = vmatpush1.msra.mxu0 %v2319
    %2356 = vmatprep.subr.mxu0 %v2317
    %2357 = vmatpush1.msra.mxu0 %v2316
    %2358 = vmatprep.subr.mxu0 %v2314
    %2359 = vmatpush1.msra.mxu0 %v2313
    %2360 = vmatprep.subr.mxu0 %v2311
    %2361 = vmatpush1.msra.mxu0 %v2310
    %2362 = vmatprep.subr.mxu0 %v2308
    %2363 = vmatpush1.msra.mxu0 %v2307
    %2364 = vmatprep.subr.mxu0 %v2305
    %2365 = vmatpush1.msra.mxu0 %v2304
    %2366 = vmatprep.subr.mxu0 %v2302
    %2367 = vmatpush1.msra.mxu0 %v2301
    %2368 = vmatprep.subr.mxu0 %v2299
    %2369 = vmatpush1.msra.mxu0 %v2298
    %2370 = vmatprep.subr.mxu0 %v2296
    %2371 = vmatpush1.msra.mxu0 %v2295
    %2372 = vmatprep.subr.mxu0 %v2293
    %2373 = vmatpush1.msra.mxu0 %v2292
    %2374 = vmatprep.subr.mxu0 %v2290
    %2375 = vmatpush1.msra.mxu0 %v2289
    %2376 = vmatprep.subr.mxu0 %v2287
    %2377 = vmatpush1.msra.mxu0 %v2286
    %2378 = vmatprep.subr.mxu0 %v2284
    %2379 = vmatpush1.msra.mxu0 %v2283
    %2380 = vmatprep.subr.mxu0 0.0
    %2381 = vmatpush2.msra.mxu0 0.0
    %2382 = vmatprep.subr.mxu0 0.0
    %2383 = vmatpush2.msra.mxu0 0.0
    %2384 = vmatprep.subr.mxu0 0.0
    %2385 = vmatpush2.msra.mxu0 0.0
    %2386 = vmatprep.subr.mxu0 0.0
    %2387 = vmatpush2.msra.mxu0 0.0
    %2388 = vmatprep.subr.mxu0 0.0
    %2389 = vmatpush2.msra.mxu0 0.0
    %2390 = vmatprep.subr.mxu0 0.0
    %2391 = vmatpush2.msra.mxu0 0.0
    %2392 = vmatprep.subr.mxu0 0.0
    %2393 = vmatpush2.msra.mxu0 0.0
    %2394 = vmatprep.subr.mxu0 0.0
    %2395 = vmatpush2.msra.mxu0 0.0
    %2396 = vmatprep.subr.mxu0 0.0
    %2397 = vmatpush2.msra.mxu0 0.0
    %2398 = vmatprep.subr.mxu0 0.0
    %2399 = vmatpush2.msra.mxu0 0.0
    %2400 = vmatprep.subr.mxu0 0.0
    %2401 = vmatpush2.msra.mxu0 0.0
    %2402 = vmatprep.subr.mxu0 0.0
    %2403 = vmatpush2.msra.mxu0 0.0
    %2404 = vmatprep.subr.mxu0 0.0
    %2405 = vmatpush2.msra.mxu0 0.0
    %2406 = vmatprep.subr.mxu0 0.0
    %2407 = vmatpush2.msra.mxu0 0.0
    %2408 = vmatprep.subr.mxu0 0.0
    %2409 = vmatpush2.msra.mxu0 0.0
    %2410 = vmatprep.subr.mxu0 0.0
    %2411 = vmatpush2.msra.mxu0 0.0
    %2412 = vmatprep.mubr.f32.mxu0 0.0
    %2413 = vmatmul.mubr.f32.gmra.mxu0 0.0
    %v2414 = vpop.f32.mrf.mxu0
    %v2415 = vadd.f32 %v2336, %v2414
    %v2416 = vpop.f32.mrf.mxu0
    %v2417 = vadd.f32 %v2340, %v2416
    %2418 = vdwg.mxu0
    %2419 = vmatprep.subr.mxu0 0.0
    %2420 = vmatpush1.msra.mxu0 %v2330
    %2421 = vmatprep.subr.mxu0 0.0
    %2422 = vmatpush1.msra.mxu0 %v2327
    %2423 = vmatprep.subr.mxu0 0.0
    %2424 = vmatpush1.msra.mxu0 %v2324
    %2425 = vmatprep.subr.mxu0 0.0
    %2426 = vmatpush1.msra.mxu0 %v2321
    %2427 = vmatprep.subr.mxu0 0.0
    %2428 = vmatpush1.msra.mxu0 %v2318
    %2429 = vmatprep.subr.mxu0 0.0
    %2430 = vmatpush1.msra.mxu0 %v2315
    %2431 = vmatprep.subr.mxu0 0.0
    %2432 = vmatpush1.msra.mxu0 %v2312
    %2433 = vmatprep.subr.mxu0 0.0
    %2434 = vmatpush1.msra.mxu0 %v2309
    %2435 = vmatprep.subr.mxu0 0.0
    %2436 = vmatpush1.msra.mxu0 %v2306
    %2437 = vmatprep.subr.mxu0 0.0
    %2438 = vmatpush1.msra.mxu0 %v2303
    %2439 = vmatprep.subr.mxu0 0.0
    %2440 = vmatpush1.msra.mxu0 %v2300
    %2441 = vmatprep.subr.mxu0 0.0
    %2442 = vmatpush1.msra.mxu0 %v2297
    %2443 = vmatprep.subr.mxu0 0.0
    %2444 = vmatpush1.msra.mxu0 %v2294
    %2445 = vmatprep.subr.mxu0 0.0
    %2446 = vmatpush1.msra.mxu0 %v2291
    %2447 = vmatprep.subr.mxu0 0.0
    %2448 = vmatpush1.msra.mxu0 %v2288
    %2449 = vmatprep.subr.mxu0 0.0
    %2450 = vmatpush1.msra.mxu0 %v2285
    %2451 = vmatprep.subr.mxu0 0.0
    %2452 = vmatpush2.msra.mxu0 0.0
    %2453 = vmatprep.subr.mxu0 0.0
    %2454 = vmatpush2.msra.mxu0 0.0
    %2455 = vmatprep.subr.mxu0 0.0
    %2456 = vmatpush2.msra.mxu0 0.0
    %2457 = vmatprep.subr.mxu0 0.0
    %2458 = vmatpush2.msra.mxu0 0.0
    %2459 = vmatprep.subr.mxu0 0.0
    %2460 = vmatpush2.msra.mxu0 0.0
    %2461 = vmatprep.subr.mxu0 0.0
    %2462 = vmatpush2.msra.mxu0 0.0
    %2463 = vmatprep.subr.mxu0 0.0
    %2464 = vmatpush2.msra.mxu0 0.0
    %2465 = vmatprep.subr.mxu0 0.0
    %2466 = vmatpush2.msra.mxu0 0.0
    %2467 = vmatprep.subr.mxu0 0.0
    %2468 = vmatpush2.msra.mxu0 0.0
    %2469 = vmatprep.subr.mxu0 0.0
    %2470 = vmatpush2.msra.mxu0 0.0
    %2471 = vmatprep.subr.mxu0 0.0
    %2472 = vmatpush2.msra.mxu0 0.0
    %2473 = vmatprep.subr.mxu0 0.0
    %2474 = vmatpush2.msra.mxu0 0.0
    %2475 = vmatprep.subr.mxu0 0.0
    %2476 = vmatpush2.msra.mxu0 0.0
    %2477 = vmatprep.subr.mxu0 0.0
    %2478 = vmatpush2.msra.mxu0 0.0
    %2479 = vmatprep.subr.mxu0 0.0
    %2480 = vmatpush2.msra.mxu0 0.0
    %2481 = vmatprep.subr.mxu0 0.0
    %2482 = vmatpush2.msra.mxu0 0.0
    %2483 = vmatprep.mubr.f32.mxu0 0.0
    %2484 = vmatmul.mubr.f32.gmra.mxu0 0.0
    %v2485 = vpop.f32.mrf.mxu0
    %v2486 = vadd.f32 %v2344, %v2485
    %v2487 = vpop.f32.mrf.mxu0
    %2488 = vdwg.mxu0
    %v2489 = vadd.f32 %v2280, %v2415
    %v2490 = vxor.u32 %v2489, 2147483648
    %v2491 = vmul.f32 %v2490, 1.442695
    %v2492 = vpow.pop %v2491
    %v2493 = vadd.f32 %v2492, 1.0
    %v2494 = vrcp.pop %v2493
    %v2495 = vmul.f32 1.0, %v2494
    %v2496 = vadd.f32 %v2281, %v2417
    %v2497 = vxor.u32 %v2496, 2147483648
    %v2498 = vmul.f32 %v2497, 1.442695
    %v2499 = vpow.pop %v2498
    %v2500 = vadd.f32 %v2499, 1.0
    %v2501 = vrcp.pop %v2500
    %v2502 = vmul.f32 1.0, %v2501
    %v2503 = vmul.f32 %v2495, %v2486
    %v2504 = vadd.f32 %v2282, %v2503
    %v2505 = vtanh.pop %v2504
    %v2506 = vsub.f32 1.0, %v2502
    %v2507 = vmul.f32 %v2506, %v2505
    %v2508 = vmul.f32 %v2502, 0.0
    %v2509 = vadd.f32 %v2507, %v2508
    %v2510 = vld [vmem:[#allocation24] sm:$0xff]
    %v2511 = vld [vmem:[#allocation24 + $0x8] sm:$0xff]
    %v2512 = vld [vmem:[#allocation24 + $0x10] sm:$0xff]
    %v2513 = vld [vmem:[#allocation24 + $0x18] sm:$0xff]
    %v2514 = vld [vmem:[#allocation24 + $0x20] sm:$0xff]
    %v2515 = vld [vmem:[#allocation24 + $0x28] sm:$0xff]
    %v2516 = vld [vmem:[#allocation24 + $0x30] sm:$0xff]
    %v2517 = vld [vmem:[#allocation24 + $0x38] sm:$0xff]
    %v2518 = vld [vmem:[#allocation24 + $0x40] sm:$0xff]
    %v2519 = vld [vmem:[#allocation24 + $0x48] sm:$0xff]
    %v2520 = vld [vmem:[#allocation24 + $0x50] sm:$0xff]
    %v2521 = vld [vmem:[#allocation24 + $0x58] sm:$0xff]
    %v2522 = vld [vmem:[#allocation24 + $0x60] sm:$0xff]
    %v2523 = vld [vmem:[#allocation24 + $0x68] sm:$0xff]
    %v2524 = vld [vmem:[#allocation24 + $0x70] sm:$0xff]
    %v2525 = vld [vmem:[#allocation24 + $0x78] sm:$0xff]
    %v2526 = vld [vmem:[%s17] sm:$0x1]
    %v2528 = vlaneseq
    %v2529 = vshrl.u32 %v2528, 7
    %v2530 = vsub.s32 0, %v2529
    %v2531 = vrot.slane %v2526, %v2530
    %2533 = vmatprep.subr.mxu0 0.0
    %2534 = vmatpush1.msra.mxu0 %v2525
    %2535 = vmatprep.subr.mxu0 0.0
    %2536 = vmatpush1.msra.mxu0 %v2524
    %2537 = vmatprep.subr.mxu0 0.0
    %2538 = vmatpush1.msra.mxu0 %v2523
    %2539 = vmatprep.subr.mxu0 0.0
    %2540 = vmatpush1.msra.mxu0 %v2522
    %2541 = vmatprep.subr.mxu0 0.0
    %2542 = vmatpush1.msra.mxu0 %v2521
    %2543 = vmatprep.subr.mxu0 0.0
    %2544 = vmatpush1.msra.mxu0 %v2520
    %2545 = vmatprep.subr.mxu0 0.0
    %2546 = vmatpush1.msra.mxu0 %v2519
    %2547 = vmatprep.subr.mxu0 0.0
    %2548 = vmatpush1.msra.mxu0 %v2518
    %2549 = vmatprep.subr.mxu0 0.0
    %2550 = vmatpush1.msra.mxu0 %v2517
    %2551 = vmatprep.subr.mxu0 0.0
    %2552 = vmatpush1.msra.mxu0 %v2516
    %2553 = vmatprep.subr.mxu0 0.0
    %2554 = vmatpush1.msra.mxu0 %v2515
    %2555 = vmatprep.subr.mxu0 0.0
    %2556 = vmatpush1.msra.mxu0 %v2514
    %2557 = vmatprep.subr.mxu0 0.0
    %2558 = vmatpush1.msra.mxu0 %v2513
    %2559 = vmatprep.subr.mxu0 0.0
    %2560 = vmatpush1.msra.mxu0 %v2512
    %2561 = vmatprep.subr.mxu0 0.0
    %2562 = vmatpush1.msra.mxu0 %v2511
    %2563 = vmatprep.subr.mxu0 0.0
    %2564 = vmatpush1.msra.mxu0 %v2510
    %2565 = vmatprep.subr.mxu0 0.0
    %2566 = vmatpush2.msra.mxu0 0.0
    %2567 = vmatprep.subr.mxu0 0.0
    %2568 = vmatpush2.msra.mxu0 0.0
    %2569 = vmatprep.subr.mxu0 0.0
    %2570 = vmatpush2.msra.mxu0 0.0
    %2571 = vmatprep.subr.mxu0 0.0
    %2572 = vmatpush2.msra.mxu0 0.0
    %2573 = vmatprep.subr.mxu0 0.0
    %2574 = vmatpush2.msra.mxu0 0.0
    %2575 = vmatprep.subr.mxu0 0.0
    %2576 = vmatpush2.msra.mxu0 0.0
    %2577 = vmatprep.subr.mxu0 0.0
    %2578 = vmatpush2.msra.mxu0 0.0
    %2579 = vmatprep.subr.mxu0 0.0
    %2580 = vmatpush2.msra.mxu0 0.0
    %2581 = vmatprep.subr.mxu0 0.0
    %2582 = vmatpush2.msra.mxu0 0.0
    %2583 = vmatprep.subr.mxu0 0.0
    %2584 = vmatpush2.msra.mxu0 0.0
    %2585 = vmatprep.subr.mxu0 0.0
    %2586 = vmatpush2.msra.mxu0 0.0
    %2587 = vmatprep.subr.mxu0 0.0
    %2588 = vmatpush2.msra.mxu0 0.0
    %2589 = vmatprep.subr.mxu0 0.0
    %2590 = vmatpush2.msra.mxu0 0.0
    %2591 = vmatprep.subr.mxu0 0.0
    %2592 = vmatpush2.msra.mxu0 0.0
    %2593 = vmatprep.subr.mxu0 0.0
    %2594 = vmatpush2.msra.mxu0 0.0
    %2595 = vmatprep.subr.mxu0 0.0
    %2596 = vmatpush2.msra.mxu0 0.0
    %2597 = vmatprep.mubr.f32.mxu0 0.0
    %2598 = vmatmul.mubr.f32.gmra.mxu0 %v2509
    %v2599 = vpop.f32.mrf.mxu0
    %v2600 = vadd.f32 %v2531, %v2599
    %v2601 = vpop.f32.mrf.mxu0
    %2602 = vdwg.mxu0
    %2603 = vst [vmem:[#allocation25] sm:$0xff] %v2600
    %s2604 = scalar_lea.vmem [#allocation4], 24
    %v2605 = vld [vmem:[%s2604] sm:$0xff]
    %v2606 = vld [vmem:[%s2604 + $0x8] sm:$0xff]
    %v2607 = vld [vmem:[%s2604 + $0x10] sm:$0xff]
    %s2608 = scalar_lea.vmem [#allocation7], 1
    %v2609 = vld [vmem:[%s2608] ss:$2 sm:$0x7]
    %v2611 = vlaneseq
    %v2612 = vshrl.u32 %v2611, 7
    %v2613 = vsub.s32 0, %v2612
    %v2614 = vrot.slane %v2609, %v2613
    %v2615 = vlaneseq
    %v2616 = vshrl.u32 %v2615, 7
    %v2617 = vsub.s32 1, %v2616
    %v2618 = vrot.slane %v2609, %v2617
    %v2619 = vlaneseq
    %v2620 = vshrl.u32 %v2619, 7
    %v2621 = vsub.s32 2, %v2620
    %v2622 = vrot.slane %v2609, %v2621
    %v2626 = vadd.f32 %v2605, %v2614
    %v2627 = vadd.f32 %v2606, %v2618
    %v2628 = vadd.f32 %v2607, %v2622
    %v2629 = vld [vmem:[#allocation22] sm:$0xff]
    %v2630 = vld [vmem:[#allocation22 + $0x8] sm:$0xff]
    %v2631 = vld [vmem:[#allocation22 + $0x10] sm:$0xff]
    %v2632 = vld [vmem:[#allocation22 + $0x18] sm:$0xff]
    %v2633 = vld [vmem:[#allocation22 + $0x20] sm:$0xff]
    %v2634 = vld [vmem:[#allocation22 + $0x28] sm:$0xff]
    %v2635 = vld [vmem:[#allocation22 + $0x30] sm:$0xff]
    %v2636 = vld [vmem:[#allocation22 + $0x38] sm:$0xff]
    %v2637 = vld [vmem:[#allocation22 + $0x40] sm:$0xff]
    %v2638 = vld [vmem:[#allocation22 + $0x48] sm:$0xff]
    %v2639 = vld [vmem:[#allocation22 + $0x50] sm:$0xff]
    %v2640 = vld [vmem:[#allocation22 + $0x58] sm:$0xff]
    %v2641 = vld [vmem:[#allocation22 + $0x60] sm:$0xff]
    %v2642 = vld [vmem:[#allocation22 + $0x68] sm:$0xff]
    %v2643 = vld [vmem:[#allocation22 + $0x70] sm:$0xff]
    %v2644 = vld [vmem:[#allocation22 + $0x78] sm:$0xff]
    %v2645 = vld [vmem:[#allocation22 + $0x80] sm:$0xff]
    %v2646 = vld [vmem:[#allocation22 + $0x88] sm:$0xff]
    %v2647 = vld [vmem:[#allocation22 + $0x90] sm:$0xff]
    %v2648 = vld [vmem:[#allocation22 + $0x98] sm:$0xff]
    %v2649 = vld [vmem:[#allocation22 + $0xa0] sm:$0xff]
    %v2650 = vld [vmem:[#allocation22 + $0xa8] sm:$0xff]
    %v2651 = vld [vmem:[#allocation22 + $0xb0] sm:$0xff]
    %v2652 = vld [vmem:[#allocation22 + $0xb8] sm:$0xff]
    %v2653 = vld [vmem:[#allocation22 + $0xc0] sm:$0xff]
    %v2654 = vld [vmem:[#allocation22 + $0xc8] sm:$0xff]
    %v2655 = vld [vmem:[#allocation22 + $0xd0] sm:$0xff]
    %v2656 = vld [vmem:[#allocation22 + $0xd8] sm:$0xff]
    %v2657 = vld [vmem:[#allocation22 + $0xe0] sm:$0xff]
    %v2658 = vld [vmem:[#allocation22 + $0xe8] sm:$0xff]
    %v2659 = vld [vmem:[#allocation22 + $0xf0] sm:$0xff]
    %v2660 = vld [vmem:[#allocation22 + $0xf8] sm:$0xff]
    %v2661 = vld [vmem:[#allocation22 + $0x100] sm:$0xff]
    %v2662 = vld [vmem:[#allocation22 + $0x108] sm:$0xff]
    %v2663 = vld [vmem:[#allocation22 + $0x110] sm:$0xff]
    %v2664 = vld [vmem:[#allocation22 + $0x118] sm:$0xff]
    %v2665 = vld [vmem:[#allocation22 + $0x120] sm:$0xff]
    %v2666 = vld [vmem:[#allocation22 + $0x128] sm:$0xff]
    %v2667 = vld [vmem:[#allocation22 + $0x130] sm:$0xff]
    %v2668 = vld [vmem:[#allocation22 + $0x138] sm:$0xff]
    %v2669 = vld [vmem:[#allocation22 + $0x140] sm:$0xff]
    %v2670 = vld [vmem:[#allocation22 + $0x148] sm:$0xff]
    %v2671 = vld [vmem:[#allocation22 + $0x150] sm:$0xff]
    %v2672 = vld [vmem:[#allocation22 + $0x158] sm:$0xff]
    %v2673 = vld [vmem:[#allocation22 + $0x160] sm:$0xff]
    %v2674 = vld [vmem:[#allocation22 + $0x168] sm:$0xff]
    %v2675 = vld [vmem:[#allocation22 + $0x170] sm:$0xff]
    %v2676 = vld [vmem:[#allocation22 + $0x178] sm:$0xff]
    %v2677 = vld [vmem:[%s15] sm:$0x7]
    %v2679 = vlaneseq
    %v2680 = vshrl.u32 %v2679, 7
    %v2681 = vsub.s32 0, %v2680
    %v2682 = vrot.slane %v2677, %v2681
    %v2683 = vlaneseq
    %v2684 = vshrl.u32 %v2683, 7
    %v2685 = vsub.s32 1, %v2684
    %v2686 = vrot.slane %v2677, %v2685
    %v2687 = vlaneseq
    %v2688 = vshrl.u32 %v2687, 7
    %v2689 = vsub.s32 2, %v2688
    %v2690 = vrot.slane %v2677, %v2689
    %2694 = vmatprep.subr.mxu0 %v2675
    %2695 = vmatpush1.msra.mxu0 %v2674
    %2696 = vmatprep.subr.mxu0 %v2672
    %2697 = vmatpush1.msra.mxu0 %v2671
    %2698 = vmatprep.subr.mxu0 %v2669
    %2699 = vmatpush1.msra.mxu0 %v2668
    %2700 = vmatprep.subr.mxu0 %v2666
    %2701 = vmatpush1.msra.mxu0 %v2665
    %2702 = vmatprep.subr.mxu0 %v2663
    %2703 = vmatpush1.msra.mxu0 %v2662
    %2704 = vmatprep.subr.mxu0 %v2660
    %2705 = vmatpush1.msra.mxu0 %v2659
    %2706 = vmatprep.subr.mxu0 %v2657
    %2707 = vmatpush1.msra.mxu0 %v2656
    %2708 = vmatprep.subr.mxu0 %v2654
    %2709 = vmatpush1.msra.mxu0 %v2653
    %2710 = vmatprep.subr.mxu0 %v2651
    %2711 = vmatpush1.msra.mxu0 %v2650
    %2712 = vmatprep.subr.mxu0 %v2648
    %2713 = vmatpush1.msra.mxu0 %v2647
    %2714 = vmatprep.subr.mxu0 %v2645
    %2715 = vmatpush1.msra.mxu0 %v2644
    %2716 = vmatprep.subr.mxu0 %v2642
    %2717 = vmatpush1.msra.mxu0 %v2641
    %2718 = vmatprep.subr.mxu0 %v2639
    %2719 = vmatpush1.msra.mxu0 %v2638
    %2720 = vmatprep.subr.mxu0 %v2636
    %2721 = vmatpush1.msra.mxu0 %v2635
    %2722 = vmatprep.subr.mxu0 %v2633
    %2723 = vmatpush1.msra.mxu0 %v2632
    %2724 = vmatprep.subr.mxu0 %v2630
    %2725 = vmatpush1.msra.mxu0 %v2629
    %2726 = vmatprep.subr.mxu0 0.0
    %2727 = vmatpush2.msra.mxu0 0.0
    %2728 = vmatprep.subr.mxu0 0.0
    %2729 = vmatpush2.msra.mxu0 0.0
    %2730 = vmatprep.subr.mxu0 0.0
    %2731 = vmatpush2.msra.mxu0 0.0
    %2732 = vmatprep.subr.mxu0 0.0
    %2733 = vmatpush2.msra.mxu0 0.0
    %2734 = vmatprep.subr.mxu0 0.0
    %2735 = vmatpush2.msra.mxu0 0.0
    %2736 = vmatprep.subr.mxu0 0.0
    %2737 = vmatpush2.msra.mxu0 0.0
    %2738 = vmatprep.subr.mxu0 0.0
    %2739 = vmatpush2.msra.mxu0 0.0
    %2740 = vmatprep.subr.mxu0 0.0
    %2741 = vmatpush2.msra.mxu0 0.0
    %2742 = vmatprep.subr.mxu0 0.0
    %2743 = vmatpush2.msra.mxu0 0.0
    %2744 = vmatprep.subr.mxu0 0.0
    %2745 = vmatpush2.msra.mxu0 0.0
    %2746 = vmatprep.subr.mxu0 0.0
    %2747 = vmatpush2.msra.mxu0 0.0
    %2748 = vmatprep.subr.mxu0 0.0
    %2749 = vmatpush2.msra.mxu0 0.0
    %2750 = vmatprep.subr.mxu0 0.0
    %2751 = vmatpush2.msra.mxu0 0.0
    %2752 = vmatprep.subr.mxu0 0.0
    %2753 = vmatpush2.msra.mxu0 0.0
    %2754 = vmatprep.subr.mxu0 0.0
    %2755 = vmatpush2.msra.mxu0 0.0
    %2756 = vmatprep.subr.mxu0 0.0
    %2757 = vmatpush2.msra.mxu0 0.0
    %2758 = vmatprep.mubr.f32.mxu0 0.0
    %2759 = vmatmul.mubr.f32.gmra.mxu0 %v2509
    %v2760 = vpop.f32.mrf.mxu0
    %v2761 = vadd.f32 %v2682, %v2760
    %v2762 = vpop.f32.mrf.mxu0
    %v2763 = vadd.f32 %v2686, %v2762
    %2764 = vdwg.mxu0
    %2765 = vmatprep.subr.mxu0 0.0
    %2766 = vmatpush1.msra.mxu0 %v2676
    %2767 = vmatprep.subr.mxu0 0.0
    %2768 = vmatpush1.msra.mxu0 %v2673
    %2769 = vmatprep.subr.mxu0 0.0
    %2770 = vmatpush1.msra.mxu0 %v2670
    %2771 = vmatprep.subr.mxu0 0.0
    %2772 = vmatpush1.msra.mxu0 %v2667
    %2773 = vmatprep.subr.mxu0 0.0
    %2774 = vmatpush1.msra.mxu0 %v2664
    %2775 = vmatprep.subr.mxu0 0.0
    %2776 = vmatpush1.msra.mxu0 %v2661
    %2777 = vmatprep.subr.mxu0 0.0
    %2778 = vmatpush1.msra.mxu0 %v2658
    %2779 = vmatprep.subr.mxu0 0.0
    %2780 = vmatpush1.msra.mxu0 %v2655
    %2781 = vmatprep.subr.mxu0 0.0
    %2782 = vmatpush1.msra.mxu0 %v2652
    %2783 = vmatprep.subr.mxu0 0.0
    %2784 = vmatpush1.msra.mxu0 %v2649
    %2785 = vmatprep.subr.mxu0 0.0
    %2786 = vmatpush1.msra.mxu0 %v2646
    %2787 = vmatprep.subr.mxu0 0.0
    %2788 = vmatpush1.msra.mxu0 %v2643
    %2789 = vmatprep.subr.mxu0 0.0
    %2790 = vmatpush1.msra.mxu0 %v2640
    %2791 = vmatprep.subr.mxu0 0.0
    %2792 = vmatpush1.msra.mxu0 %v2637
    %2793 = vmatprep.subr.mxu0 0.0
    %2794 = vmatpush1.msra.mxu0 %v2634
    %2795 = vmatprep.subr.mxu0 0.0
    %2796 = vmatpush1.msra.mxu0 %v2631
    %2797 = vmatprep.subr.mxu0 0.0
    %2798 = vmatpush2.msra.mxu0 0.0
    %2799 = vmatprep.subr.mxu0 0.0
    %2800 = vmatpush2.msra.mxu0 0.0
    %2801 = vmatprep.subr.mxu0 0.0
    %2802 = vmatpush2.msra.mxu0 0.0
    %2803 = vmatprep.subr.mxu0 0.0
    %2804 = vmatpush2.msra.mxu0 0.0
    %2805 = vmatprep.subr.mxu0 0.0
    %2806 = vmatpush2.msra.mxu0 0.0
    %2807 = vmatprep.subr.mxu0 0.0
    %2808 = vmatpush2.msra.mxu0 0.0
    %2809 = vmatprep.subr.mxu0 0.0
    %2810 = vmatpush2.msra.mxu0 0.0
    %2811 = vmatprep.subr.mxu0 0.0
    %2812 = vmatpush2.msra.mxu0 0.0
    %2813 = vmatprep.subr.mxu0 0.0
    %2814 = vmatpush2.msra.mxu0 0.0
    %2815 = vmatprep.subr.mxu0 0.0
    %2816 = vmatpush2.msra.mxu0 0.0
    %2817 = vmatprep.subr.mxu0 0.0
    %2818 = vmatpush2.msra.mxu0 0.0
    %2819 = vmatprep.subr.mxu0 0.0
    %2820 = vmatpush2.msra.mxu0 0.0
    %2821 = vmatprep.subr.mxu0 0.0
    %2822 = vmatpush2.msra.mxu0 0.0
    %2823 = vmatprep.subr.mxu0 0.0
    %2824 = vmatpush2.msra.mxu0 0.0
    %2825 = vmatprep.subr.mxu0 0.0
    %2826 = vmatpush2.msra.mxu0 0.0
    %2827 = vmatprep.subr.mxu0 0.0
    %2828 = vmatpush2.msra.mxu0 0.0
    %2829 = vmatprep.mubr.f32.mxu0 0.0
    %2830 = vmatmul.mubr.f32.gmra.mxu0 %v2509
    %v2831 = vpop.f32.mrf.mxu0
    %v2832 = vadd.f32 %v2690, %v2831
    %v2833 = vpop.f32.mrf.mxu0
    %2834 = vdwg.mxu0
    %v2835 = vadd.f32 %v2626, %v2761
    %v2836 = vxor.u32 %v2835, 2147483648
    %v2837 = vmul.f32 %v2836, 1.442695
    %v2838 = vpow.pop %v2837
    %v2839 = vadd.f32 %v2838, 1.0
    %v2840 = vrcp.pop %v2839
    %v2841 = vmul.f32 1.0, %v2840
    %v2842 = vadd.f32 %v2627, %v2763
    %v2843 = vxor.u32 %v2842, 2147483648
    %v2844 = vmul.f32 %v2843, 1.442695
    %v2845 = vpow.pop %v2844
    %v2846 = vadd.f32 %v2845, 1.0
    %v2847 = vrcp.pop %v2846
    %v2848 = vmul.f32 1.0, %v2847
    %v2849 = vmul.f32 %v2841, %v2832
    %v2850 = vadd.f32 %v2628, %v2849
    %v2851 = vtanh.pop %v2850
    %v2852 = vsub.f32 1.0, %v2848
    %v2853 = vmul.f32 %v2852, %v2851
    %v2854 = vmul.f32 %v2848, %v2509
    %v2855 = vadd.f32 %v2853, %v2854
    %v2856 = vld [vmem:[#allocation24] sm:$0xff]
    %v2857 = vld [vmem:[#allocation24 + $0x8] sm:$0xff]
    %v2858 = vld [vmem:[#allocation24 + $0x10] sm:$0xff]
    %v2859 = vld [vmem:[#allocation24 + $0x18] sm:$0xff]
    %v2860 = vld [vmem:[#allocation24 + $0x20] sm:$0xff]
    %v2861 = vld [vmem:[#allocation24 + $0x28] sm:$0xff]
    %v2862 = vld [vmem:[#allocation24 + $0x30] sm:$0xff]
    %v2863 = vld [vmem:[#allocation24 + $0x38] sm:$0xff]
    %v2864 = vld [vmem:[#allocation24 + $0x40] sm:$0xff]
    %v2865 = vld [vmem:[#allocation24 + $0x48] sm:$0xff]
    %v2866 = vld [vmem:[#allocation24 + $0x50] sm:$0xff]
    %v2867 = vld [vmem:[#allocation24 + $0x58] sm:$0xff]
    %v2868 = vld [vmem:[#allocation24 + $0x60] sm:$0xff]
    %v2869 = vld [vmem:[#allocation24 + $0x68] sm:$0xff]
    %v2870 = vld [vmem:[#allocation24 + $0x70] sm:$0xff]
    %v2871 = vld [vmem:[#allocation24 + $0x78] sm:$0xff]
    %v2872 = vld [vmem:[%s17] sm:$0x1]
    %v2874 = vlaneseq
    %v2875 = vshrl.u32 %v2874, 7
    %v2876 = vsub.s32 0, %v2875
    %v2877 = vrot.slane %v2872, %v2876
    %2879 = vmatprep.subr.mxu0 0.0
    %2880 = vmatpush1.msra.mxu0 %v2871
    %2881 = vmatprep.subr.mxu0 0.0
    %2882 = vmatpush1.msra.mxu0 %v2870
    %2883 = vmatprep.subr.mxu0 0.0
    %2884 = vmatpush1.msra.mxu0 %v2869
    %2885 = vmatprep.subr.mxu0 0.0
    %2886 = vmatpush1.msra.mxu0 %v2868
    %2887 = vmatprep.subr.mxu0 0.0
    %2888 = vmatpush1.msra.mxu0 %v2867
    %2889 = vmatprep.subr.mxu0 0.0
    %2890 = vmatpush1.msra.mxu0 %v2866
    %2891 = vmatprep.subr.mxu0 0.0
    %2892 = vmatpush1.msra.mxu0 %v2865
    %2893 = vmatprep.subr.mxu0 0.0
    %2894 = vmatpush1.msra.mxu0 %v2864
    %2895 = vmatprep.subr.mxu0 0.0
    %2896 = vmatpush1.msra.mxu0 %v2863
    %2897 = vmatprep.subr.mxu0 0.0
    %2898 = vmatpush1.msra.mxu0 %v2862
    %2899 = vmatprep.subr.mxu0 0.0
    %2900 = vmatpush1.msra.mxu0 %v2861
    %2901 = vmatprep.subr.mxu0 0.0
    %2902 = vmatpush1.msra.mxu0 %v2860
    %2903 = vmatprep.subr.mxu0 0.0
    %2904 = vmatpush1.msra.mxu0 %v2859
    %2905 = vmatprep.subr.mxu0 0.0
    %2906 = vmatpush1.msra.mxu0 %v2858
    %2907 = vmatprep.subr.mxu0 0.0
    %2908 = vmatpush1.msra.mxu0 %v2857
    %2909 = vmatprep.subr.mxu0 0.0
    %2910 = vmatpush1.msra.mxu0 %v2856
    %2911 = vmatprep.subr.mxu0 0.0
    %2912 = vmatpush2.msra.mxu0 0.0
    %2913 = vmatprep.subr.mxu0 0.0
    %2914 = vmatpush2.msra.mxu0 0.0
    %2915 = vmatprep.subr.mxu0 0.0
    %2916 = vmatpush2.msra.mxu0 0.0
    %2917 = vmatprep.subr.mxu0 0.0
    %2918 = vmatpush2.msra.mxu0 0.0
    %2919 = vmatprep.subr.mxu0 0.0
    %2920 = vmatpush2.msra.mxu0 0.0
    %2921 = vmatprep.subr.mxu0 0.0
    %2922 = vmatpush2.msra.mxu0 0.0
    %2923 = vmatprep.subr.mxu0 0.0
    %2924 = vmatpush2.msra.mxu0 0.0
    %2925 = vmatprep.subr.mxu0 0.0
    %2926 = vmatpush2.msra.mxu0 0.0
    %2927 = vmatprep.subr.mxu0 0.0
    %2928 = vmatpush2.msra.mxu0 0.0
    %2929 = vmatprep.subr.mxu0 0.0
    %2930 = vmatpush2.msra.mxu0 0.0
    %2931 = vmatprep.subr.mxu0 0.0
    %2932 = vmatpush2.msra.mxu0 0.0
    %2933 = vmatprep.subr.mxu0 0.0
    %2934 = vmatpush2.msra.mxu0 0.0
    %2935 = vmatprep.subr.mxu0 0.0
    %2936 = vmatpush2.msra.mxu0 0.0
    %2937 = vmatprep.subr.mxu0 0.0
    %2938 = vmatpush2.msra.mxu0 0.0
    %2939 = vmatprep.subr.mxu0 0.0
    %2940 = vmatpush2.msra.mxu0 0.0
    %2941 = vmatprep.subr.mxu0 0.0
    %2942 = vmatpush2.msra.mxu0 0.0
    %2943 = vmatprep.mubr.f32.mxu0 0.0
    %2944 = vmatmul.mubr.f32.gmra.mxu0 %v2855
    %v2945 = vpop.f32.mrf.mxu0
    %v2946 = vadd.f32 %v2877, %v2945
    %v2947 = vpop.f32.mrf.mxu0
    %2948 = vdwg.mxu0
    %s2949 = scalar_lea.vmem [#allocation25], 8
    %2950 = vst [vmem:[%s2949] sm:$0xff] %v2946
    // Predicated region
    $region106: #{tpu_custom_call.1} parent=1 // pred_check
      _
    $region107: #{tpu_custom_call.1} parent=1 // pred_check_branch
      %2952 = sbr.rel (0) target = $region109
    $region108: #{tpu_custom_call.1} parent=1 // pred_region
      %s2954 = ssub.s32 256, 256
      %2955 = vsyncadd [#allocation12], %s2954
      %s2956 = sshll.u32 [#allocation25], 4
      %s2957 = int_to_ptr.vmem [resolvable:$true] %s2956
      %2962 = dma.vmem_to_hbm [thread:$0]  %s2957, 256, %s18, [#allocation12], 128, 128, 8
    $region109: #{tpu_custom_call.1} parent=1 // pred_fallthru
      _
    // Predicated region
    $region110: #{tpu_custom_call.1} parent=1 // pred_check
      _
    $region111: #{tpu_custom_call.1} parent=1 // pred_check_branch
      %2964 = sbr.rel (0) target = $region113
    $region112: #{tpu_custom_call.1} parent=1 // pred_region
      %2965 = dma.done [#allocation12], 256
    $region113: #{tpu_custom_call.1} parent=1 // pred_fallthru
      _
    %2966 = vsyncpa [#allocation11], 1
    %2967 = vsyncpa [#allocation14], 1
    %2968 = vsyncpa [#allocation17], 1
    %2969 = vsyncpa [#allocation20], 1
    %2970 = vsyncpa [#allocation23], 1
    %2971 = vsyncpa [#allocation12], 1

</llo_original>
